<compile_context>
chip_gen: v7x
topology: tpu7x:2x2x1
jax: 0.10.0
libtpu: 0.0.40
codegen_flags: <defaults>
</compile_context>

<pallas_src>
import functools

import numpy as np
import jax
import jax.numpy as jnp
from jax import lax
from jax.experimental import pallas as pl
from jax.experimental.pallas import tpu as pltpu

_LANE = 128  # MXU-facing padding multiple (see TODO above re 256 on v6e/v7x).


def _round_up(a: int, b: int) -> int:
    return (a + b - 1) // b * b


def _exact_dot(a01, b):
    """a01 @ b where a01 is exactly bf16-representable (0/1 or small ints).

    b (f32) is split into bf16 hi + lo parts, so two single-pass bf16 MXU
    matmuls recover ~f32 accuracy without the 6-pass HIGHEST f32 emulation.
    """
    bf16, f32 = jnp.bfloat16, jnp.float32
    a = a01.astype(bf16)
    b_hi = b.astype(bf16)
    b_lo = (b - b_hi.astype(f32)).astype(bf16)
    return (jnp.dot(a, b_hi, preferred_element_type=f32)
            + jnp.dot(a, b_lo, preferred_element_type=f32))


def _wsabie_kernel(x_ref, xstart_ref, xstop_ref,
                   y_ref, ystart_ref, ystop_ref,
                   vhi_ref, vlo_ref, whi_ref, wlo_ref,
                   r_ref, d_ref, p_ref,
                   out_ref,
                   segx_ref, segy_ref, phix_ref, phiy_ref,
                   *, vtile: int):
    f32, bf16 = jnp.float32, jnp.bfloat16
    k = pl.program_id(0)
    nt = pl.num_programs(0)

    @pl.when(k == 0)
    def _init():
        # 0/1 segment-membership masks (exact in bf16), built once and reused
        # for every vocab tile; zero rows for padded bags.
        def seg01(start_ref, stop_ref, length):
            nbags = start_ref.shape[0]
            pos = lax.broadcasted_iota(jnp.int32, (nbags, length), 1)
            inb = jnp.logical_and(pos >= start_ref[...], pos < stop_ref[...])
            return inb.astype(bf16)

        segx_ref[...] = seg01(xstart_ref, xstop_ref, segx_ref.shape[1])
        segy_ref[...] = seg01(ystart_ref, ystop_ref, segy_ref.shape[1])
        phix_ref[...] = jnp.zeros_like(phix_ref)
        phiy_ref[...] = jnp.zeros_like(phiy_ref)

    base = k * vtile  # first vocab id covered by this table tile

    def accumulate(tok_ref, seg_ref, hi_ref, lo_ref, acc_ref):
        """acc += (seg01 @ onehot_k) @ table_tile_k   (all bf16 MXU passes)."""
        L = tok_ref.shape[0]
        lane = lax.broadcasted_iota(jnp.int32, (L, vtile), 1)
        # padding token id = -1 never matches any lane of any tile
        onehot = (lane == (tok_ref[...] - base)).astype(bf16)        # (L, vtile)
        counts = jnp.dot(seg_ref[...], onehot,
                         preferred_element_type=f32)                 # (nbags, vtile)
        counts = counts.astype(bf16)   # exact: per-bag token counts << 256
        acc_ref[...] += (jnp.dot(counts, hi_ref[...], preferred_element_type=f32)
                         + jnp.dot(counts, lo_ref[...], preferred_element_type=f32))

    accumulate(x_ref, segx_ref, vhi_ref, vlo_ref, phix_ref)
    accumulate(y_ref, segy_ref, whi_ref, wlo_ref, phiy_ref)

    @pl.when(k == nt - 1)
    def _finish():
        # Mean pooling: divide the accumulated sums by the bag lengths.
        # Empty / padded bags -> count clamped to 1 -> zero embedding
        # (matches torch EmbeddingBag(mode='mean')).
        def mean(acc_ref, start_ref, stop_ref):
            cnt = (stop_ref[...] - start_ref[...]).astype(f32)        # (nbags, 1)
            return acc_ref[...] * (1.0 / jnp.maximum(cnt, 1.0))

        phi_x = mean(phix_ref, xstart_ref, xstop_ref)                 # (b_pad,   e_pad)
        phi_y = mean(phiy_ref, ystart_ref, ystop_ref)                 # (bng_pad, e_pad)

        # Block-diagonal scores only: out[b, n] = <phi_x[b], phi_y[b*ng + n]>
        # (row m of phi_y pairs with row m // ng of phi_x — the ordering implied
        #  by the torch reshape(-1, ng_size, embed_size)).
        phi_x_rep = _exact_dot(r_ref[...], phi_x)                     # (bng_pad, e_pad)
        s = jnp.sum(phi_y * phi_x_rep, axis=1, keepdims=True)         # (bng_pad, 1)
        b_mat = p_ref[...] * s                                        # (bng_pad, ng_pad)
        out_ref[...] = _exact_dot(d_ref[...], b_mat)                  # one dense store


def make_wsabie_scorer(V, W, ng_size, *, vocab_tile=512):
    """Pads + bf16-splits the embedding tables ONCE and returns score(x, xo, y, yo)."""
    assert vocab_tile % _LANE == 0
    V = jnp.asarray(V, jnp.float32)
    W = jnp.asarray(W, jnp.float32)
    embed = V.shape[1]
    assert W.shape[1] == embed

    e_pad = _round_up(embed, _LANE)
    vocab = max(V.shape[0], W.shape[0])
    vtile = min(vocab_tile, _round_up(vocab, _LANE))
    vocab_pad = _round_up(vocab, vtile)
    nt = vocab_pad // vtile

    def split_pad(table):
        full = jnp.zeros((vocab_pad, e_pad), jnp.float32)
        full = full.at[:table.shape[0], :embed].set(table)
        hi = full.astype(jnp.bfloat16)
        lo = (full - hi.astype(jnp.float32)).astype(jnp.bfloat16)
        return hi, lo

    v_hi, v_lo = split_pad(V)   # done once (hoisted out of the per-call path)
    w_hi, w_lo = split_pad(W)

    @jax.jit
    def _score(x, xoffsets, y, yoffsets, v_hi, v_lo, w_hi, w_lo):
        batch = xoffsets.shape[0]
        n_ybags = yoffsets.shape[0]
        assert n_ybags == batch * ng_size
        lx, ly = x.shape[0], y.shape[0]

        lx_pad = _round_up(max(lx, 1), _LANE)
        ly_pad = _round_up(max(ly, 1), _LANE)
        b_pad = _round_up(batch, _LANE)
        bng_pad = _round_up(n_ybags, _LANE)
        ng_pad = _round_up(ng_size, _LANE)

        x32 = jnp.asarray(x, jnp.int32)
        y32 = jnp.asarray(y, jnp.int32)
        xoff = jnp.asarray(xoffsets, jnp.int32)
        yoff = jnp.asarray(yoffsets, jnp.int32)

        # Token ids as (L_pad, 1) columns; padding id = -1 never matches.
        x_col = jnp.full((lx_pad, 1), -1, jnp.int32).at[:lx, 0].set(x32)
        y_col = jnp.full((ly_pad, 1), -1, jnp.int32).at[:ly, 0].set(y32)

        # Per-bag [start, stop) columns; padded bags get empty ranges.
        xstop_v = jnp.concatenate([xoff[1:], jnp.array([lx], jnp.int32)])
        ystop_v = jnp.concatenate([yoff[1:], jnp.array([ly], jnp.int32)])
        xstart = jnp.zeros((b_pad, 1), jnp.int32).at[:batch, 0].set(xoff)
        xstop = jnp.zeros((b_pad, 1), jnp.int32).at[:batch, 0].set(xstop_v)
        ystart = jnp.zeros((bng_pad, 1), jnp.int32).at[:n_ybags, 0].set(yoff)
        ystop = jnp.zeros((bng_pad, 1), jnp.int32).at[:n_ybags, 0].set(ystop_v)

        # Static 0/1 selector matrices for the block-diagonal score extraction.
        m = np.arange(bng_pad)
        b = np.arange(b_pad)
        n = np.arange(ng_pad)
        vm = m < n_ybags
        rmat = ((m[:, None] // ng_size == b[None, :]) & vm[:, None]
                & (b[None, :] < batch)).astype(np.float32)            # (bng_pad, b_pad)
        dmat = np.ascontiguousarray(rmat.T)                           # (b_pad, bng_pad)
        pmat = ((m[:, None] % ng_size == n[None, :])
                & vm[:, None]).astype(np.float32)                     # (bng_pad, ng_pad)

        grid_spec = pltpu.PrefetchScalarGridSpec(
            num_scalar_prefetch=0,
            grid=(nt,),
            in_specs=[
                pl.BlockSpec((lx_pad, 1), lambda k: (0, 0)),
                pl.BlockSpec((b_pad, 1), lambda k: (0, 0)),
                pl.BlockSpec((b_pad, 1), lambda k: (0, 0)),
                pl.BlockSpec((ly_pad, 1), lambda k: (0, 0)),
                pl.BlockSpec((bng_pad, 1), lambda k: (0, 0)),
                pl.BlockSpec((bng_pad, 1), lambda k: (0, 0)),
                pl.BlockSpec((vtile, e_pad), lambda k: (k, 0)),   # V hi tile
                pl.BlockSpec((vtile, e_pad), lambda k: (k, 0)),   # V lo tile
                pl.BlockSpec((vtile, e_pad), lambda k: (k, 0)),   # W hi tile
                pl.BlockSpec((vtile, e_pad), lambda k: (k, 0)),   # W lo tile
                pl.BlockSpec((bng_pad, b_pad), lambda k: (0, 0)),
                pl.BlockSpec((b_pad, bng_pad), lambda k: (0, 0)),
                pl.BlockSpec((bng_pad, ng_pad), lambda k: (0, 0)),
            ],
            out_specs=pl.BlockSpec((b_pad, ng_pad), lambda k: (0, 0)),
            scratch_shapes=[
                pltpu.VMEM((b_pad, lx_pad), jnp.bfloat16),   # seg01 x
                pltpu.VMEM((bng_pad, ly_pad), jnp.bfloat16),  # seg01 y
                pltpu.VMEM((b_pad, e_pad), jnp.float32),      # phi_x accumulator
                pltpu.VMEM((bng_pad, e_pad), jnp.float32),    # phi_y accumulator
            ],
        )

        out_padded = pl.pallas_call(
            functools.partial(_wsabie_kernel, vtile=vtile),
            out_shape=jax.ShapeDtypeStruct((b_pad, ng_pad), jnp.float32),
            grid_spec=grid_spec,
            compiler_params=pltpu.CompilerParams(
                dimension_semantics=("arbitrary",)),
        )(x_col, xstart, xstop, y_col, ystart, ystop,
          v_hi, v_lo, w_hi, w_lo,
          jnp.asarray(rmat), jnp.asarray(dmat), jnp.asarray(pmat))

        return out_padded[:batch, :ng_size]

    def score(x, xoffsets, y, yoffsets):
        return _score(x, xoffsets, y, yoffsets, v_hi, v_lo, w_hi, w_lo)

    return score


def _reference(x, xoffsets, y, yoffsets, V, W, ng_size):
    """Pure numpy reference matching torch EmbeddingBag(mode='mean') + matmul."""
    x, y = np.asarray(x), np.asarray(y)
    V, W = np.asarray(V), np.asarray(W)

    def bag_mean(table, idx, offsets):
        ends = np.concatenate([offsets[1:], [idx.shape[0]]])
        return np.stack([table[idx[s:e]].mean(axis=0)
                         for s, e in zip(offsets, ends)])

    phi_x = bag_mean(V, x, np.asarray(xoffsets))                    # (B, E)
    phi_y = bag_mean(W, y, np.asarray(yoffsets))                    # (B*ng, E)
    B, E = phi_x.shape
    phi_y = phi_y.reshape(B, ng_size, E)
    return np.einsum('bne,be->bn', phi_y, phi_x)


if __name__ == "__main__":
    # Small synthetic config (the "parameters" dict of the torch module).
    batch_size = 2
    ng_size = 4
    embed_size = 32
    input_feat_num = 50   # V rows
    label_feat_num = 40   # W rows

    key = jax.random.PRNGKey(0)
    kV, kW, kx, ky = jax.random.split(key, 4)

    # EmbeddingBag weight init: uniform(-0.5/E, 0.5/E), W_zero/V_zero = False.
    bound = 0.5 / embed_size
    V = jax.random.uniform(kV, (input_feat_num, embed_size),
                           jnp.float32, -bound, bound)
    W = jax.random.uniform(kW, (label_feat_num, embed_size),
                           jnp.float32, -bound, bound)

    # Variable-length bags (concatenated sequences + start offsets).
    x_lens = np.array([3, 5], dtype=np.int32)                        # B bags
    y_lens = np.array([2, 1, 3, 4, 2, 2, 1, 3], dtype=np.int32)      # B*ng bags
    xoffsets = jnp.asarray(np.concatenate([[0], np.cumsum(x_lens)[:-1]]),
                           dtype=jnp.int32)
    yoffsets = jnp.asarray(np.concatenate([[0], np.cumsum(y_lens)[:-1]]),
                           dtype=jnp.int32)
    x = jax.random.randint(kx, (int(x_lens.sum()),), 0, input_feat_num,
                           dtype=jnp.int32)
    y = jax.random.randint(ky, (int(y_lens.sum()),), 0, label_feat_num,
                           dtype=jnp.int32)

    scorer = make_wsabie_scorer(V, W, ng_size)
    scores = jax.block_until_ready(scorer(x, xoffsets, y, yoffsets))

    ref = _reference(x, xoffsets, y, yoffsets, V, W, ng_size)
    np.testing.assert_allclose(np.asarray(scores), ref, rtol=1e-4, atol=1e-6)

    print("KERNEL_OK")
</pallas_src>

<mosaic_0001>
module attributes {stable_mosaic.version = 11 : i64} {
  func.func @_wsabie_kernel(%arg0: i32, %arg1: memref<128x1xi32, #tpu.memory_space<vmem>>, %arg2: memref<128x1xi32, #tpu.memory_space<vmem>>, %arg3: memref<128x1xi32, #tpu.memory_space<vmem>>, %arg4: memref<128x1xi32, #tpu.memory_space<vmem>>, %arg5: memref<128x1xi32, #tpu.memory_space<vmem>>, %arg6: memref<128x1xi32, #tpu.memory_space<vmem>>, %arg7: memref<128x128xbf16, #tpu.memory_space<vmem>>, %arg8: memref<128x128xbf16, #tpu.memory_space<vmem>>, %arg9: memref<128x128xbf16, #tpu.memory_space<vmem>>, %arg10: memref<128x128xbf16, #tpu.memory_space<vmem>>, %arg11: memref<128x128xf32, #tpu.memory_space<vmem>>, %arg12: memref<128x128xf32, #tpu.memory_space<vmem>>, %arg13: memref<128x128xf32, #tpu.memory_space<vmem>>, %arg14: memref<128x128xf32, #tpu.memory_space<vmem>>, %arg15: memref<128x128xbf16, #tpu.memory_space<vmem>>, %arg16: memref<128x128xbf16, #tpu.memory_space<vmem>>, %arg17: memref<128x128xf32, #tpu.memory_space<vmem>>, %arg18: memref<128x128xf32, #tpu.memory_space<vmem>>) attributes {dimension_semantics = [#tpu.dimension_semantics<arbitrary>], iteration_bounds = array<i64: 1>, scalar_prefetch = 0 : i64, scratch_operands = 4 : i64, tpu.core_type = #tpu.core_type<tc>, window_params = [{pipeline_mode = #tpu.pipeline_mode<synchronous>, transform_indices = @transform_0, window_bounds = array<i64: 128, 1>}, {pipeline_mode = #tpu.pipeline_mode<synchronous>, transform_indices = @transform_1, window_bounds = array<i64: 128, 1>}, {pipeline_mode = #tpu.pipeline_mode<synchronous>, transform_indices = @transform_2, window_bounds = array<i64: 128, 1>}, {pipeline_mode = #tpu.pipeline_mode<synchronous>, transform_indices = @transform_3, window_bounds = array<i64: 128, 1>}, {pipeline_mode = #tpu.pipeline_mode<synchronous>, transform_indices = @transform_4, window_bounds = array<i64: 128, 1>}, {pipeline_mode = #tpu.pipeline_mode<synchronous>, transform_indices = @transform_5, window_bounds = array<i64: 128, 1>}, {transform_indices = @transform_6, window_bounds = array<i64: 128, 128>}, {transform_indices = @transform_7, window_bounds = array<i64: 128, 128>}, {transform_indices = @transform_8, window_bounds = array<i64: 128, 128>}, {transform_indices = @transform_9, window_bounds = array<i64: 128, 128>}, {pipeline_mode = #tpu.pipeline_mode<synchronous>, transform_indices = @transform_10, window_bounds = array<i64: 128, 128>}, {pipeline_mode = #tpu.pipeline_mode<synchronous>, transform_indices = @transform_11, window_bounds = array<i64: 128, 128>}, {pipeline_mode = #tpu.pipeline_mode<synchronous>, transform_indices = @transform_12, window_bounds = array<i64: 128, 128>}, {pipeline_mode = #tpu.pipeline_mode<synchronous>, transform_indices = @transform_13, window_bounds = array<i64: 128, 128>}]} {
    %c0_i32 = arith.constant 0 : i32
    %0 = arith.cmpi eq, %arg0, %c0_i32 : i32
    %1 = arith.extui %0 : i1 to i32
    %c0_i32_0 = arith.constant 0 : i32
    %2 = arith.cmpi ne, %1, %c0_i32_0 : i32
    scf.if %2 {
      %47 = tpu.iota {dimensions = array<i32: 1>} : vector<128x128xi32>
      %c0_31 = arith.constant 0 : index
      %c0_32 = arith.constant 0 : index
      %48 = vector.load %arg2[%c0_31, %c0_32] : memref<128x1xi32, #tpu.memory_space<vmem>>, vector<128x1xi32>
      %49 = vector.broadcast %48 : vector<128x1xi32> to vector<128x128xi32>
      %50 = arith.cmpi sge, %47, %49 : vector<128x128xi32>
      %c0_33 = arith.constant 0 : index
      %c0_34 = arith.constant 0 : index
      %51 = vector.load %arg3[%c0_33, %c0_34] : memref<128x1xi32, #tpu.memory_space<vmem>>, vector<128x1xi32>
      %52 = vector.broadcast %51 : vector<128x1xi32> to vector<128x128xi32>
      %53 = arith.cmpi slt, %47, %52 : vector<128x128xi32>
      %54 = arith.andi %50, %53 : vector<128x128xi1>
      %55 = arith.extui %54 : vector<128x128xi1> to vector<128x128xi32>
      %56 = arith.sitofp %55 : vector<128x128xi32> to vector<128x128xf32>
      %57 = arith.truncf %56 : vector<128x128xf32> to vector<128x128xbf16>
      %c0_35 = arith.constant 0 : index
      %c0_36 = arith.constant 0 : index
      %58 = vector.load %arg15[%c0_35, %c0_36] : memref<128x128xbf16, #tpu.memory_space<vmem>>, vector<128x128xbf16>
      tpu.vector_store %arg15[%c0_35, %c0_36], %57 {strides = array<i32>} : memref<128x128xbf16, #tpu.memory_space<vmem>>, vector<128x128xbf16>,
      %59 = tpu.iota {dimensions = array<i32: 1>} : vector<128x128xi32>
      %c0_37 = arith.constant 0 : index
      %c0_38 = arith.constant 0 : index
      %60 = vector.load %arg5[%c0_37, %c0_38] : memref<128x1xi32, #tpu.memory_space<vmem>>, vector<128x1xi32>
      %61 = vector.broadcast %60 : vector<128x1xi32> to vector<128x128xi32>
      %62 = arith.cmpi sge, %59, %61 : vector<128x128xi32>
      %c0_39 = arith.constant 0 : index
      %c0_40 = arith.constant 0 : index
      %63 = vector.load %arg6[%c0_39, %c0_40] : memref<128x1xi32, #tpu.memory_space<vmem>>, vector<128x1xi32>
      %64 = vector.broadcast %63 : vector<128x1xi32> to vector<128x128xi32>
      %65 = arith.cmpi slt, %59, %64 : vector<128x128xi32>
      %66 = arith.andi %62, %65 : vector<128x128xi1>
      %67 = arith.extui %66 : vector<128x128xi1> to vector<128x128xi32>
      %68 = arith.sitofp %67 : vector<128x128xi32> to vector<128x128xf32>
      %69 = arith.truncf %68 : vector<128x128xf32> to vector<128x128xbf16>
      %c0_41 = arith.constant 0 : index
      %c0_42 = arith.constant 0 : index
      %70 = vector.load %arg16[%c0_41, %c0_42] : memref<128x128xbf16, #tpu.memory_space<vmem>>, vector<128x128xbf16>
      tpu.vector_store %arg16[%c0_41, %c0_42], %69 {strides = array<i32>} : memref<128x128xbf16, #tpu.memory_space<vmem>>, vector<128x128xbf16>,
      %cst_43 = arith.constant 0.000000e+00 : f32
      %71 = vector.broadcast %cst_43 : f32 to vector<128x128xf32>
      %c0_44 = arith.constant 0 : index
      %c0_45 = arith.constant 0 : index
      %72 = vector.load %arg17[%c0_44, %c0_45] : memref<128x128xf32, #tpu.memory_space<vmem>>, vector<128x128xf32>
      tpu.vector_store %arg17[%c0_44, %c0_45], %71 {strides = array<i32>} : memref<128x128xf32, #tpu.memory_space<vmem>>, vector<128x128xf32>,
      %cst_46 = arith.constant 0.000000e+00 : f32
      %73 = vector.broadcast %cst_46 : f32 to vector<128x128xf32>
      %c0_47 = arith.constant 0 : index
      %c0_48 = arith.constant 0 : index
      %74 = vector.load %arg18[%c0_47, %c0_48] : memref<128x128xf32, #tpu.memory_space<vmem>>, vector<128x128xf32>
      tpu.vector_store %arg18[%c0_47, %c0_48], %73 {strides = array<i32>} : memref<128x128xf32, #tpu.memory_space<vmem>>, vector<128x128xf32>,
    } else {
    }
    %c128_i32 = arith.constant 128 : i32
    %3 = arith.muli %arg0, %c128_i32 : i32
    %4 = tpu.iota {dimensions = array<i32: 1>} : vector<128x128xi32>
    %c0 = arith.constant 0 : index
    %c0_1 = arith.constant 0 : index
    %5 = vector.load %arg1[%c0, %c0_1] : memref<128x1xi32, #tpu.memory_space<vmem>>, vector<128x1xi32>
    %6 = vector.broadcast %3 : i32 to vector<128x1xi32>
    %7 = arith.subi %5, %6 : vector<128x1xi32>
    %8 = vector.broadcast %7 : vector<128x1xi32> to vector<128x128xi32>
    %9 = arith.cmpi eq, %4, %8 : vector<128x128xi32>
    %10 = arith.extui %9 : vector<128x128xi1> to vector<128x128xi32>
    %11 = arith.sitofp %10 : vector<128x128xi32> to vector<128x128xf32>
    %12 = arith.truncf %11 : vector<128x128xf32> to vector<128x128xbf16>
    %c0_2 = arith.constant 0 : index
    %c0_3 = arith.constant 0 : index
    %13 = vector.load %arg15[%c0_2, %c0_3] : memref<128x128xbf16, #tpu.memory_space<vmem>>, vector<128x128xbf16>
    %cst = arith.constant dense<0.000000e+00> : vector<128x128xf32>
    %14 = tpu.matmul %13, %12, %cst {dimension_numbers = #tpu.dot_dimension_numbers<[1], [0], [0], [1], [0, 0, 1, 1], [], []>} : vector<128x128xbf16>, vector<128x128xbf16>, vector<128x128xf32> -> vector<128x128xf32>
    %15 = arith.truncf %14 : vector<128x128xf32> to vector<128x128xbf16>
    %c0_4 = arith.constant 0 : index
    %c0_5 = arith.constant 0 : index
    %16 = vector.load %arg17[%c0_4, %c0_5] : memref<128x128xf32, #tpu.memory_space<vmem>>, vector<128x128xf32>
    %c0_6 = arith.constant 0 : index
    %c0_7 = arith.constant 0 : index
    %17 = vector.load %arg7[%c0_6, %c0_7] : memref<128x128xbf16, #tpu.memory_space<vmem>>, vector<128x128xbf16>
    %cst_8 = arith.constant dense<0.000000e+00> : vector<128x128xf32>
    %18 = tpu.matmul %15, %17, %cst_8 {dimension_numbers = #tpu.dot_dimension_numbers<[1], [0], [0], [1], [0, 0, 1, 1], [], []>} : vector<128x128xbf16>, vector<128x128xbf16>, vector<128x128xf32> -> vector<128x128xf32>
    %c0_9 = arith.constant 0 : index
    %c0_10 = arith.constant 0 : index
    %19 = vector.load %arg8[%c0_9, %c0_10] : memref<128x128xbf16, #tpu.memory_space<vmem>>, vector<128x128xbf16>
    %cst_11 = arith.constant dense<0.000000e+00> : vector<128x128xf32>
    %20 = tpu.matmul %15, %19, %cst_11 {dimension_numbers = #tpu.dot_dimension_numbers<[1], [0], [0], [1], [0, 0, 1, 1], [], []>} : vector<128x128xbf16>, vector<128x128xbf16>, vector<128x128xf32> -> vector<128x128xf32>
    %21 = arith.addf %18, %20 : vector<128x128xf32>
    %22 = arith.addf %16, %21 : vector<128x128xf32>
    %c0_12 = arith.constant 0 : index
    %c0_13 = arith.constant 0 : index
    %23 = vector.load %arg17[%c0_12, %c0_13] : memref<128x128xf32, #tpu.memory_space<vmem>>, vector<128x128xf32>
    tpu.vector_store %arg17[%c0_12, %c0_13], %22 {strides = array<i32>} : memref<128x128xf32, #tpu.memory_space<vmem>>, vector<128x128xf32>,
    %24 = tpu.iota {dimensions = array<i32: 1>} : vector<128x128xi32>
    %c0_14 = arith.constant 0 : index
    %c0_15 = arith.constant 0 : index
    %25 = vector.load %arg4[%c0_14, %c0_15] : memref<128x1xi32, #tpu.memory_space<vmem>>, vector<128x1xi32>
    %26 = vector.broadcast %3 : i32 to vector<128x1xi32>
    %27 = arith.subi %25, %26 : vector<128x1xi32>
    %28 = vector.broadcast %27 : vector<128x1xi32> to vector<128x128xi32>
    %29 = arith.cmpi eq, %24, %28 : vector<128x128xi32>
    %30 = arith.extui %29 : vector<128x128xi1> to vector<128x128xi32>
    %31 = arith.sitofp %30 : vector<128x128xi32> to vector<128x128xf32>
    %32 = arith.truncf %31 : vector<128x128xf32> to vector<128x128xbf16>
    %c0_16 = arith.constant 0 : index
    %c0_17 = arith.constant 0 : index
    %33 = vector.load %arg16[%c0_16, %c0_17] : memref<128x128xbf16, #tpu.memory_space<vmem>>, vector<128x128xbf16>
    %cst_18 = arith.constant dense<0.000000e+00> : vector<128x128xf32>
    %34 = tpu.matmul %33, %32, %cst_18 {dimension_numbers = #tpu.dot_dimension_numbers<[1], [0], [0], [1], [0, 0, 1, 1], [], []>} : vector<128x128xbf16>, vector<128x128xbf16>, vector<128x128xf32> -> vector<128x128xf32>
    %35 = arith.truncf %34 : vector<128x128xf32> to vector<128x128xbf16>
    %c0_19 = arith.constant 0 : index
    %c0_20 = arith.constant 0 : index
    %36 = vector.load %arg18[%c0_19, %c0_20] : memref<128x128xf32, #tpu.memory_space<vmem>>, vector<128x128xf32>
    %c0_21 = arith.constant 0 : index
    %c0_22 = arith.constant 0 : index
    %37 = vector.load %arg9[%c0_21, %c0_22] : memref<128x128xbf16, #tpu.memory_space<vmem>>, vector<128x128xbf16>
    %cst_23 = arith.constant dense<0.000000e+00> : vector<128x128xf32>
    %38 = tpu.matmul %35, %37, %cst_23 {dimension_numbers = #tpu.dot_dimension_numbers<[1], [0], [0], [1], [0, 0, 1, 1], [], []>} : vector<128x128xbf16>, vector<128x128xbf16>, vector<128x128xf32> -> vector<128x128xf32>
    %c0_24 = arith.constant 0 : index
    %c0_25 = arith.constant 0 : index
    %39 = vector.load %arg10[%c0_24, %c0_25] : memref<128x128xbf16, #tpu.memory_space<vmem>>, vector<128x128xbf16>
    %cst_26 = arith.constant dense<0.000000e+00> : vector<128x128xf32>
    %40 = tpu.matmul %35, %39, %cst_26 {dimension_numbers = #tpu.dot_dimension_numbers<[1], [0], [0], [1], [0, 0, 1, 1], [], []>} : vector<128x128xbf16>, vector<128x128xbf16>, vector<128x128xf32> -> vector<128x128xf32>
    %41 = arith.addf %38, %40 : vector<128x128xf32>
    %42 = arith.addf %36, %41 : vector<128x128xf32>
    %c0_27 = arith.constant 0 : index
    %c0_28 = arith.constant 0 : index
    %43 = vector.load %arg18[%c0_27, %c0_28] : memref<128x128xf32, #tpu.memory_space<vmem>>, vector<128x128xf32>
    tpu.vector_store %arg18[%c0_27, %c0_28], %42 {strides = array<i32>} : memref<128x128xf32, #tpu.memory_space<vmem>>, vector<128x128xf32>,
    %c0_i32_29 = arith.constant 0 : i32
    %44 = arith.cmpi eq, %arg0, %c0_i32_29 : i32
    %45 = arith.extui %44 : i1 to i32
    %c0_i32_30 = arith.constant 0 : i32
    %46 = arith.cmpi ne, %45, %c0_i32_30 : i32
    scf.if %46 {
      %c0_31 = arith.constant 0 : index
      %c0_32 = arith.constant 0 : index
      %47 = vector.load %arg3[%c0_31, %c0_32] : memref<128x1xi32, #tpu.memory_space<vmem>>, vector<128x1xi32>
      %c0_33 = arith.constant 0 : index
      %c0_34 = arith.constant 0 : index
      %48 = vector.load %arg2[%c0_33, %c0_34] : memref<128x1xi32, #tpu.memory_space<vmem>>, vector<128x1xi32>
      %49 = arith.subi %47, %48 : vector<128x1xi32>
      %50 = arith.sitofp %49 : vector<128x1xi32> to vector<128x1xf32>
      %c0_35 = arith.constant 0 : index
      %c0_36 = arith.constant 0 : index
      %51 = vector.load %arg17[%c0_35, %c0_36] : memref<128x128xf32, #tpu.memory_space<vmem>>, vector<128x128xf32>
      %cst_37 = arith.constant 1.000000e+00 : f32
      %52 = vector.broadcast %cst_37 : f32 to vector<128x1xf32>
      %53 = arith.maximumf %50, %52 : vector<128x1xf32>
      %cst_38 = arith.constant 1.000000e+00 : f32
      %54 = vector.broadcast %cst_38 : f32 to vector<128x1xf32>
      %55 = arith.divf %54, %53 : vector<128x1xf32>
      %56 = vector.broadcast %55 : vector<128x1xf32> to vector<128x128xf32>
      %57 = arith.mulf %51, %56 : vector<128x128xf32>
      %c0_39 = arith.constant 0 : index
      %c0_40 = arith.constant 0 : index
      %58 = vector.load %arg6[%c0_39, %c0_40] : memref<128x1xi32, #tpu.memory_space<vmem>>, vector<128x1xi32>
      %c0_41 = arith.constant 0 : index
      %c0_42 = arith.constant 0 : index
      %59 = vector.load %arg5[%c0_41, %c0_42] : memref<128x1xi32, #tpu.memory_space<vmem>>, vector<128x1xi32>
      %60 = arith.subi %58, %59 : vector<128x1xi32>
      %61 = arith.sitofp %60 : vector<128x1xi32> to vector<128x1xf32>
      %c0_43 = arith.constant 0 : index
      %c0_44 = arith.constant 0 : index
      %62 = vector.load %arg18[%c0_43, %c0_44] : memref<128x128xf32, #tpu.memory_space<vmem>>, vector<128x128xf32>
      %cst_45 = arith.constant 1.000000e+00 : f32
      %63 = vector.broadcast %cst_45 : f32 to vector<128x1xf32>
      %64 = arith.maximumf %61, %63 : vector<128x1xf32>
      %cst_46 = arith.constant 1.000000e+00 : f32
      %65 = vector.broadcast %cst_46 : f32 to vector<128x1xf32>
      %66 = arith.divf %65, %64 : vector<128x1xf32>
      %67 = vector.broadcast %66 : vector<128x1xf32> to vector<128x128xf32>
      %68 = arith.mulf %62, %67 : vector<128x128xf32>
      %c0_47 = arith.constant 0 : index
      %c0_48 = arith.constant 0 : index
      %69 = vector.load %arg11[%c0_47, %c0_48] : memref<128x128xf32, #tpu.memory_space<vmem>>, vector<128x128xf32>
      %70 = arith.truncf %69 : vector<128x128xf32> to vector<128x128xbf16>
      %71 = arith.truncf %57 : vector<128x128xf32> to vector<128x128xbf16>
      %72 = arith.extf %71 : vector<128x128xbf16> to vector<128x128xf32>
      %73 = arith.subf %57, %72 : vector<128x128xf32>
      %74 = arith.truncf %73 : vector<128x128xf32> to vector<128x128xbf16>
      %cst_49 = arith.constant dense<0.000000e+00> : vector<128x128xf32>
      %75 = tpu.matmul %70, %71, %cst_49 {dimension_numbers = #tpu.dot_dimension_numbers<[1], [0], [0], [1], [0, 0, 1, 1], [], []>} : vector<128x128xbf16>, vector<128x128xbf16>, vector<128x128xf32> -> vector<128x128xf32>
      %cst_50 = arith.constant dense<0.000000e+00> : vector<128x128xf32>
      %76 = tpu.matmul %70, %74, %cst_50 {dimension_numbers = #tpu.dot_dimension_numbers<[1], [0], [0], [1], [0, 0, 1, 1], [], []>} : vector<128x128xbf16>, vector<128x128xbf16>, vector<128x128xf32> -> vector<128x128xf32>
      %77 = arith.addf %75, %76 : vector<128x128xf32>
      %78 = arith.mulf %68, %77 : vector<128x128xf32>
      %cst_51 = arith.constant dense<0.000000e+00> : vector<128xf32>
      %79 = vector.multi_reduction <add>, %78, %cst_51 [1] : vector<128x128xf32> to vector<128xf32>
      %80 = vector.shape_cast %79 : vector<128xf32> to vector<128x1xf32>
      %c0_52 = arith.constant 0 : index
      %c0_53 = arith.constant 0 : index
      %81 = vector.load %arg13[%c0_52, %c0_53] : memref<128x128xf32, #tpu.memory_space<vmem>>, vector<128x128xf32>
      %82 = vector.broadcast %80 : vector<128x1xf32> to vector<128x128xf32>
      %83 = arith.mulf %81, %82 : vector<128x128xf32>
      %c0_54 = arith.constant 0 : index
      %c0_55 = arith.constant 0 : index
      %84 = vector.load %arg12[%c0_54, %c0_55] : memref<128x128xf32, #tpu.memory_space<vmem>>, vector<128x128xf32>
      %85 = arith.truncf %84 : vector<128x128xf32> to vector<128x128xbf16>
      %86 = arith.truncf %83 : vector<128x128xf32> to vector<128x128xbf16>
      %87 = arith.extf %86 : vector<128x128xbf16> to vector<128x128xf32>
      %88 = arith.subf %83, %87 : vector<128x128xf32>
      %89 = arith.truncf %88 : vector<128x128xf32> to vector<128x128xbf16>
      %cst_56 = arith.constant dense<0.000000e+00> : vector<128x128xf32>
      %90 = tpu.matmul %85, %86, %cst_56 {dimension_numbers = #tpu.dot_dimension_numbers<[1], [0], [0], [1], [0, 0, 1, 1], [], []>} : vector<128x128xbf16>, vector<128x128xbf16>, vector<128x128xf32> -> vector<128x128xf32>
      %cst_57 = arith.constant dense<0.000000e+00> : vector<128x128xf32>
      %91 = tpu.matmul %85, %89, %cst_57 {dimension_numbers = #tpu.dot_dimension_numbers<[1], [0], [0], [1], [0, 0, 1, 1], [], []>} : vector<128x128xbf16>, vector<128x128xbf16>, vector<128x128xf32> -> vector<128x128xf32>
      %92 = arith.addf %90, %91 : vector<128x128xf32>
      %c0_58 = arith.constant 0 : index
      %c0_59 = arith.constant 0 : index
      %93 = vector.load %arg14[%c0_58, %c0_59] : memref<128x128xf32, #tpu.memory_space<vmem>>, vector<128x128xf32>
      tpu.vector_store %arg14[%c0_58, %c0_59], %92 {strides = array<i32>} : memref<128x128xf32, #tpu.memory_space<vmem>>, vector<128x128xf32>,
    } else {
    }
    return
  }
  func.func @transform_0(%arg0: i32) -> (i32, i32) {
    %c0_i32 = arith.constant 0 : i32
    %c0_i32_0 = arith.constant 0 : i32
    %c0_i32_1 = arith.constant 0 : i32
    return %c0_i32, %c0_i32_0 : i32, i32
  }
  func.func @transform_1(%arg0: i32) -> (i32, i32) {
    %c0_i32 = arith.constant 0 : i32
    %c0_i32_0 = arith.constant 0 : i32
    %c0_i32_1 = arith.constant 0 : i32
    return %c0_i32, %c0_i32_0 : i32, i32
  }
  func.func @transform_2(%arg0: i32) -> (i32, i32) {
    %c0_i32 = arith.constant 0 : i32
    %c0_i32_0 = arith.constant 0 : i32
    %c0_i32_1 = arith.constant 0 : i32
    return %c0_i32, %c0_i32_0 : i32, i32
  }
  func.func @transform_3(%arg0: i32) -> (i32, i32) {
    %c0_i32 = arith.constant 0 : i32
    %c0_i32_0 = arith.constant 0 : i32
    %c0_i32_1 = arith.constant 0 : i32
    return %c0_i32, %c0_i32_0 : i32, i32
  }
  func.func @transform_4(%arg0: i32) -> (i32, i32) {
    %c0_i32 = arith.constant 0 : i32
    %c0_i32_0 = arith.constant 0 : i32
    %c0_i32_1 = arith.constant 0 : i32
    return %c0_i32, %c0_i32_0 : i32, i32
  }
  func.func @transform_5(%arg0: i32) -> (i32, i32) {
    %c0_i32 = arith.constant 0 : i32
    %c0_i32_0 = arith.constant 0 : i32
    %c0_i32_1 = arith.constant 0 : i32
    return %c0_i32, %c0_i32_0 : i32, i32
  }
  func.func @transform_6(%arg0: i32) -> (i32, i32) {
    %c0_i32 = arith.constant 0 : i32
    %c0_i32_0 = arith.constant 0 : i32
    return %arg0, %c0_i32 : i32, i32
  }
  func.func @transform_7(%arg0: i32) -> (i32, i32) {
    %c0_i32 = arith.constant 0 : i32
    %c0_i32_0 = arith.constant 0 : i32
    return %arg0, %c0_i32 : i32, i32
  }
  func.func @transform_8(%arg0: i32) -> (i32, i32) {
    %c0_i32 = arith.constant 0 : i32
    %c0_i32_0 = arith.constant 0 : i32
    return %arg0, %c0_i32 : i32, i32
  }
  func.func @transform_9(%arg0: i32) -> (i32, i32) {
    %c0_i32 = arith.constant 0 : i32
    %c0_i32_0 = arith.constant 0 : i32
    return %arg0, %c0_i32 : i32, i32
  }
  func.func @transform_10(%arg0: i32) -> (i32, i32) {
    %c0_i32 = arith.constant 0 : i32
    %c0_i32_0 = arith.constant 0 : i32
    %c0_i32_1 = arith.constant 0 : i32
    return %c0_i32, %c0_i32_0 : i32, i32
  }
  func.func @transform_11(%arg0: i32) -> (i32, i32) {
    %c0_i32 = arith.constant 0 : i32
    %c0_i32_0 = arith.constant 0 : i32
    %c0_i32_1 = arith.constant 0 : i32
    return %c0_i32, %c0_i32_0 : i32, i32
  }
  func.func @transform_12(%arg0: i32) -> (i32, i32) {
    %c0_i32 = arith.constant 0 : i32
    %c0_i32_0 = arith.constant 0 : i32
    %c0_i32_1 = arith.constant 0 : i32
    return %c0_i32, %c0_i32_0 : i32, i32
  }
  func.func @transform_13(%arg0: i32) -> (i32, i32) {
    %c0_i32 = arith.constant 0 : i32
    %c0_i32_0 = arith.constant 0 : i32
    %c0_i32_1 = arith.constant 0 : i32
    return %c0_i32, %c0_i32_0 : i32, i32
  }
}

</mosaic_0001>

<llo_original>
// kernel: _score.1
$region0: #{_score.1}
  #allocation0 [shape = 'u32[]', space=smem, size = 0x4, offset = 0x4, fixed_abs, tag = 'smem constant byte address 0x4 - core index']
  #allocation1 [shape = 'u32[144,128]{1,0:T(1,128)}', space=vmem, size = 0x12000, scoped, tag = 'internal scratch']
  #allocation2 [shape = 'bf16[128,128]{1,0:T(16,128)(2,1)}', space=vmem, size = 0x8000, scoped, tag = 'scratch operand']
  #allocation3 [shape = 'bf16[128,128]{1,0:T(16,128)(2,1)}', space=vmem, size = 0x8000, scoped, tag = 'scratch operand']
  #allocation4 [shape = 'f32[128,128]{1,0:T(8,128)}', space=vmem, size = 0x10000, scoped, tag = 'scratch operand']
  #allocation5 [shape = 'f32[128,128]{1,0:T(8,128)}', space=vmem, size = 0x10000, scoped, tag = 'scratch operand']
  %s0 = inlined_call_operand.vmem [shape: s32[128,1], index: 0, kind: input, shape index: {}]
  %s1 = inlined_call_operand.vmem [shape: s32[128,1], index: 1, kind: input, shape index: {}]
  %s2 = inlined_call_operand.vmem [shape: s32[128,1], index: 2, kind: input, shape index: {}]
  %s3 = inlined_call_operand.vmem [shape: s32[128,1], index: 3, kind: input, shape index: {}]
  %s4 = inlined_call_operand.vmem [shape: s32[128,1], index: 4, kind: input, shape index: {}]
  %s5 = inlined_call_operand.vmem [shape: s32[128,1], index: 5, kind: input, shape index: {}]
  %s6 = inlined_call_operand.vmem [shape: bf16[128,128], index: 6, kind: input, shape index: {}]
  %s7 = inlined_call_operand.vmem [shape: bf16[128,128], index: 7, kind: input, shape index: {}]
  %s8 = inlined_call_operand.vmem [shape: bf16[128,128], index: 8, kind: input, shape index: {}]
  %s9 = inlined_call_operand.vmem [shape: bf16[128,128], index: 9, kind: input, shape index: {}]
  %s10 = inlined_call_operand.vmem [shape: f32[128,128], index: 10, kind: input, shape index: {}]
  %s11 = inlined_call_operand.vmem [shape: f32[128,128], index: 11, kind: input, shape index: {}]
  %s12 = inlined_call_operand.vmem [shape: f32[128,128], index: 12, kind: input, shape index: {}]
  %s13 = inlined_call_operand.vmem [shape: f32[128,128], index: 13, kind: output, shape index: {}]
  %s14 = sld [smem:[#allocation0]]
  $region70: #{_score.1} parent=0
    _
  %s16 = ssub.s32 1, %s14
  %s17 = scalar_select 0, %s16, %s14
  // Predicated region
  $region2: #{_score.1} parent=0 // pred_check
    _
  $region3: #{_score.1} parent=0 // pred_check_branch
    %19 = sbr.rel (0) target = $region5
  $region4: #{_score.1} parent=0 // pred_region
    _
  $region5: #{_score.1} parent=0 // pred_fallthru
    _
  // Predicated region
  $region6: #{_score.1} parent=0 // pred_check
    _
  $region7: #{_score.1} parent=0 // pred_check_branch
    %21 = sbr.rel (0) target = $region9
  $region8: #{_score.1} parent=0 // pred_region
    _
  $region9: #{_score.1} parent=0 // pred_fallthru
    _
  // Predicated region
  $region10: #{_score.1} parent=0 // pred_check
    _
  $region11: #{_score.1} parent=0 // pred_check_branch
    %23 = sbr.rel (0) target = $region13
  $region12: #{_score.1} parent=0 // pred_region
    _
  $region13: #{_score.1} parent=0 // pred_fallthru
    _
  // Predicated region
  $region14: #{_score.1} parent=0 // pred_check
    _
  $region15: #{_score.1} parent=0 // pred_check_branch
    %25 = sbr.rel (0) target = $region17
  $region16: #{_score.1} parent=0 // pred_region
    _
  $region17: #{_score.1} parent=0 // pred_fallthru
    _
  // Predicated region
  $region18: #{_score.1} parent=0 // pred_check
    _
  $region19: #{_score.1} parent=0 // pred_check_branch
    %27 = sbr.rel (0) target = $region21
  $region20: #{_score.1} parent=0 // pred_region
    _
  $region21: #{_score.1} parent=0 // pred_fallthru
    _
  // Predicated region
  $region22: #{_score.1} parent=0 // pred_check
    _
  $region23: #{_score.1} parent=0 // pred_check_branch
    %29 = sbr.rel (0) target = $region25
  $region24: #{_score.1} parent=0 // pred_region
    _
  $region25: #{_score.1} parent=0 // pred_fallthru
    _
  // Predicated region
  $region26: #{_score.1} parent=0 // pred_check
    _
  $region27: #{_score.1} parent=0 // pred_check_branch
    %31 = sbr.rel (0) target = $region29
  $region28: #{_score.1} parent=0 // pred_region
    _
  $region29: #{_score.1} parent=0 // pred_fallthru
    _
  // Predicated region
  $region30: #{_score.1} parent=0 // pred_check
    _
  $region31: #{_score.1} parent=0 // pred_check_branch
    %33 = sbr.rel (0) target = $region33
  $region32: #{_score.1} parent=0 // pred_region
    _
  $region33: #{_score.1} parent=0 // pred_fallthru
    _
  // Predicated region
  $region34: #{_score.1} parent=0 // pred_check
    _
  $region35: #{_score.1} parent=0 // pred_check_branch
    %35 = sbr.rel (0) target = $region37
  $region36: #{_score.1} parent=0 // pred_region
    _
  $region37: #{_score.1} parent=0 // pred_fallthru
    _
  // Predicated region
  $region38: #{_score.1} parent=0 // pred_check
    _
  $region39: #{_score.1} parent=0 // pred_check_branch
    %37 = sbr.rel (0) target = $region41
  $region40: #{_score.1} parent=0 // pred_region
    _
  $region41: #{_score.1} parent=0 // pred_fallthru
    _
  // Predicated region
  $region42: #{_score.1} parent=0 // pred_check
    _
  $region43: #{_score.1} parent=0 // pred_check_branch
    %39 = sbr.rel (0) target = $region45
  $region44: #{_score.1} parent=0 // pred_region
    _
  $region45: #{_score.1} parent=0 // pred_fallthru
    _
  // Predicated region
  $region46: #{_score.1} parent=0 // pred_check
    _
  $region47: #{_score.1} parent=0 // pred_check_branch
    %41 = sbr.rel (0) target = $region49
  $region48: #{_score.1} parent=0 // pred_region
    _
  $region49: #{_score.1} parent=0 // pred_fallthru
    _
  // Predicated region
  $region50: #{_score.1} parent=0 // pred_check
    _
  $region51: #{_score.1} parent=0 // pred_check_branch
    %43 = sbr.rel (0) target = $region53
  $region52: #{_score.1} parent=0 // pred_region
    _
  $region53: #{_score.1} parent=0 // pred_fallthru
    _
  %p45 = scmp.eq.s32.totalorder 0, 0
  // Predicated region
  $region54: #{_score.1} parent=0 // pred_check
    %p46 = pneg %p45
  $region55: #{_score.1} parent=0 // pred_check_branch
    %48 = sbr.rel (%p46) target = $region57
  $region56: #{_score.1} parent=0 // pred_region
    %v49 = vlaneseq
    %v50 = vand.u32 %v49, 127
    %v51 = vld [vmem:[%s1] sm:$0xff]
    %v52 = vld [vmem:[%s1 + $0x8] sm:$0xff]
    %v53 = vld [vmem:[%s1 + $0x10] sm:$0xff]
    %v54 = vld [vmem:[%s1 + $0x18] sm:$0xff]
    %v55 = vld [vmem:[%s1 + $0x20] sm:$0xff]
    %v56 = vld [vmem:[%s1 + $0x28] sm:$0xff]
    %v57 = vld [vmem:[%s1 + $0x30] sm:$0xff]
    %v58 = vld [vmem:[%s1 + $0x38] sm:$0xff]
    %v59 = vld [vmem:[%s1 + $0x40] sm:$0xff]
    %v60 = vld [vmem:[%s1 + $0x48] sm:$0xff]
    %v61 = vld [vmem:[%s1 + $0x50] sm:$0xff]
    %v62 = vld [vmem:[%s1 + $0x58] sm:$0xff]
    %v63 = vld [vmem:[%s1 + $0x60] sm:$0xff]
    %v64 = vld [vmem:[%s1 + $0x68] sm:$0xff]
    %v65 = vld [vmem:[%s1 + $0x70] sm:$0xff]
    %v66 = vld [vmem:[%s1 + $0x78] sm:$0xff]
    %67 = vset.pattern.permute.xlu0 0
    %68 = vperm.xlu0 %67, %v51
    %v69 = vpop.permute.xlu0 %68
    %70 = vset.pattern.permute.xlu0 0
    %71 = vperm.xlu0 %70, %v52
    %v72 = vpop.permute.xlu0 %71
    %73 = vset.pattern.permute.xlu0 0
    %74 = vperm.xlu0 %73, %v53
    %v75 = vpop.permute.xlu0 %74
    %76 = vset.pattern.permute.xlu0 0
    %77 = vperm.xlu0 %76, %v54
    %v78 = vpop.permute.xlu0 %77
    %79 = vset.pattern.permute.xlu0 0
    %80 = vperm.xlu0 %79, %v55
    %v81 = vpop.permute.xlu0 %80
    %82 = vset.pattern.permute.xlu0 0
    %83 = vperm.xlu0 %82, %v56
    %v84 = vpop.permute.xlu0 %83
    %85 = vset.pattern.permute.xlu0 0
    %86 = vperm.xlu0 %85, %v57
    %v87 = vpop.permute.xlu0 %86
    %88 = vset.pattern.permute.xlu0 0
    %89 = vperm.xlu0 %88, %v58
    %v90 = vpop.permute.xlu0 %89
    %91 = vset.pattern.permute.xlu0 0
    %92 = vperm.xlu0 %91, %v59
    %v93 = vpop.permute.xlu0 %92
    %94 = vset.pattern.permute.xlu0 0
    %95 = vperm.xlu0 %94, %v60
    %v96 = vpop.permute.xlu0 %95
    %97 = vset.pattern.permute.xlu0 0
    %98 = vperm.xlu0 %97, %v61
    %v99 = vpop.permute.xlu0 %98
    %100 = vset.pattern.permute.xlu0 0
    %101 = vperm.xlu0 %100, %v62
    %v102 = vpop.permute.xlu0 %101
    %103 = vset.pattern.permute.xlu0 0
    %104 = vperm.xlu0 %103, %v63
    %v105 = vpop.permute.xlu0 %104
    %106 = vset.pattern.permute.xlu0 0
    %107 = vperm.xlu0 %106, %v64
    %v108 = vpop.permute.xlu0 %107
    %109 = vset.pattern.permute.xlu0 0
    %110 = vperm.xlu0 %109, %v65
    %v111 = vpop.permute.xlu0 %110
    %112 = vset.pattern.permute.xlu0 0
    %113 = vperm.xlu0 %112, %v66
    %v114 = vpop.permute.xlu0 %113
    %vm115 = vcmp.ge.s32.totalorder %v50, %v69
    %vm116 = vcmp.ge.s32.totalorder %v50, %v72
    %vm117 = vcmp.ge.s32.totalorder %v50, %v75
    %vm118 = vcmp.ge.s32.totalorder %v50, %v78
    %vm119 = vcmp.ge.s32.totalorder %v50, %v81
    %vm120 = vcmp.ge.s32.totalorder %v50, %v84
    %vm121 = vcmp.ge.s32.totalorder %v50, %v87
    %vm122 = vcmp.ge.s32.totalorder %v50, %v90
    %vm123 = vcmp.ge.s32.totalorder %v50, %v93
    %vm124 = vcmp.ge.s32.totalorder %v50, %v96
    %vm125 = vcmp.ge.s32.totalorder %v50, %v99
    %vm126 = vcmp.ge.s32.totalorder %v50, %v102
    %vm127 = vcmp.ge.s32.totalorder %v50, %v105
    %vm128 = vcmp.ge.s32.totalorder %v50, %v108
    %vm129 = vcmp.ge.s32.totalorder %v50, %v111
    %vm130 = vcmp.ge.s32.totalorder %v50, %v114
    %v131 = vld [vmem:[%s2] sm:$0xff]
    %v132 = vld [vmem:[%s2 + $0x8] sm:$0xff]
    %v133 = vld [vmem:[%s2 + $0x10] sm:$0xff]
    %v134 = vld [vmem:[%s2 + $0x18] sm:$0xff]
    %v135 = vld [vmem:[%s2 + $0x20] sm:$0xff]
    %v136 = vld [vmem:[%s2 + $0x28] sm:$0xff]
    %v137 = vld [vmem:[%s2 + $0x30] sm:$0xff]
    %v138 = vld [vmem:[%s2 + $0x38] sm:$0xff]
    %v139 = vld [vmem:[%s2 + $0x40] sm:$0xff]
    %v140 = vld [vmem:[%s2 + $0x48] sm:$0xff]
    %v141 = vld [vmem:[%s2 + $0x50] sm:$0xff]
    %v142 = vld [vmem:[%s2 + $0x58] sm:$0xff]
    %v143 = vld [vmem:[%s2 + $0x60] sm:$0xff]
    %v144 = vld [vmem:[%s2 + $0x68] sm:$0xff]
    %v145 = vld [vmem:[%s2 + $0x70] sm:$0xff]
    %v146 = vld [vmem:[%s2 + $0x78] sm:$0xff]
    %147 = vset.pattern.permute.xlu0 0
    %148 = vperm.xlu0 %147, %v131
    %v149 = vpop.permute.xlu0 %148
    %150 = vset.pattern.permute.xlu0 0
    %151 = vperm.xlu0 %150, %v132
    %v152 = vpop.permute.xlu0 %151
    %153 = vset.pattern.permute.xlu0 0
    %154 = vperm.xlu0 %153, %v133
    %v155 = vpop.permute.xlu0 %154
    %156 = vset.pattern.permute.xlu0 0
    %157 = vperm.xlu0 %156, %v134
    %v158 = vpop.permute.xlu0 %157
    %159 = vset.pattern.permute.xlu0 0
    %160 = vperm.xlu0 %159, %v135
    %v161 = vpop.permute.xlu0 %160
    %162 = vset.pattern.permute.xlu0 0
    %163 = vperm.xlu0 %162, %v136
    %v164 = vpop.permute.xlu0 %163
    %165 = vset.pattern.permute.xlu0 0
    %166 = vperm.xlu0 %165, %v137
    %v167 = vpop.permute.xlu0 %166
    %168 = vset.pattern.permute.xlu0 0
    %169 = vperm.xlu0 %168, %v138
    %v170 = vpop.permute.xlu0 %169
    %171 = vset.pattern.permute.xlu0 0
    %172 = vperm.xlu0 %171, %v139
    %v173 = vpop.permute.xlu0 %172
    %174 = vset.pattern.permute.xlu0 0
    %175 = vperm.xlu0 %174, %v140
    %v176 = vpop.permute.xlu0 %175
    %177 = vset.pattern.permute.xlu0 0
    %178 = vperm.xlu0 %177, %v141
    %v179 = vpop.permute.xlu0 %178
    %180 = vset.pattern.permute.xlu0 0
    %181 = vperm.xlu0 %180, %v142
    %v182 = vpop.permute.xlu0 %181
    %183 = vset.pattern.permute.xlu0 0
    %184 = vperm.xlu0 %183, %v143
    %v185 = vpop.permute.xlu0 %184
    %186 = vset.pattern.permute.xlu0 0
    %187 = vperm.xlu0 %186, %v144
    %v188 = vpop.permute.xlu0 %187
    %189 = vset.pattern.permute.xlu0 0
    %190 = vperm.xlu0 %189, %v145
    %v191 = vpop.permute.xlu0 %190
    %192 = vset.pattern.permute.xlu0 0
    %193 = vperm.xlu0 %192, %v146
    %v194 = vpop.permute.xlu0 %193
    %vm195 = vcmp.lt.s32.totalorder %v50, %v149
    %vm196 = vcmp.lt.s32.totalorder %v50, %v152
    %vm197 = vcmp.lt.s32.totalorder %v50, %v155
    %vm198 = vcmp.lt.s32.totalorder %v50, %v158
    %vm199 = vcmp.lt.s32.totalorder %v50, %v161
    %vm200 = vcmp.lt.s32.totalorder %v50, %v164
    %vm201 = vcmp.lt.s32.totalorder %v50, %v167
    %vm202 = vcmp.lt.s32.totalorder %v50, %v170
    %vm203 = vcmp.lt.s32.totalorder %v50, %v173
    %vm204 = vcmp.lt.s32.totalorder %v50, %v176
    %vm205 = vcmp.lt.s32.totalorder %v50, %v179
    %vm206 = vcmp.lt.s32.totalorder %v50, %v182
    %vm207 = vcmp.lt.s32.totalorder %v50, %v185
    %vm208 = vcmp.lt.s32.totalorder %v50, %v188
    %vm209 = vcmp.lt.s32.totalorder %v50, %v191
    %vm210 = vcmp.lt.s32.totalorder %v50, %v194
    %vm211 = vmand %vm115, %vm195
    %vm212 = vmand %vm116, %vm196
    %vm213 = vmand %vm117, %vm197
    %vm214 = vmand %vm118, %vm198
    %vm215 = vmand %vm119, %vm199
    %vm216 = vmand %vm120, %vm200
    %vm217 = vmand %vm121, %vm201
    %vm218 = vmand %vm122, %vm202
    %vm219 = vmand %vm123, %vm203
    %vm220 = vmand %vm124, %vm204
    %vm221 = vmand %vm125, %vm205
    %vm222 = vmand %vm126, %vm206
    %vm223 = vmand %vm127, %vm207
    %vm224 = vmand %vm128, %vm208
    %vm225 = vmand %vm129, %vm209
    %vm226 = vmand %vm130, %vm210
    %v227 = vsel %vm211, 1, 0
    %v228 = vsel %vm212, 1, 0
    %v229 = vsel %vm213, 1, 0
    %v230 = vsel %vm214, 1, 0
    %v231 = vsel %vm215, 1, 0
    %v232 = vsel %vm216, 1, 0
    %v233 = vsel %vm217, 1, 0
    %v234 = vsel %vm218, 1, 0
    %v235 = vsel %vm219, 1, 0
    %v236 = vsel %vm220, 1, 0
    %v237 = vsel %vm221, 1, 0
    %v238 = vsel %vm222, 1, 0
    %v239 = vsel %vm223, 1, 0
    %v240 = vsel %vm224, 1, 0
    %v241 = vsel %vm225, 1, 0
    %v242 = vsel %vm226, 1, 0
    %v243 = vcvt.s32.f32 %v227
    %v244 = vcvt.s32.f32 %v228
    %v245 = vcvt.s32.f32 %v229
    %v246 = vcvt.s32.f32 %v230
    %v247 = vcvt.s32.f32 %v231
    %v248 = vcvt.s32.f32 %v232
    %v249 = vcvt.s32.f32 %v233
    %v250 = vcvt.s32.f32 %v234
    %v251 = vcvt.s32.f32 %v235
    %v252 = vcvt.s32.f32 %v236
    %v253 = vcvt.s32.f32 %v237
    %v254 = vcvt.s32.f32 %v238
    %v255 = vcvt.s32.f32 %v239
    %v256 = vcvt.s32.f32 %v240
    %v257 = vcvt.s32.f32 %v241
    %v258 = vcvt.s32.f32 %v242
    %v259 = vpack.c.bf16 %v244, %v243
    %v260 = vpack.c.bf16 %v246, %v245
    %v261 = vpack.c.bf16 %v248, %v247
    %v262 = vpack.c.bf16 %v250, %v249
    %v263 = vpack.c.bf16 %v252, %v251
    %v264 = vpack.c.bf16 %v254, %v253
    %v265 = vpack.c.bf16 %v256, %v255
    %v266 = vpack.c.bf16 %v258, %v257
    %267 = vst [vmem:[#allocation2] sm:$0xff] %v259
    %268 = vst [vmem:[#allocation2 + $0x8] sm:$0xff] %v260
    %269 = vst [vmem:[#allocation2 + $0x10] sm:$0xff] %v261
    %270 = vst [vmem:[#allocation2 + $0x18] sm:$0xff] %v262
    %271 = vst [vmem:[#allocation2 + $0x20] sm:$0xff] %v263
    %272 = vst [vmem:[#allocation2 + $0x28] sm:$0xff] %v264
    %273 = vst [vmem:[#allocation2 + $0x30] sm:$0xff] %v265
    %274 = vst [vmem:[#allocation2 + $0x38] sm:$0xff] %v266
    %v275 = vld [vmem:[%s4] sm:$0xff]
    %v276 = vld [vmem:[%s4 + $0x8] sm:$0xff]
    %v277 = vld [vmem:[%s4 + $0x10] sm:$0xff]
    %v278 = vld [vmem:[%s4 + $0x18] sm:$0xff]
    %v279 = vld [vmem:[%s4 + $0x20] sm:$0xff]
    %v280 = vld [vmem:[%s4 + $0x28] sm:$0xff]
    %v281 = vld [vmem:[%s4 + $0x30] sm:$0xff]
    %v282 = vld [vmem:[%s4 + $0x38] sm:$0xff]
    %v283 = vld [vmem:[%s4 + $0x40] sm:$0xff]
    %v284 = vld [vmem:[%s4 + $0x48] sm:$0xff]
    %v285 = vld [vmem:[%s4 + $0x50] sm:$0xff]
    %v286 = vld [vmem:[%s4 + $0x58] sm:$0xff]
    %v287 = vld [vmem:[%s4 + $0x60] sm:$0xff]
    %v288 = vld [vmem:[%s4 + $0x68] sm:$0xff]
    %v289 = vld [vmem:[%s4 + $0x70] sm:$0xff]
    %v290 = vld [vmem:[%s4 + $0x78] sm:$0xff]
    %291 = vset.pattern.permute.xlu0 0
    %292 = vperm.xlu0 %291, %v275
    %v293 = vpop.permute.xlu0 %292
    %294 = vset.pattern.permute.xlu0 0
    %295 = vperm.xlu0 %294, %v276
    %v296 = vpop.permute.xlu0 %295
    %297 = vset.pattern.permute.xlu0 0
    %298 = vperm.xlu0 %297, %v277
    %v299 = vpop.permute.xlu0 %298
    %300 = vset.pattern.permute.xlu0 0
    %301 = vperm.xlu0 %300, %v278
    %v302 = vpop.permute.xlu0 %301
    %303 = vset.pattern.permute.xlu0 0
    %304 = vperm.xlu0 %303, %v279
    %v305 = vpop.permute.xlu0 %304
    %306 = vset.pattern.permute.xlu0 0
    %307 = vperm.xlu0 %306, %v280
    %v308 = vpop.permute.xlu0 %307
    %309 = vset.pattern.permute.xlu0 0
    %310 = vperm.xlu0 %309, %v281
    %v311 = vpop.permute.xlu0 %310
    %312 = vset.pattern.permute.xlu0 0
    %313 = vperm.xlu0 %312, %v282
    %v314 = vpop.permute.xlu0 %313
    %315 = vset.pattern.permute.xlu0 0
    %316 = vperm.xlu0 %315, %v283
    %v317 = vpop.permute.xlu0 %316
    %318 = vset.pattern.permute.xlu0 0
    %319 = vperm.xlu0 %318, %v284
    %v320 = vpop.permute.xlu0 %319
    %321 = vset.pattern.permute.xlu0 0
    %322 = vperm.xlu0 %321, %v285
    %v323 = vpop.permute.xlu0 %322
    %324 = vset.pattern.permute.xlu0 0
    %325 = vperm.xlu0 %324, %v286
    %v326 = vpop.permute.xlu0 %325
    %327 = vset.pattern.permute.xlu0 0
    %328 = vperm.xlu0 %327, %v287
    %v329 = vpop.permute.xlu0 %328
    %330 = vset.pattern.permute.xlu0 0
    %331 = vperm.xlu0 %330, %v288
    %v332 = vpop.permute.xlu0 %331
    %333 = vset.pattern.permute.xlu0 0
    %334 = vperm.xlu0 %333, %v289
    %v335 = vpop.permute.xlu0 %334
    %336 = vset.pattern.permute.xlu0 0
    %337 = vperm.xlu0 %336, %v290
    %v338 = vpop.permute.xlu0 %337
    %vm339 = vcmp.ge.s32.totalorder %v50, %v293
    %vm340 = vcmp.ge.s32.totalorder %v50, %v296
    %vm341 = vcmp.ge.s32.totalorder %v50, %v299
    %vm342 = vcmp.ge.s32.totalorder %v50, %v302
    %vm343 = vcmp.ge.s32.totalorder %v50, %v305
    %vm344 = vcmp.ge.s32.totalorder %v50, %v308
    %vm345 = vcmp.ge.s32.totalorder %v50, %v311
    %vm346 = vcmp.ge.s32.totalorder %v50, %v314
    %vm347 = vcmp.ge.s32.totalorder %v50, %v317
    %vm348 = vcmp.ge.s32.totalorder %v50, %v320
    %vm349 = vcmp.ge.s32.totalorder %v50, %v323
    %vm350 = vcmp.ge.s32.totalorder %v50, %v326
    %vm351 = vcmp.ge.s32.totalorder %v50, %v329
    %vm352 = vcmp.ge.s32.totalorder %v50, %v332
    %vm353 = vcmp.ge.s32.totalorder %v50, %v335
    %vm354 = vcmp.ge.s32.totalorder %v50, %v338
    %v355 = vld [vmem:[%s5] sm:$0xff]
    %v356 = vld [vmem:[%s5 + $0x8] sm:$0xff]
    %v357 = vld [vmem:[%s5 + $0x10] sm:$0xff]
    %v358 = vld [vmem:[%s5 + $0x18] sm:$0xff]
    %v359 = vld [vmem:[%s5 + $0x20] sm:$0xff]
    %v360 = vld [vmem:[%s5 + $0x28] sm:$0xff]
    %v361 = vld [vmem:[%s5 + $0x30] sm:$0xff]
    %v362 = vld [vmem:[%s5 + $0x38] sm:$0xff]
    %v363 = vld [vmem:[%s5 + $0x40] sm:$0xff]
    %v364 = vld [vmem:[%s5 + $0x48] sm:$0xff]
    %v365 = vld [vmem:[%s5 + $0x50] sm:$0xff]
    %v366 = vld [vmem:[%s5 + $0x58] sm:$0xff]
    %v367 = vld [vmem:[%s5 + $0x60] sm:$0xff]
    %v368 = vld [vmem:[%s5 + $0x68] sm:$0xff]
    %v369 = vld [vmem:[%s5 + $0x70] sm:$0xff]
    %v370 = vld [vmem:[%s5 + $0x78] sm:$0xff]
    %371 = vset.pattern.permute.xlu0 0
    %372 = vperm.xlu0 %371, %v355
    %v373 = vpop.permute.xlu0 %372
    %374 = vset.pattern.permute.xlu0 0
    %375 = vperm.xlu0 %374, %v356
    %v376 = vpop.permute.xlu0 %375
    %377 = vset.pattern.permute.xlu0 0
    %378 = vperm.xlu0 %377, %v357
    %v379 = vpop.permute.xlu0 %378
    %380 = vset.pattern.permute.xlu0 0
    %381 = vperm.xlu0 %380, %v358
    %v382 = vpop.permute.xlu0 %381
    %383 = vset.pattern.permute.xlu0 0
    %384 = vperm.xlu0 %383, %v359
    %v385 = vpop.permute.xlu0 %384
    %386 = vset.pattern.permute.xlu0 0
    %387 = vperm.xlu0 %386, %v360
    %v388 = vpop.permute.xlu0 %387
    %389 = vset.pattern.permute.xlu0 0
    %390 = vperm.xlu0 %389, %v361
    %v391 = vpop.permute.xlu0 %390
    %392 = vset.pattern.permute.xlu0 0
    %393 = vperm.xlu0 %392, %v362
    %v394 = vpop.permute.xlu0 %393
    %395 = vset.pattern.permute.xlu0 0
    %396 = vperm.xlu0 %395, %v363
    %v397 = vpop.permute.xlu0 %396
    %398 = vset.pattern.permute.xlu0 0
    %399 = vperm.xlu0 %398, %v364
    %v400 = vpop.permute.xlu0 %399
    %401 = vset.pattern.permute.xlu0 0
    %402 = vperm.xlu0 %401, %v365
    %v403 = vpop.permute.xlu0 %402
    %404 = vset.pattern.permute.xlu0 0
    %405 = vperm.xlu0 %404, %v366
    %v406 = vpop.permute.xlu0 %405
    %407 = vset.pattern.permute.xlu0 0
    %408 = vperm.xlu0 %407, %v367
    %v409 = vpop.permute.xlu0 %408
    %410 = vset.pattern.permute.xlu0 0
    %411 = vperm.xlu0 %410, %v368
    %v412 = vpop.permute.xlu0 %411
    %413 = vset.pattern.permute.xlu0 0
    %414 = vperm.xlu0 %413, %v369
    %v415 = vpop.permute.xlu0 %414
    %416 = vset.pattern.permute.xlu0 0
    %417 = vperm.xlu0 %416, %v370
    %v418 = vpop.permute.xlu0 %417
    %vm419 = vcmp.lt.s32.totalorder %v50, %v373
    %vm420 = vcmp.lt.s32.totalorder %v50, %v376
    %vm421 = vcmp.lt.s32.totalorder %v50, %v379
    %vm422 = vcmp.lt.s32.totalorder %v50, %v382
    %vm423 = vcmp.lt.s32.totalorder %v50, %v385
    %vm424 = vcmp.lt.s32.totalorder %v50, %v388
    %vm425 = vcmp.lt.s32.totalorder %v50, %v391
    %vm426 = vcmp.lt.s32.totalorder %v50, %v394
    %vm427 = vcmp.lt.s32.totalorder %v50, %v397
    %vm428 = vcmp.lt.s32.totalorder %v50, %v400
    %vm429 = vcmp.lt.s32.totalorder %v50, %v403
    %vm430 = vcmp.lt.s32.totalorder %v50, %v406
    %vm431 = vcmp.lt.s32.totalorder %v50, %v409
    %vm432 = vcmp.lt.s32.totalorder %v50, %v412
    %vm433 = vcmp.lt.s32.totalorder %v50, %v415
    %vm434 = vcmp.lt.s32.totalorder %v50, %v418
    %vm435 = vmand %vm339, %vm419
    %vm436 = vmand %vm340, %vm420
    %vm437 = vmand %vm341, %vm421
    %vm438 = vmand %vm342, %vm422
    %vm439 = vmand %vm343, %vm423
    %vm440 = vmand %vm344, %vm424
    %vm441 = vmand %vm345, %vm425
    %vm442 = vmand %vm346, %vm426
    %vm443 = vmand %vm347, %vm427
    %vm444 = vmand %vm348, %vm428
    %vm445 = vmand %vm349, %vm429
    %vm446 = vmand %vm350, %vm430
    %vm447 = vmand %vm351, %vm431
    %vm448 = vmand %vm352, %vm432
    %vm449 = vmand %vm353, %vm433
    %vm450 = vmand %vm354, %vm434
    %v451 = vsel %vm435, 1, 0
    %v452 = vsel %vm436, 1, 0
    %v453 = vsel %vm437, 1, 0
    %v454 = vsel %vm438, 1, 0
    %v455 = vsel %vm439, 1, 0
    %v456 = vsel %vm440, 1, 0
    %v457 = vsel %vm441, 1, 0
    %v458 = vsel %vm442, 1, 0
    %v459 = vsel %vm443, 1, 0
    %v460 = vsel %vm444, 1, 0
    %v461 = vsel %vm445, 1, 0
    %v462 = vsel %vm446, 1, 0
    %v463 = vsel %vm447, 1, 0
    %v464 = vsel %vm448, 1, 0
    %v465 = vsel %vm449, 1, 0
    %v466 = vsel %vm450, 1, 0
    %v467 = vcvt.s32.f32 %v451
    %v468 = vcvt.s32.f32 %v452
    %v469 = vcvt.s32.f32 %v453
    %v470 = vcvt.s32.f32 %v454
    %v471 = vcvt.s32.f32 %v455
    %v472 = vcvt.s32.f32 %v456
    %v473 = vcvt.s32.f32 %v457
    %v474 = vcvt.s32.f32 %v458
    %v475 = vcvt.s32.f32 %v459
    %v476 = vcvt.s32.f32 %v460
    %v477 = vcvt.s32.f32 %v461
    %v478 = vcvt.s32.f32 %v462
    %v479 = vcvt.s32.f32 %v463
    %v480 = vcvt.s32.f32 %v464
    %v481 = vcvt.s32.f32 %v465
    %v482 = vcvt.s32.f32 %v466
    %v483 = vpack.c.bf16 %v468, %v467
    %v484 = vpack.c.bf16 %v470, %v469
    %v485 = vpack.c.bf16 %v472, %v471
    %v486 = vpack.c.bf16 %v474, %v473
    %v487 = vpack.c.bf16 %v476, %v475
    %v488 = vpack.c.bf16 %v478, %v477
    %v489 = vpack.c.bf16 %v480, %v479
    %v490 = vpack.c.bf16 %v482, %v481
    %491 = vst [vmem:[#allocation3] sm:$0xff] %v483
    %492 = vst [vmem:[#allocation3 + $0x8] sm:$0xff] %v484
    %493 = vst [vmem:[#allocation3 + $0x10] sm:$0xff] %v485
    %494 = vst [vmem:[#allocation3 + $0x18] sm:$0xff] %v486
    %495 = vst [vmem:[#allocation3 + $0x20] sm:$0xff] %v487
    %496 = vst [vmem:[#allocation3 + $0x28] sm:$0xff] %v488
    %497 = vst [vmem:[#allocation3 + $0x30] sm:$0xff] %v489
    %498 = vst [vmem:[#allocation3 + $0x38] sm:$0xff] %v490
    %499 = vst [vmem:[#allocation4] sm:$0xff] 0.0
    %500 = vst [vmem:[#allocation4 + $0x8] sm:$0xff] 0.0
    %501 = vst [vmem:[#allocation4 + $0x10] sm:$0xff] 0.0
    %502 = vst [vmem:[#allocation4 + $0x18] sm:$0xff] 0.0
    %503 = vst [vmem:[#allocation4 + $0x20] sm:$0xff] 0.0
    %504 = vst [vmem:[#allocation4 + $0x28] sm:$0xff] 0.0
    %505 = vst [vmem:[#allocation4 + $0x30] sm:$0xff] 0.0
    %506 = vst [vmem:[#allocation4 + $0x38] sm:$0xff] 0.0
    %507 = vst [vmem:[#allocation4 + $0x40] sm:$0xff] 0.0
    %508 = vst [vmem:[#allocation4 + $0x48] sm:$0xff] 0.0
    %509 = vst [vmem:[#allocation4 + $0x50] sm:$0xff] 0.0
    %510 = vst [vmem:[#allocation4 + $0x58] sm:$0xff] 0.0
    %511 = vst [vmem:[#allocation4 + $0x60] sm:$0xff] 0.0
    %512 = vst [vmem:[#allocation4 + $0x68] sm:$0xff] 0.0
    %513 = vst [vmem:[#allocation4 + $0x70] sm:$0xff] 0.0
    %514 = vst [vmem:[#allocation4 + $0x78] sm:$0xff] 0.0
    %515 = vst [vmem:[#allocation5] sm:$0xff] 0.0
    %516 = vst [vmem:[#allocation5 + $0x8] sm:$0xff] 0.0
    %517 = vst [vmem:[#allocation5 + $0x10] sm:$0xff] 0.0
    %518 = vst [vmem:[#allocation5 + $0x18] sm:$0xff] 0.0
    %519 = vst [vmem:[#allocation5 + $0x20] sm:$0xff] 0.0
    %520 = vst [vmem:[#allocation5 + $0x28] sm:$0xff] 0.0
    %521 = vst [vmem:[#allocation5 + $0x30] sm:$0xff] 0.0
    %522 = vst [vmem:[#allocation5 + $0x38] sm:$0xff] 0.0
    %523 = vst [vmem:[#allocation5 + $0x40] sm:$0xff] 0.0
    %524 = vst [vmem:[#allocation5 + $0x48] sm:$0xff] 0.0
    %525 = vst [vmem:[#allocation5 + $0x50] sm:$0xff] 0.0
    %526 = vst [vmem:[#allocation5 + $0x58] sm:$0xff] 0.0
    %527 = vst [vmem:[#allocation5 + $0x60] sm:$0xff] 0.0
    %528 = vst [vmem:[#allocation5 + $0x68] sm:$0xff] 0.0
    %529 = vst [vmem:[#allocation5 + $0x70] sm:$0xff] 0.0
    %530 = vst [vmem:[#allocation5 + $0x78] sm:$0xff] 0.0
  $region57: #{_score.1} parent=0 // pred_fallthru
    _
  %s531 = smul.u32 0, 128
  %v532 = vlaneseq
  %v533 = vand.u32 %v532, 127
  %v534 = vld [vmem:[%s0] sm:$0xff]
  %v535 = vld [vmem:[%s0 + $0x8] sm:$0xff]
  %v536 = vld [vmem:[%s0 + $0x10] sm:$0xff]
  %v537 = vld [vmem:[%s0 + $0x18] sm:$0xff]
  %v538 = vld [vmem:[%s0 + $0x20] sm:$0xff]
  %v539 = vld [vmem:[%s0 + $0x28] sm:$0xff]
  %v540 = vld [vmem:[%s0 + $0x30] sm:$0xff]
  %v541 = vld [vmem:[%s0 + $0x38] sm:$0xff]
  %v542 = vld [vmem:[%s0 + $0x40] sm:$0xff]
  %v543 = vld [vmem:[%s0 + $0x48] sm:$0xff]
  %v544 = vld [vmem:[%s0 + $0x50] sm:$0xff]
  %v545 = vld [vmem:[%s0 + $0x58] sm:$0xff]
  %v546 = vld [vmem:[%s0 + $0x60] sm:$0xff]
  %v547 = vld [vmem:[%s0 + $0x68] sm:$0xff]
  %v548 = vld [vmem:[%s0 + $0x70] sm:$0xff]
  %v549 = vld [vmem:[%s0 + $0x78] sm:$0xff]
  %v550 = vstv %s531
  %v551 = vsub.s32 %v534, %v550
  %v552 = vsub.s32 %v535, %v550
  %v553 = vsub.s32 %v536, %v550
  %v554 = vsub.s32 %v537, %v550
  %v555 = vsub.s32 %v538, %v550
  %v556 = vsub.s32 %v539, %v550
  %v557 = vsub.s32 %v540, %v550
  %v558 = vsub.s32 %v541, %v550
  %v559 = vsub.s32 %v542, %v550
  %v560 = vsub.s32 %v543, %v550
  %v561 = vsub.s32 %v544, %v550
  %v562 = vsub.s32 %v545, %v550
  %v563 = vsub.s32 %v546, %v550
  %v564 = vsub.s32 %v547, %v550
  %v565 = vsub.s32 %v548, %v550
  %v566 = vsub.s32 %v549, %v550
  %567 = vset.pattern.permute.xlu0 0
  %568 = vperm.xlu0 %567, %v551
  %v569 = vpop.permute.xlu0 %568
  %570 = vset.pattern.permute.xlu0 0
  %571 = vperm.xlu0 %570, %v552
  %v572 = vpop.permute.xlu0 %571
  %573 = vset.pattern.permute.xlu0 0
  %574 = vperm.xlu0 %573, %v553
  %v575 = vpop.permute.xlu0 %574
  %576 = vset.pattern.permute.xlu0 0
  %577 = vperm.xlu0 %576, %v554
  %v578 = vpop.permute.xlu0 %577
  %579 = vset.pattern.permute.xlu0 0
  %580 = vperm.xlu0 %579, %v555
  %v581 = vpop.permute.xlu0 %580
  %582 = vset.pattern.permute.xlu0 0
  %583 = vperm.xlu0 %582, %v556
  %v584 = vpop.permute.xlu0 %583
  %585 = vset.pattern.permute.xlu0 0
  %586 = vperm.xlu0 %585, %v557
  %v587 = vpop.permute.xlu0 %586
  %588 = vset.pattern.permute.xlu0 0
  %589 = vperm.xlu0 %588, %v558
  %v590 = vpop.permute.xlu0 %589
  %591 = vset.pattern.permute.xlu0 0
  %592 = vperm.xlu0 %591, %v559
  %v593 = vpop.permute.xlu0 %592
  %594 = vset.pattern.permute.xlu0 0
  %595 = vperm.xlu0 %594, %v560
  %v596 = vpop.permute.xlu0 %595
  %597 = vset.pattern.permute.xlu0 0
  %598 = vperm.xlu0 %597, %v561
  %v599 = vpop.permute.xlu0 %598
  %600 = vset.pattern.permute.xlu0 0
  %601 = vperm.xlu0 %600, %v562
  %v602 = vpop.permute.xlu0 %601
  %603 = vset.pattern.permute.xlu0 0
  %604 = vperm.xlu0 %603, %v563
  %v605 = vpop.permute.xlu0 %604
  %606 = vset.pattern.permute.xlu0 0
  %607 = vperm.xlu0 %606, %v564
  %v608 = vpop.permute.xlu0 %607
  %609 = vset.pattern.permute.xlu0 0
  %610 = vperm.xlu0 %609, %v565
  %v611 = vpop.permute.xlu0 %610
  %612 = vset.pattern.permute.xlu0 0
  %613 = vperm.xlu0 %612, %v566
  %v614 = vpop.permute.xlu0 %613
  %vm615 = vcmp.eq.s32.totalorder %v533, %v569
  %vm616 = vcmp.eq.s32.totalorder %v533, %v572
  %vm617 = vcmp.eq.s32.totalorder %v533, %v575
  %vm618 = vcmp.eq.s32.totalorder %v533, %v578
  %vm619 = vcmp.eq.s32.totalorder %v533, %v581
  %vm620 = vcmp.eq.s32.totalorder %v533, %v584
  %vm621 = vcmp.eq.s32.totalorder %v533, %v587
  %vm622 = vcmp.eq.s32.totalorder %v533, %v590
  %vm623 = vcmp.eq.s32.totalorder %v533, %v593
  %vm624 = vcmp.eq.s32.totalorder %v533, %v596
  %vm625 = vcmp.eq.s32.totalorder %v533, %v599
  %vm626 = vcmp.eq.s32.totalorder %v533, %v602
  %vm627 = vcmp.eq.s32.totalorder %v533, %v605
  %vm628 = vcmp.eq.s32.totalorder %v533, %v608
  %vm629 = vcmp.eq.s32.totalorder %v533, %v611
  %vm630 = vcmp.eq.s32.totalorder %v533, %v614
  %v631 = vsel %vm615, 1, 0
  %v632 = vsel %vm616, 1, 0
  %v633 = vsel %vm617, 1, 0
  %v634 = vsel %vm618, 1, 0
  %v635 = vsel %vm619, 1, 0
  %v636 = vsel %vm620, 1, 0
  %v637 = vsel %vm621, 1, 0
  %v638 = vsel %vm622, 1, 0
  %v639 = vsel %vm623, 1, 0
  %v640 = vsel %vm624, 1, 0
  %v641 = vsel %vm625, 1, 0
  %v642 = vsel %vm626, 1, 0
  %v643 = vsel %vm627, 1, 0
  %v644 = vsel %vm628, 1, 0
  %v645 = vsel %vm629, 1, 0
  %v646 = vsel %vm630, 1, 0
  %v647 = vcvt.s32.f32 %v631
  %v648 = vcvt.s32.f32 %v632
  %v649 = vcvt.s32.f32 %v633
  %v650 = vcvt.s32.f32 %v634
  %v651 = vcvt.s32.f32 %v635
  %v652 = vcvt.s32.f32 %v636
  %v653 = vcvt.s32.f32 %v637
  %v654 = vcvt.s32.f32 %v638
  %v655 = vcvt.s32.f32 %v639
  %v656 = vcvt.s32.f32 %v640
  %v657 = vcvt.s32.f32 %v641
  %v658 = vcvt.s32.f32 %v642
  %v659 = vcvt.s32.f32 %v643
  %v660 = vcvt.s32.f32 %v644
  %v661 = vcvt.s32.f32 %v645
  %v662 = vcvt.s32.f32 %v646
  %v663 = vpack.c.bf16 %v648, %v647
  %v664 = vpack.c.bf16 %v650, %v649
  %v665 = vpack.c.bf16 %v652, %v651
  %v666 = vpack.c.bf16 %v654, %v653
  %v667 = vpack.c.bf16 %v656, %v655
  %v668 = vpack.c.bf16 %v658, %v657
  %v669 = vpack.c.bf16 %v660, %v659
  %v670 = vpack.c.bf16 %v662, %v661
  %v671 = vld [vmem:[#allocation2] sm:$0xff]
  %v672 = vld [vmem:[#allocation2 + $0x8] sm:$0xff]
  %v673 = vld [vmem:[#allocation2 + $0x10] sm:$0xff]
  %v674 = vld [vmem:[#allocation2 + $0x18] sm:$0xff]
  %v675 = vld [vmem:[#allocation2 + $0x20] sm:$0xff]
  %v676 = vld [vmem:[#allocation2 + $0x28] sm:$0xff]
  %v677 = vld [vmem:[#allocation2 + $0x30] sm:$0xff]
  %v678 = vld [vmem:[#allocation2 + $0x38] sm:$0xff]
  %679 = vmatprep.subr.bf16.mxu0 0
  %680 = vmatpush1.bf16.msra.mxu0 %v663
  %681 = vmatprep.subr.bf16.mxu0 0
  %682 = vmatpush1.bf16.msra.mxu0 %v664
  %683 = vmatprep.subr.bf16.mxu0 0
  %684 = vmatpush1.bf16.msra.mxu0 %v665
  %685 = vmatprep.subr.bf16.mxu0 0
  %686 = vmatpush1.bf16.msra.mxu0 %v666
  %687 = vmatprep.subr.bf16.mxu0 0
  %688 = vmatpush1.bf16.msra.mxu0 %v667
  %689 = vmatprep.subr.bf16.mxu0 0
  %690 = vmatpush1.bf16.msra.mxu0 %v668
  %691 = vmatprep.subr.bf16.mxu0 0
  %692 = vmatpush1.bf16.msra.mxu0 %v669
  %693 = vmatprep.subr.bf16.mxu0 0
  %694 = vmatpush1.bf16.msra.mxu0 %v670
  %695 = vmatprep.subr.bf16.mxu0 0
  %696 = vmatpush1.bf16.msra.mxu0 0
  %697 = vmatprep.subr.bf16.mxu0 0
  %698 = vmatpush1.bf16.msra.mxu0 0
  %699 = vmatprep.subr.bf16.mxu0 0
  %700 = vmatpush1.bf16.msra.mxu0 0
  %701 = vmatprep.subr.bf16.mxu0 0
  %702 = vmatpush1.bf16.msra.mxu0 0
  %703 = vmatprep.subr.bf16.mxu0 0
  %704 = vmatpush1.bf16.msra.mxu0 0
  %705 = vmatprep.subr.bf16.mxu0 0
  %706 = vmatpush1.bf16.msra.mxu0 0
  %707 = vmatprep.subr.bf16.mxu0 0
  %708 = vmatpush1.bf16.msra.mxu0 0
  %709 = vmatprep.subr.bf16.mxu0 0
  %710 = vmatpush1.bf16.msra.mxu0 0
  %711 = vmatprep.mubr.bf16.mxu0 0
  %712 = vmatmul.mubr.bf16.gmra.mrb[0].mxu0 %v671
  %v713 = vpop.f32.mrb[0].mxu0
  %v714 = vadd.f32 0.0, %v713
  %v715 = vpop.f32.mrb[0].mxu0
  %v716 = vpop.f32.mrb[0].mxu0
  %v717 = vadd.f32 0.0, %v716
  %v718 = vpop.f32.mrb[0].mxu0
  %719 = vmatprep.mubr.bf16.mxu0 0
  %720 = vmatmul.mubr.bf16.gmra.mrb[0].mxu0 %v672
  %v721 = vpop.f32.mrb[0].mxu0
  %v722 = vadd.f32 0.0, %v721
  %v723 = vpop.f32.mrb[0].mxu0
  %v724 = vpop.f32.mrb[0].mxu0
  %v725 = vadd.f32 0.0, %v724
  %v726 = vpop.f32.mrb[0].mxu0
  %727 = vmatprep.mubr.bf16.mxu0 0
  %728 = vmatmul.mubr.bf16.gmra.mrb[0].mxu0 %v673
  %v729 = vpop.f32.mrb[0].mxu0
  %v730 = vadd.f32 0.0, %v729
  %v731 = vpop.f32.mrb[0].mxu0
  %v732 = vpop.f32.mrb[0].mxu0
  %v733 = vadd.f32 0.0, %v732
  %v734 = vpop.f32.mrb[0].mxu0
  %735 = vmatprep.mubr.bf16.mxu0 0
  %736 = vmatmul.mubr.bf16.gmra.mrb[0].mxu0 %v674
  %v737 = vpop.f32.mrb[0].mxu0
  %v738 = vadd.f32 0.0, %v737
  %v739 = vpop.f32.mrb[0].mxu0
  %v740 = vpop.f32.mrb[0].mxu0
  %v741 = vadd.f32 0.0, %v740
  %v742 = vpop.f32.mrb[0].mxu0
  %743 = vmatprep.mubr.bf16.mxu0 0
  %744 = vmatmul.mubr.bf16.gmra.mrb[0].mxu0 %v675
  %v745 = vpop.f32.mrb[0].mxu0
  %v746 = vadd.f32 0.0, %v745
  %v747 = vpop.f32.mrb[0].mxu0
  %v748 = vpop.f32.mrb[0].mxu0
  %v749 = vadd.f32 0.0, %v748
  %v750 = vpop.f32.mrb[0].mxu0
  %751 = vmatprep.mubr.bf16.mxu0 0
  %752 = vmatmul.mubr.bf16.gmra.mrb[0].mxu0 %v676
  %v753 = vpop.f32.mrb[0].mxu0
  %v754 = vadd.f32 0.0, %v753
  %v755 = vpop.f32.mrb[0].mxu0
  %v756 = vpop.f32.mrb[0].mxu0
  %v757 = vadd.f32 0.0, %v756
  %v758 = vpop.f32.mrb[0].mxu0
  %759 = vmatprep.mubr.bf16.mxu0 0
  %760 = vmatmul.mubr.bf16.gmra.mrb[0].mxu0 %v677
  %v761 = vpop.f32.mrb[0].mxu0
  %v762 = vadd.f32 0.0, %v761
  %v763 = vpop.f32.mrb[0].mxu0
  %v764 = vpop.f32.mrb[0].mxu0
  %v765 = vadd.f32 0.0, %v764
  %v766 = vpop.f32.mrb[0].mxu0
  %767 = vmatprep.mubr.bf16.mxu0 0
  %768 = vmatmul.mubr.bf16.gmra.mrb[0].mxu0 %v678
  %v769 = vpop.f32.mrb[0].mxu0
  %v770 = vadd.f32 0.0, %v769
  %v771 = vpop.f32.mrb[0].mxu0
  %v772 = vpop.f32.mrb[0].mxu0
  %v773 = vadd.f32 0.0, %v772
  %v774 = vpop.f32.mrb[0].mxu0
  %775 = vdwg.mxu0
  %v776 = vpack.c.bf16 %v717, %v714
  %v777 = vpack.c.bf16 %v725, %v722
  %v778 = vpack.c.bf16 %v733, %v730
  %v779 = vpack.c.bf16 %v741, %v738
  %v780 = vpack.c.bf16 %v749, %v746
  %v781 = vpack.c.bf16 %v757, %v754
  %v782 = vpack.c.bf16 %v765, %v762
  %v783 = vpack.c.bf16 %v773, %v770
  %v784 = vld [vmem:[#allocation4] sm:$0xff]
  %v785 = vld [vmem:[#allocation4 + $0x8] sm:$0xff]
  %v786 = vld [vmem:[#allocation4 + $0x10] sm:$0xff]
  %v787 = vld [vmem:[#allocation4 + $0x18] sm:$0xff]
  %v788 = vld [vmem:[#allocation4 + $0x20] sm:$0xff]
  %v789 = vld [vmem:[#allocation4 + $0x28] sm:$0xff]
  %v790 = vld [vmem:[#allocation4 + $0x30] sm:$0xff]
  %v791 = vld [vmem:[#allocation4 + $0x38] sm:$0xff]
  %v792 = vld [vmem:[#allocation4 + $0x40] sm:$0xff]
  %v793 = vld [vmem:[#allocation4 + $0x48] sm:$0xff]
  %v794 = vld [vmem:[#allocation4 + $0x50] sm:$0xff]
  %v795 = vld [vmem:[#allocation4 + $0x58] sm:$0xff]
  %v796 = vld [vmem:[#allocation4 + $0x60] sm:$0xff]
  %v797 = vld [vmem:[#allocation4 + $0x68] sm:$0xff]
  %v798 = vld [vmem:[#allocation4 + $0x70] sm:$0xff]
  %v799 = vld [vmem:[#allocation4 + $0x78] sm:$0xff]
  %v800 = vld [vmem:[%s6] sm:$0xf]
  %v801 = vld [vmem:[%s6 + $0x4] sm:$0xf]
  %v802 = vld [vmem:[%s6 + $0x8] sm:$0xf]
  %v803 = vld [vmem:[%s6 + $0xc] sm:$0xf]
  %v804 = vld [vmem:[%s6 + $0x10] sm:$0xf]
  %v805 = vld [vmem:[%s6 + $0x14] sm:$0xf]
  %v806 = vld [vmem:[%s6 + $0x18] sm:$0xf]
  %v807 = vld [vmem:[%s6 + $0x1c] sm:$0xf]
  %v808 = vld [vmem:[%s6 + $0x20] sm:$0xf]
  %v809 = vld [vmem:[%s6 + $0x24] sm:$0xf]
  %v810 = vld [vmem:[%s6 + $0x28] sm:$0xf]
  %v811 = vld [vmem:[%s6 + $0x2c] sm:$0xf]
  %v812 = vld [vmem:[%s6 + $0x30] sm:$0xf]
  %v813 = vld [vmem:[%s6 + $0x34] sm:$0xf]
  %v814 = vld [vmem:[%s6 + $0x38] sm:$0xf]
  %v815 = vld [vmem:[%s6 + $0x3c] sm:$0xf]
  %v816 = vld [vmem:[%s7] sm:$0xf]
  %v817 = vld [vmem:[%s7 + $0x4] sm:$0xf]
  %v818 = vld [vmem:[%s7 + $0x8] sm:$0xf]
  %v819 = vld [vmem:[%s7 + $0xc] sm:$0xf]
  %v820 = vld [vmem:[%s7 + $0x10] sm:$0xf]
  %v821 = vld [vmem:[%s7 + $0x14] sm:$0xf]
  %v822 = vld [vmem:[%s7 + $0x18] sm:$0xf]
  %v823 = vld [vmem:[%s7 + $0x1c] sm:$0xf]
  %v824 = vld [vmem:[%s7 + $0x20] sm:$0xf]
  %v825 = vld [vmem:[%s7 + $0x24] sm:$0xf]
  %v826 = vld [vmem:[%s7 + $0x28] sm:$0xf]
  %v827 = vld [vmem:[%s7 + $0x2c] sm:$0xf]
  %v828 = vld [vmem:[%s7 + $0x30] sm:$0xf]
  %v829 = vld [vmem:[%s7 + $0x34] sm:$0xf]
  %v830 = vld [vmem:[%s7 + $0x38] sm:$0xf]
  %v831 = vld [vmem:[%s7 + $0x3c] sm:$0xf]
  %v848 = vunpack.c.l.b16 %v816
  %v849 = vunpack.c.l.b16 %v817
  %v850 = vunpack.c.l.b16 %v818
  %v851 = vunpack.c.l.b16 %v819
  %v852 = vunpack.c.l.b16 %v820
  %v853 = vunpack.c.l.b16 %v821
  %v854 = vunpack.c.l.b16 %v822
  %v855 = vunpack.c.l.b16 %v823
  %v856 = vunpack.c.l.b16 %v824
  %v857 = vunpack.c.l.b16 %v825
  %v858 = vunpack.c.l.b16 %v826
  %v859 = vunpack.c.l.b16 %v827
  %v860 = vunpack.c.l.b16 %v828
  %v861 = vunpack.c.l.b16 %v829
  %v862 = vunpack.c.l.b16 %v830
  %v863 = vunpack.c.l.b16 %v831
  %v864 = vpack.c.b16 %v849, %v848
  %v865 = vpack.c.b16 %v851, %v850
  %v866 = vpack.c.b16 %v853, %v852
  %v867 = vpack.c.b16 %v855, %v854
  %v868 = vpack.c.b16 %v857, %v856
  %v869 = vpack.c.b16 %v859, %v858
  %v870 = vpack.c.b16 %v861, %v860
  %v871 = vpack.c.b16 %v863, %v862
  %880 = vmatprep.subr.bf16.mxu0 0
  %881 = vmatpush1.bf16.msra.mxu0 %v864
  %882 = vmatprep.subr.bf16.mxu0 0
  %883 = vmatpush1.bf16.msra.mxu0 %v865
  %884 = vmatprep.subr.bf16.mxu0 0
  %885 = vmatpush1.bf16.msra.mxu0 %v866
  %886 = vmatprep.subr.bf16.mxu0 0
  %887 = vmatpush1.bf16.msra.mxu0 %v867
  %888 = vmatprep.subr.bf16.mxu0 0
  %889 = vmatpush1.bf16.msra.mxu0 %v868
  %890 = vmatprep.subr.bf16.mxu0 0
  %891 = vmatpush1.bf16.msra.mxu0 %v869
  %892 = vmatprep.subr.bf16.mxu0 0
  %893 = vmatpush1.bf16.msra.mxu0 %v870
  %894 = vmatprep.subr.bf16.mxu0 0
  %895 = vmatpush1.bf16.msra.mxu0 %v871
  %896 = vmatprep.subr.bf16.mxu0 0
  %897 = vmatpush1.bf16.msra.mxu0 0
  %898 = vmatprep.subr.bf16.mxu0 0
  %899 = vmatpush1.bf16.msra.mxu0 0
  %900 = vmatprep.subr.bf16.mxu0 0
  %901 = vmatpush1.bf16.msra.mxu0 0
  %902 = vmatprep.subr.bf16.mxu0 0
  %903 = vmatpush1.bf16.msra.mxu0 0
  %904 = vmatprep.subr.bf16.mxu0 0
  %905 = vmatpush1.bf16.msra.mxu0 0
  %906 = vmatprep.subr.bf16.mxu0 0
  %907 = vmatpush1.bf16.msra.mxu0 0
  %908 = vmatprep.subr.bf16.mxu0 0
  %909 = vmatpush1.bf16.msra.mxu0 0
  %910 = vmatprep.subr.bf16.mxu0 0
  %911 = vmatpush1.bf16.msra.mxu0 0
  %912 = vmatprep.mubr.bf16.mxu0 0
  %913 = vmatmul.mubr.bf16.gmra.mrb[0].mxu0 %v776
  %v914 = vpop.f32.mrb[0].mxu0
  %v915 = vadd.f32 0.0, %v914
  %v916 = vpop.f32.mrb[0].mxu0
  %v917 = vpop.f32.mrb[0].mxu0
  %v918 = vadd.f32 0.0, %v917
  %v919 = vpop.f32.mrb[0].mxu0
  %920 = vmatprep.mubr.bf16.mxu0 0
  %921 = vmatmul.mubr.bf16.gmra.mrb[0].mxu0 %v777
  %v922 = vpop.f32.mrb[0].mxu0
  %v923 = vadd.f32 0.0, %v922
  %v924 = vpop.f32.mrb[0].mxu0
  %v925 = vpop.f32.mrb[0].mxu0
  %v926 = vadd.f32 0.0, %v925
  %v927 = vpop.f32.mrb[0].mxu0
  %928 = vmatprep.mubr.bf16.mxu0 0
  %929 = vmatmul.mubr.bf16.gmra.mrb[0].mxu0 %v778
  %v930 = vpop.f32.mrb[0].mxu0
  %v931 = vadd.f32 0.0, %v930
  %v932 = vpop.f32.mrb[0].mxu0
  %v933 = vpop.f32.mrb[0].mxu0
  %v934 = vadd.f32 0.0, %v933
  %v935 = vpop.f32.mrb[0].mxu0
  %936 = vmatprep.mubr.bf16.mxu0 0
  %937 = vmatmul.mubr.bf16.gmra.mrb[0].mxu0 %v779
  %v938 = vpop.f32.mrb[0].mxu0
  %v939 = vadd.f32 0.0, %v938
  %v940 = vpop.f32.mrb[0].mxu0
  %v941 = vpop.f32.mrb[0].mxu0
  %v942 = vadd.f32 0.0, %v941
  %v943 = vpop.f32.mrb[0].mxu0
  %944 = vmatprep.mubr.bf16.mxu0 0
  %945 = vmatmul.mubr.bf16.gmra.mrb[0].mxu0 %v780
  %v946 = vpop.f32.mrb[0].mxu0
  %v947 = vadd.f32 0.0, %v946
  %v948 = vpop.f32.mrb[0].mxu0
  %v949 = vpop.f32.mrb[0].mxu0
  %v950 = vadd.f32 0.0, %v949
  %v951 = vpop.f32.mrb[0].mxu0
  %952 = vmatprep.mubr.bf16.mxu0 0
  %953 = vmatmul.mubr.bf16.gmra.mrb[0].mxu0 %v781
  %v954 = vpop.f32.mrb[0].mxu0
  %v955 = vadd.f32 0.0, %v954
  %v956 = vpop.f32.mrb[0].mxu0
  %v957 = vpop.f32.mrb[0].mxu0
  %v958 = vadd.f32 0.0, %v957
  %v959 = vpop.f32.mrb[0].mxu0
  %960 = vmatprep.mubr.bf16.mxu0 0
  %961 = vmatmul.mubr.bf16.gmra.mrb[0].mxu0 %v782
  %v962 = vpop.f32.mrb[0].mxu0
  %v963 = vadd.f32 0.0, %v962
  %v964 = vpop.f32.mrb[0].mxu0
  %v965 = vpop.f32.mrb[0].mxu0
  %v966 = vadd.f32 0.0, %v965
  %v967 = vpop.f32.mrb[0].mxu0
  %968 = vmatprep.mubr.bf16.mxu0 0
  %969 = vmatmul.mubr.bf16.gmra.mrb[0].mxu0 %v783
  %v970 = vpop.f32.mrb[0].mxu0
  %v971 = vadd.f32 0.0, %v970
  %v972 = vpop.f32.mrb[0].mxu0
  %v973 = vpop.f32.mrb[0].mxu0
  %v974 = vadd.f32 0.0, %v973
  %v975 = vpop.f32.mrb[0].mxu0
  %976 = vdwg.mxu0
  %v993 = vunpack.c.l.b16 %v800
  %v994 = vunpack.c.l.b16 %v801
  %v995 = vunpack.c.l.b16 %v802
  %v996 = vunpack.c.l.b16 %v803
  %v997 = vunpack.c.l.b16 %v804
  %v998 = vunpack.c.l.b16 %v805
  %v999 = vunpack.c.l.b16 %v806
  %v1000 = vunpack.c.l.b16 %v807
  %v1001 = vunpack.c.l.b16 %v808
  %v1002 = vunpack.c.l.b16 %v809
  %v1003 = vunpack.c.l.b16 %v810
  %v1004 = vunpack.c.l.b16 %v811
  %v1005 = vunpack.c.l.b16 %v812
  %v1006 = vunpack.c.l.b16 %v813
  %v1007 = vunpack.c.l.b16 %v814
  %v1008 = vunpack.c.l.b16 %v815
  %v1009 = vpack.c.b16 %v994, %v993
  %v1010 = vpack.c.b16 %v996, %v995
  %v1011 = vpack.c.b16 %v998, %v997
  %v1012 = vpack.c.b16 %v1000, %v999
  %v1013 = vpack.c.b16 %v1002, %v1001
  %v1014 = vpack.c.b16 %v1004, %v1003
  %v1015 = vpack.c.b16 %v1006, %v1005
  %v1016 = vpack.c.b16 %v1008, %v1007
  %1025 = vmatprep.subr.bf16.mxu0 0
  %1026 = vmatpush1.bf16.msra.mxu0 %v1009
  %1027 = vmatprep.subr.bf16.mxu0 0
  %1028 = vmatpush1.bf16.msra.mxu0 %v1010
  %1029 = vmatprep.subr.bf16.mxu0 0
  %1030 = vmatpush1.bf16.msra.mxu0 %v1011
  %1031 = vmatprep.subr.bf16.mxu0 0
  %1032 = vmatpush1.bf16.msra.mxu0 %v1012
  %1033 = vmatprep.subr.bf16.mxu0 0
  %1034 = vmatpush1.bf16.msra.mxu0 %v1013
  %1035 = vmatprep.subr.bf16.mxu0 0
  %1036 = vmatpush1.bf16.msra.mxu0 %v1014
  %1037 = vmatprep.subr.bf16.mxu0 0
  %1038 = vmatpush1.bf16.msra.mxu0 %v1015
  %1039 = vmatprep.subr.bf16.mxu0 0
  %1040 = vmatpush1.bf16.msra.mxu0 %v1016
  %1041 = vmatprep.subr.bf16.mxu0 0
  %1042 = vmatpush1.bf16.msra.mxu0 0
  %1043 = vmatprep.subr.bf16.mxu0 0
  %1044 = vmatpush1.bf16.msra.mxu0 0
  %1045 = vmatprep.subr.bf16.mxu0 0
  %1046 = vmatpush1.bf16.msra.mxu0 0
  %1047 = vmatprep.subr.bf16.mxu0 0
  %1048 = vmatpush1.bf16.msra.mxu0 0
  %1049 = vmatprep.subr.bf16.mxu0 0
  %1050 = vmatpush1.bf16.msra.mxu0 0
  %1051 = vmatprep.subr.bf16.mxu0 0
  %1052 = vmatpush1.bf16.msra.mxu0 0
  %1053 = vmatprep.subr.bf16.mxu0 0
  %1054 = vmatpush1.bf16.msra.mxu0 0
  %1055 = vmatprep.subr.bf16.mxu0 0
  %1056 = vmatpush1.bf16.msra.mxu0 0
  %1057 = vmatprep.mubr.bf16.mxu0 0
  %1058 = vmatmul.mubr.bf16.gmra.mrb[0].mxu0 %v776
  %v1059 = vpop.f32.mrb[0].mxu0
  %v1060 = vadd.f32 %v915, %v1059
  %v1061 = vpop.f32.mrb[0].mxu0
  %v1062 = vpop.f32.mrb[0].mxu0
  %v1063 = vadd.f32 %v918, %v1062
  %v1064 = vpop.f32.mrb[0].mxu0
  %1065 = vmatprep.mubr.bf16.mxu0 0
  %1066 = vmatmul.mubr.bf16.gmra.mrb[0].mxu0 %v777
  %v1067 = vpop.f32.mrb[0].mxu0
  %v1068 = vadd.f32 %v923, %v1067
  %v1069 = vpop.f32.mrb[0].mxu0
  %v1070 = vpop.f32.mrb[0].mxu0
  %v1071 = vadd.f32 %v926, %v1070
  %v1072 = vpop.f32.mrb[0].mxu0
  %1073 = vmatprep.mubr.bf16.mxu0 0
  %1074 = vmatmul.mubr.bf16.gmra.mrb[0].mxu0 %v778
  %v1075 = vpop.f32.mrb[0].mxu0
  %v1076 = vadd.f32 %v931, %v1075
  %v1077 = vpop.f32.mrb[0].mxu0
  %v1078 = vpop.f32.mrb[0].mxu0
  %v1079 = vadd.f32 %v934, %v1078
  %v1080 = vpop.f32.mrb[0].mxu0
  %1081 = vmatprep.mubr.bf16.mxu0 0
  %1082 = vmatmul.mubr.bf16.gmra.mrb[0].mxu0 %v779
  %v1083 = vpop.f32.mrb[0].mxu0
  %v1084 = vadd.f32 %v939, %v1083
  %v1085 = vpop.f32.mrb[0].mxu0
  %v1086 = vpop.f32.mrb[0].mxu0
  %v1087 = vadd.f32 %v942, %v1086
  %v1088 = vpop.f32.mrb[0].mxu0
  %1089 = vmatprep.mubr.bf16.mxu0 0
  %1090 = vmatmul.mubr.bf16.gmra.mrb[0].mxu0 %v780
  %v1091 = vpop.f32.mrb[0].mxu0
  %v1092 = vadd.f32 %v947, %v1091
  %v1093 = vpop.f32.mrb[0].mxu0
  %v1094 = vpop.f32.mrb[0].mxu0
  %v1095 = vadd.f32 %v950, %v1094
  %v1096 = vpop.f32.mrb[0].mxu0
  %1097 = vmatprep.mubr.bf16.mxu0 0
  %1098 = vmatmul.mubr.bf16.gmra.mrb[0].mxu0 %v781
  %v1099 = vpop.f32.mrb[0].mxu0
  %v1100 = vadd.f32 %v955, %v1099
  %v1101 = vpop.f32.mrb[0].mxu0
  %v1102 = vpop.f32.mrb[0].mxu0
  %v1103 = vadd.f32 %v958, %v1102
  %v1104 = vpop.f32.mrb[0].mxu0
  %1105 = vmatprep.mubr.bf16.mxu0 0
  %1106 = vmatmul.mubr.bf16.gmra.mrb[0].mxu0 %v782
  %v1107 = vpop.f32.mrb[0].mxu0
  %v1108 = vadd.f32 %v963, %v1107
  %v1109 = vpop.f32.mrb[0].mxu0
  %v1110 = vpop.f32.mrb[0].mxu0
  %v1111 = vadd.f32 %v966, %v1110
  %v1112 = vpop.f32.mrb[0].mxu0
  %1113 = vmatprep.mubr.bf16.mxu0 0
  %1114 = vmatmul.mubr.bf16.gmra.mrb[0].mxu0 %v783
  %v1115 = vpop.f32.mrb[0].mxu0
  %v1116 = vadd.f32 %v971, %v1115
  %v1117 = vpop.f32.mrb[0].mxu0
  %v1118 = vpop.f32.mrb[0].mxu0
  %v1119 = vadd.f32 %v974, %v1118
  %v1120 = vpop.f32.mrb[0].mxu0
  %1121 = vdwg.mxu0
  %v1122 = vadd.f32 %v784, %v1060
  %v1123 = vadd.f32 %v785, %v1063
  %v1124 = vadd.f32 %v786, %v1068
  %v1125 = vadd.f32 %v787, %v1071
  %v1126 = vadd.f32 %v788, %v1076
  %v1127 = vadd.f32 %v789, %v1079
  %v1128 = vadd.f32 %v790, %v1084
  %v1129 = vadd.f32 %v791, %v1087
  %v1130 = vadd.f32 %v792, %v1092
  %v1131 = vadd.f32 %v793, %v1095
  %v1132 = vadd.f32 %v794, %v1100
  %v1133 = vadd.f32 %v795, %v1103
  %v1134 = vadd.f32 %v796, %v1108
  %v1135 = vadd.f32 %v797, %v1111
  %v1136 = vadd.f32 %v798, %v1116
  %v1137 = vadd.f32 %v799, %v1119
  %1138 = vst [vmem:[#allocation4] sm:$0xff] %v1122
  %1139 = vst [vmem:[#allocation4 + $0x8] sm:$0xff] %v1123
  %1140 = vst [vmem:[#allocation4 + $0x10] sm:$0xff] %v1124
  %1141 = vst [vmem:[#allocation4 + $0x18] sm:$0xff] %v1125
  %1142 = vst [vmem:[#allocation4 + $0x20] sm:$0xff] %v1126
  %1143 = vst [vmem:[#allocation4 + $0x28] sm:$0xff] %v1127
  %1144 = vst [vmem:[#allocation4 + $0x30] sm:$0xff] %v1128
  %1145 = vst [vmem:[#allocation4 + $0x38] sm:$0xff] %v1129
  %1146 = vst [vmem:[#allocation4 + $0x40] sm:$0xff] %v1130
  %1147 = vst [vmem:[#allocation4 + $0x48] sm:$0xff] %v1131
  %1148 = vst [vmem:[#allocation4 + $0x50] sm:$0xff] %v1132
  %1149 = vst [vmem:[#allocation4 + $0x58] sm:$0xff] %v1133
  %1150 = vst [vmem:[#allocation4 + $0x60] sm:$0xff] %v1134
  %1151 = vst [vmem:[#allocation4 + $0x68] sm:$0xff] %v1135
  %1152 = vst [vmem:[#allocation4 + $0x70] sm:$0xff] %v1136
  %1153 = vst [vmem:[#allocation4 + $0x78] sm:$0xff] %v1137
  %v1154 = vld [vmem:[%s3] sm:$0xff]
  %v1155 = vld [vmem:[%s3 + $0x8] sm:$0xff]
  %v1156 = vld [vmem:[%s3 + $0x10] sm:$0xff]
  %v1157 = vld [vmem:[%s3 + $0x18] sm:$0xff]
  %v1158 = vld [vmem:[%s3 + $0x20] sm:$0xff]
  %v1159 = vld [vmem:[%s3 + $0x28] sm:$0xff]
  %v1160 = vld [vmem:[%s3 + $0x30] sm:$0xff]
  %v1161 = vld [vmem:[%s3 + $0x38] sm:$0xff]
  %v1162 = vld [vmem:[%s3 + $0x40] sm:$0xff]
  %v1163 = vld [vmem:[%s3 + $0x48] sm:$0xff]
  %v1164 = vld [vmem:[%s3 + $0x50] sm:$0xff]
  %v1165 = vld [vmem:[%s3 + $0x58] sm:$0xff]
  %v1166 = vld [vmem:[%s3 + $0x60] sm:$0xff]
  %v1167 = vld [vmem:[%s3 + $0x68] sm:$0xff]
  %v1168 = vld [vmem:[%s3 + $0x70] sm:$0xff]
  %v1169 = vld [vmem:[%s3 + $0x78] sm:$0xff]
  %v1170 = vsub.s32 %v1154, %v550
  %v1171 = vsub.s32 %v1155, %v550
  %v1172 = vsub.s32 %v1156, %v550
  %v1173 = vsub.s32 %v1157, %v550
  %v1174 = vsub.s32 %v1158, %v550
  %v1175 = vsub.s32 %v1159, %v550
  %v1176 = vsub.s32 %v1160, %v550
  %v1177 = vsub.s32 %v1161, %v550
  %v1178 = vsub.s32 %v1162, %v550
  %v1179 = vsub.s32 %v1163, %v550
  %v1180 = vsub.s32 %v1164, %v550
  %v1181 = vsub.s32 %v1165, %v550
  %v1182 = vsub.s32 %v1166, %v550
  %v1183 = vsub.s32 %v1167, %v550
  %v1184 = vsub.s32 %v1168, %v550
  %v1185 = vsub.s32 %v1169, %v550
  %1186 = vset.pattern.permute.xlu0 0
  %1187 = vperm.xlu0 %1186, %v1170
  %v1188 = vpop.permute.xlu0 %1187
  %1189 = vset.pattern.permute.xlu0 0
  %1190 = vperm.xlu0 %1189, %v1171
  %v1191 = vpop.permute.xlu0 %1190
  %1192 = vset.pattern.permute.xlu0 0
  %1193 = vperm.xlu0 %1192, %v1172
  %v1194 = vpop.permute.xlu0 %1193
  %1195 = vset.pattern.permute.xlu0 0
  %1196 = vperm.xlu0 %1195, %v1173
  %v1197 = vpop.permute.xlu0 %1196
  %1198 = vset.pattern.permute.xlu0 0
  %1199 = vperm.xlu0 %1198, %v1174
  %v1200 = vpop.permute.xlu0 %1199
  %1201 = vset.pattern.permute.xlu0 0
  %1202 = vperm.xlu0 %1201, %v1175
  %v1203 = vpop.permute.xlu0 %1202
  %1204 = vset.pattern.permute.xlu0 0
  %1205 = vperm.xlu0 %1204, %v1176
  %v1206 = vpop.permute.xlu0 %1205
  %1207 = vset.pattern.permute.xlu0 0
  %1208 = vperm.xlu0 %1207, %v1177
  %v1209 = vpop.permute.xlu0 %1208
  %1210 = vset.pattern.permute.xlu0 0
  %1211 = vperm.xlu0 %1210, %v1178
  %v1212 = vpop.permute.xlu0 %1211
  %1213 = vset.pattern.permute.xlu0 0
  %1214 = vperm.xlu0 %1213, %v1179
  %v1215 = vpop.permute.xlu0 %1214
  %1216 = vset.pattern.permute.xlu0 0
  %1217 = vperm.xlu0 %1216, %v1180
  %v1218 = vpop.permute.xlu0 %1217
  %1219 = vset.pattern.permute.xlu0 0
  %1220 = vperm.xlu0 %1219, %v1181
  %v1221 = vpop.permute.xlu0 %1220
  %1222 = vset.pattern.permute.xlu0 0
  %1223 = vperm.xlu0 %1222, %v1182
  %v1224 = vpop.permute.xlu0 %1223
  %1225 = vset.pattern.permute.xlu0 0
  %1226 = vperm.xlu0 %1225, %v1183
  %v1227 = vpop.permute.xlu0 %1226
  %1228 = vset.pattern.permute.xlu0 0
  %1229 = vperm.xlu0 %1228, %v1184
  %v1230 = vpop.permute.xlu0 %1229
  %1231 = vset.pattern.permute.xlu0 0
  %1232 = vperm.xlu0 %1231, %v1185
  %v1233 = vpop.permute.xlu0 %1232
  %vm1234 = vcmp.eq.s32.totalorder %v533, %v1188
  %vm1235 = vcmp.eq.s32.totalorder %v533, %v1191
  %vm1236 = vcmp.eq.s32.totalorder %v533, %v1194
  %vm1237 = vcmp.eq.s32.totalorder %v533, %v1197
  %vm1238 = vcmp.eq.s32.totalorder %v533, %v1200
  %vm1239 = vcmp.eq.s32.totalorder %v533, %v1203
  %vm1240 = vcmp.eq.s32.totalorder %v533, %v1206
  %vm1241 = vcmp.eq.s32.totalorder %v533, %v1209
  %vm1242 = vcmp.eq.s32.totalorder %v533, %v1212
  %vm1243 = vcmp.eq.s32.totalorder %v533, %v1215
  %vm1244 = vcmp.eq.s32.totalorder %v533, %v1218
  %vm1245 = vcmp.eq.s32.totalorder %v533, %v1221
  %vm1246 = vcmp.eq.s32.totalorder %v533, %v1224
  %vm1247 = vcmp.eq.s32.totalorder %v533, %v1227
  %vm1248 = vcmp.eq.s32.totalorder %v533, %v1230
  %vm1249 = vcmp.eq.s32.totalorder %v533, %v1233
  %v1250 = vsel %vm1234, 1, 0
  %v1251 = vsel %vm1235, 1, 0
  %v1252 = vsel %vm1236, 1, 0
  %v1253 = vsel %vm1237, 1, 0
  %v1254 = vsel %vm1238, 1, 0
  %v1255 = vsel %vm1239, 1, 0
  %v1256 = vsel %vm1240, 1, 0
  %v1257 = vsel %vm1241, 1, 0
  %v1258 = vsel %vm1242, 1, 0
  %v1259 = vsel %vm1243, 1, 0
  %v1260 = vsel %vm1244, 1, 0
  %v1261 = vsel %vm1245, 1, 0
  %v1262 = vsel %vm1246, 1, 0
  %v1263 = vsel %vm1247, 1, 0
  %v1264 = vsel %vm1248, 1, 0
  %v1265 = vsel %vm1249, 1, 0
  %v1266 = vcvt.s32.f32 %v1250
  %v1267 = vcvt.s32.f32 %v1251
  %v1268 = vcvt.s32.f32 %v1252
  %v1269 = vcvt.s32.f32 %v1253
  %v1270 = vcvt.s32.f32 %v1254
  %v1271 = vcvt.s32.f32 %v1255
  %v1272 = vcvt.s32.f32 %v1256
  %v1273 = vcvt.s32.f32 %v1257
  %v1274 = vcvt.s32.f32 %v1258
  %v1275 = vcvt.s32.f32 %v1259
  %v1276 = vcvt.s32.f32 %v1260
  %v1277 = vcvt.s32.f32 %v1261
  %v1278 = vcvt.s32.f32 %v1262
  %v1279 = vcvt.s32.f32 %v1263
  %v1280 = vcvt.s32.f32 %v1264
  %v1281 = vcvt.s32.f32 %v1265
  %v1282 = vpack.c.bf16 %v1267, %v1266
  %v1283 = vpack.c.bf16 %v1269, %v1268
  %v1284 = vpack.c.bf16 %v1271, %v1270
  %v1285 = vpack.c.bf16 %v1273, %v1272
  %v1286 = vpack.c.bf16 %v1275, %v1274
  %v1287 = vpack.c.bf16 %v1277, %v1276
  %v1288 = vpack.c.bf16 %v1279, %v1278
  %v1289 = vpack.c.bf16 %v1281, %v1280
  %v1290 = vld [vmem:[#allocation3] sm:$0xff]
  %v1291 = vld [vmem:[#allocation3 + $0x8] sm:$0xff]
  %v1292 = vld [vmem:[#allocation3 + $0x10] sm:$0xff]
  %v1293 = vld [vmem:[#allocation3 + $0x18] sm:$0xff]
  %v1294 = vld [vmem:[#allocation3 + $0x20] sm:$0xff]
  %v1295 = vld [vmem:[#allocation3 + $0x28] sm:$0xff]
  %v1296 = vld [vmem:[#allocation3 + $0x30] sm:$0xff]
  %v1297 = vld [vmem:[#allocation3 + $0x38] sm:$0xff]
  %1298 = vmatprep.subr.bf16.mxu0 0
  %1299 = vmatpush1.bf16.msra.mxu0 %v1282
  %1300 = vmatprep.subr.bf16.mxu0 0
  %1301 = vmatpush1.bf16.msra.mxu0 %v1283
  %1302 = vmatprep.subr.bf16.mxu0 0
  %1303 = vmatpush1.bf16.msra.mxu0 %v1284
  %1304 = vmatprep.subr.bf16.mxu0 0
  %1305 = vmatpush1.bf16.msra.mxu0 %v1285
  %1306 = vmatprep.subr.bf16.mxu0 0
  %1307 = vmatpush1.bf16.msra.mxu0 %v1286
  %1308 = vmatprep.subr.bf16.mxu0 0
  %1309 = vmatpush1.bf16.msra.mxu0 %v1287
  %1310 = vmatprep.subr.bf16.mxu0 0
  %1311 = vmatpush1.bf16.msra.mxu0 %v1288
  %1312 = vmatprep.subr.bf16.mxu0 0
  %1313 = vmatpush1.bf16.msra.mxu0 %v1289
  %1314 = vmatprep.subr.bf16.mxu0 0
  %1315 = vmatpush1.bf16.msra.mxu0 0
  %1316 = vmatprep.subr.bf16.mxu0 0
  %1317 = vmatpush1.bf16.msra.mxu0 0
  %1318 = vmatprep.subr.bf16.mxu0 0
  %1319 = vmatpush1.bf16.msra.mxu0 0
  %1320 = vmatprep.subr.bf16.mxu0 0
  %1321 = vmatpush1.bf16.msra.mxu0 0
  %1322 = vmatprep.subr.bf16.mxu0 0
  %1323 = vmatpush1.bf16.msra.mxu0 0
  %1324 = vmatprep.subr.bf16.mxu0 0
  %1325 = vmatpush1.bf16.msra.mxu0 0
  %1326 = vmatprep.subr.bf16.mxu0 0
  %1327 = vmatpush1.bf16.msra.mxu0 0
  %1328 = vmatprep.subr.bf16.mxu0 0
  %1329 = vmatpush1.bf16.msra.mxu0 0
  %1330 = vmatprep.mubr.bf16.mxu0 0
  %1331 = vmatmul.mubr.bf16.gmra.mrb[0].mxu0 %v1290
  %v1332 = vpop.f32.mrb[0].mxu0
  %v1333 = vadd.f32 0.0, %v1332
  %v1334 = vpop.f32.mrb[0].mxu0
  %v1335 = vpop.f32.mrb[0].mxu0
  %v1336 = vadd.f32 0.0, %v1335
  %v1337 = vpop.f32.mrb[0].mxu0
  %1338 = vmatprep.mubr.bf16.mxu0 0
  %1339 = vmatmul.mubr.bf16.gmra.mrb[0].mxu0 %v1291
  %v1340 = vpop.f32.mrb[0].mxu0
  %v1341 = vadd.f32 0.0, %v1340
  %v1342 = vpop.f32.mrb[0].mxu0
  %v1343 = vpop.f32.mrb[0].mxu0
  %v1344 = vadd.f32 0.0, %v1343
  %v1345 = vpop.f32.mrb[0].mxu0
  %1346 = vmatprep.mubr.bf16.mxu0 0
  %1347 = vmatmul.mubr.bf16.gmra.mrb[0].mxu0 %v1292
  %v1348 = vpop.f32.mrb[0].mxu0
  %v1349 = vadd.f32 0.0, %v1348
  %v1350 = vpop.f32.mrb[0].mxu0
  %v1351 = vpop.f32.mrb[0].mxu0
  %v1352 = vadd.f32 0.0, %v1351
  %v1353 = vpop.f32.mrb[0].mxu0
  %1354 = vmatprep.mubr.bf16.mxu0 0
  %1355 = vmatmul.mubr.bf16.gmra.mrb[0].mxu0 %v1293
  %v1356 = vpop.f32.mrb[0].mxu0
  %v1357 = vadd.f32 0.0, %v1356
  %v1358 = vpop.f32.mrb[0].mxu0
  %v1359 = vpop.f32.mrb[0].mxu0
  %v1360 = vadd.f32 0.0, %v1359
  %v1361 = vpop.f32.mrb[0].mxu0
  %1362 = vmatprep.mubr.bf16.mxu0 0
  %1363 = vmatmul.mubr.bf16.gmra.mrb[0].mxu0 %v1294
  %v1364 = vpop.f32.mrb[0].mxu0
  %v1365 = vadd.f32 0.0, %v1364
  %v1366 = vpop.f32.mrb[0].mxu0
  %v1367 = vpop.f32.mrb[0].mxu0
  %v1368 = vadd.f32 0.0, %v1367
  %v1369 = vpop.f32.mrb[0].mxu0
  %1370 = vmatprep.mubr.bf16.mxu0 0
  %1371 = vmatmul.mubr.bf16.gmra.mrb[0].mxu0 %v1295
  %v1372 = vpop.f32.mrb[0].mxu0
  %v1373 = vadd.f32 0.0, %v1372
  %v1374 = vpop.f32.mrb[0].mxu0
  %v1375 = vpop.f32.mrb[0].mxu0
  %v1376 = vadd.f32 0.0, %v1375
  %v1377 = vpop.f32.mrb[0].mxu0
  %1378 = vmatprep.mubr.bf16.mxu0 0
  %1379 = vmatmul.mubr.bf16.gmra.mrb[0].mxu0 %v1296
  %v1380 = vpop.f32.mrb[0].mxu0
  %v1381 = vadd.f32 0.0, %v1380
  %v1382 = vpop.f32.mrb[0].mxu0
  %v1383 = vpop.f32.mrb[0].mxu0
  %v1384 = vadd.f32 0.0, %v1383
  %v1385 = vpop.f32.mrb[0].mxu0
  %1386 = vmatprep.mubr.bf16.mxu0 0
  %1387 = vmatmul.mubr.bf16.gmra.mrb[0].mxu0 %v1297
  %v1388 = vpop.f32.mrb[0].mxu0
  %v1389 = vadd.f32 0.0, %v1388
  %v1390 = vpop.f32.mrb[0].mxu0
  %v1391 = vpop.f32.mrb[0].mxu0
  %v1392 = vadd.f32 0.0, %v1391
  %v1393 = vpop.f32.mrb[0].mxu0
  %1394 = vdwg.mxu0
  %v1395 = vpack.c.bf16 %v1336, %v1333
  %v1396 = vpack.c.bf16 %v1344, %v1341
  %v1397 = vpack.c.bf16 %v1352, %v1349
  %v1398 = vpack.c.bf16 %v1360, %v1357
  %v1399 = vpack.c.bf16 %v1368, %v1365
  %v1400 = vpack.c.bf16 %v1376, %v1373
  %v1401 = vpack.c.bf16 %v1384, %v1381
  %v1402 = vpack.c.bf16 %v1392, %v1389
  %v1403 = vld [vmem:[#allocation5] sm:$0xff]
  %v1404 = vld [vmem:[#allocation5 + $0x8] sm:$0xff]
  %v1405 = vld [vmem:[#allocation5 + $0x10] sm:$0xff]
  %v1406 = vld [vmem:[#allocation5 + $0x18] sm:$0xff]
  %v1407 = vld [vmem:[#allocation5 + $0x20] sm:$0xff]
  %v1408 = vld [vmem:[#allocation5 + $0x28] sm:$0xff]
  %v1409 = vld [vmem:[#allocation5 + $0x30] sm:$0xff]
  %v1410 = vld [vmem:[#allocation5 + $0x38] sm:$0xff]
  %v1411 = vld [vmem:[#allocation5 + $0x40] sm:$0xff]
  %v1412 = vld [vmem:[#allocation5 + $0x48] sm:$0xff]
  %v1413 = vld [vmem:[#allocation5 + $0x50] sm:$0xff]
  %v1414 = vld [vmem:[#allocation5 + $0x58] sm:$0xff]
  %v1415 = vld [vmem:[#allocation5 + $0x60] sm:$0xff]
  %v1416 = vld [vmem:[#allocation5 + $0x68] sm:$0xff]
  %v1417 = vld [vmem:[#allocation5 + $0x70] sm:$0xff]
  %v1418 = vld [vmem:[#allocation5 + $0x78] sm:$0xff]
  %v1419 = vld [vmem:[%s8] sm:$0xf]
  %v1420 = vld [vmem:[%s8 + $0x4] sm:$0xf]
  %v1421 = vld [vmem:[%s8 + $0x8] sm:$0xf]
  %v1422 = vld [vmem:[%s8 + $0xc] sm:$0xf]
  %v1423 = vld [vmem:[%s8 + $0x10] sm:$0xf]
  %v1424 = vld [vmem:[%s8 + $0x14] sm:$0xf]
  %v1425 = vld [vmem:[%s8 + $0x18] sm:$0xf]
  %v1426 = vld [vmem:[%s8 + $0x1c] sm:$0xf]
  %v1427 = vld [vmem:[%s8 + $0x20] sm:$0xf]
  %v1428 = vld [vmem:[%s8 + $0x24] sm:$0xf]
  %v1429 = vld [vmem:[%s8 + $0x28] sm:$0xf]
  %v1430 = vld [vmem:[%s8 + $0x2c] sm:$0xf]
  %v1431 = vld [vmem:[%s8 + $0x30] sm:$0xf]
  %v1432 = vld [vmem:[%s8 + $0x34] sm:$0xf]
  %v1433 = vld [vmem:[%s8 + $0x38] sm:$0xf]
  %v1434 = vld [vmem:[%s8 + $0x3c] sm:$0xf]
  %v1435 = vld [vmem:[%s9] sm:$0xf]
  %v1436 = vld [vmem:[%s9 + $0x4] sm:$0xf]
  %v1437 = vld [vmem:[%s9 + $0x8] sm:$0xf]
  %v1438 = vld [vmem:[%s9 + $0xc] sm:$0xf]
  %v1439 = vld [vmem:[%s9 + $0x10] sm:$0xf]
  %v1440 = vld [vmem:[%s9 + $0x14] sm:$0xf]
  %v1441 = vld [vmem:[%s9 + $0x18] sm:$0xf]
  %v1442 = vld [vmem:[%s9 + $0x1c] sm:$0xf]
  %v1443 = vld [vmem:[%s9 + $0x20] sm:$0xf]
  %v1444 = vld [vmem:[%s9 + $0x24] sm:$0xf]
  %v1445 = vld [vmem:[%s9 + $0x28] sm:$0xf]
  %v1446 = vld [vmem:[%s9 + $0x2c] sm:$0xf]
  %v1447 = vld [vmem:[%s9 + $0x30] sm:$0xf]
  %v1448 = vld [vmem:[%s9 + $0x34] sm:$0xf]
  %v1449 = vld [vmem:[%s9 + $0x38] sm:$0xf]
  %v1450 = vld [vmem:[%s9 + $0x3c] sm:$0xf]
  %v1467 = vunpack.c.l.b16 %v1435
  %v1468 = vunpack.c.l.b16 %v1436
  %v1469 = vunpack.c.l.b16 %v1437
  %v1470 = vunpack.c.l.b16 %v1438
  %v1471 = vunpack.c.l.b16 %v1439
  %v1472 = vunpack.c.l.b16 %v1440
  %v1473 = vunpack.c.l.b16 %v1441
  %v1474 = vunpack.c.l.b16 %v1442
  %v1475 = vunpack.c.l.b16 %v1443
  %v1476 = vunpack.c.l.b16 %v1444
  %v1477 = vunpack.c.l.b16 %v1445
  %v1478 = vunpack.c.l.b16 %v1446
  %v1479 = vunpack.c.l.b16 %v1447
  %v1480 = vunpack.c.l.b16 %v1448
  %v1481 = vunpack.c.l.b16 %v1449
  %v1482 = vunpack.c.l.b16 %v1450
  %v1483 = vpack.c.b16 %v1468, %v1467
  %v1484 = vpack.c.b16 %v1470, %v1469
  %v1485 = vpack.c.b16 %v1472, %v1471
  %v1486 = vpack.c.b16 %v1474, %v1473
  %v1487 = vpack.c.b16 %v1476, %v1475
  %v1488 = vpack.c.b16 %v1478, %v1477
  %v1489 = vpack.c.b16 %v1480, %v1479
  %v1490 = vpack.c.b16 %v1482, %v1481
  %1499 = vmatprep.subr.bf16.mxu0 0
  %1500 = vmatpush1.bf16.msra.mxu0 %v1483
  %1501 = vmatprep.subr.bf16.mxu0 0
  %1502 = vmatpush1.bf16.msra.mxu0 %v1484
  %1503 = vmatprep.subr.bf16.mxu0 0
  %1504 = vmatpush1.bf16.msra.mxu0 %v1485
  %1505 = vmatprep.subr.bf16.mxu0 0
  %1506 = vmatpush1.bf16.msra.mxu0 %v1486
  %1507 = vmatprep.subr.bf16.mxu0 0
  %1508 = vmatpush1.bf16.msra.mxu0 %v1487
  %1509 = vmatprep.subr.bf16.mxu0 0
  %1510 = vmatpush1.bf16.msra.mxu0 %v1488
  %1511 = vmatprep.subr.bf16.mxu0 0
  %1512 = vmatpush1.bf16.msra.mxu0 %v1489
  %1513 = vmatprep.subr.bf16.mxu0 0
  %1514 = vmatpush1.bf16.msra.mxu0 %v1490
  %1515 = vmatprep.subr.bf16.mxu0 0
  %1516 = vmatpush1.bf16.msra.mxu0 0
  %1517 = vmatprep.subr.bf16.mxu0 0
  %1518 = vmatpush1.bf16.msra.mxu0 0
  %1519 = vmatprep.subr.bf16.mxu0 0
  %1520 = vmatpush1.bf16.msra.mxu0 0
  %1521 = vmatprep.subr.bf16.mxu0 0
  %1522 = vmatpush1.bf16.msra.mxu0 0
  %1523 = vmatprep.subr.bf16.mxu0 0
  %1524 = vmatpush1.bf16.msra.mxu0 0
  %1525 = vmatprep.subr.bf16.mxu0 0
  %1526 = vmatpush1.bf16.msra.mxu0 0
  %1527 = vmatprep.subr.bf16.mxu0 0
  %1528 = vmatpush1.bf16.msra.mxu0 0
  %1529 = vmatprep.subr.bf16.mxu0 0
  %1530 = vmatpush1.bf16.msra.mxu0 0
  %1531 = vmatprep.mubr.bf16.mxu0 0
  %1532 = vmatmul.mubr.bf16.gmra.mrb[0].mxu0 %v1395
  %v1533 = vpop.f32.mrb[0].mxu0
  %v1534 = vadd.f32 0.0, %v1533
  %v1535 = vpop.f32.mrb[0].mxu0
  %v1536 = vpop.f32.mrb[0].mxu0
  %v1537 = vadd.f32 0.0, %v1536
  %v1538 = vpop.f32.mrb[0].mxu0
  %1539 = vmatprep.mubr.bf16.mxu0 0
  %1540 = vmatmul.mubr.bf16.gmra.mrb[0].mxu0 %v1396
  %v1541 = vpop.f32.mrb[0].mxu0
  %v1542 = vadd.f32 0.0, %v1541
  %v1543 = vpop.f32.mrb[0].mxu0
  %v1544 = vpop.f32.mrb[0].mxu0
  %v1545 = vadd.f32 0.0, %v1544
  %v1546 = vpop.f32.mrb[0].mxu0
  %1547 = vmatprep.mubr.bf16.mxu0 0
  %1548 = vmatmul.mubr.bf16.gmra.mrb[0].mxu0 %v1397
  %v1549 = vpop.f32.mrb[0].mxu0
  %v1550 = vadd.f32 0.0, %v1549
  %v1551 = vpop.f32.mrb[0].mxu0
  %v1552 = vpop.f32.mrb[0].mxu0
  %v1553 = vadd.f32 0.0, %v1552
  %v1554 = vpop.f32.mrb[0].mxu0
  %1555 = vmatprep.mubr.bf16.mxu0 0
  %1556 = vmatmul.mubr.bf16.gmra.mrb[0].mxu0 %v1398
  %v1557 = vpop.f32.mrb[0].mxu0
  %v1558 = vadd.f32 0.0, %v1557
  %v1559 = vpop.f32.mrb[0].mxu0
  %v1560 = vpop.f32.mrb[0].mxu0
  %v1561 = vadd.f32 0.0, %v1560
  %v1562 = vpop.f32.mrb[0].mxu0
  %1563 = vmatprep.mubr.bf16.mxu0 0
  %1564 = vmatmul.mubr.bf16.gmra.mrb[0].mxu0 %v1399
  %v1565 = vpop.f32.mrb[0].mxu0
  %v1566 = vadd.f32 0.0, %v1565
  %v1567 = vpop.f32.mrb[0].mxu0
  %v1568 = vpop.f32.mrb[0].mxu0
  %v1569 = vadd.f32 0.0, %v1568
  %v1570 = vpop.f32.mrb[0].mxu0
  %1571 = vmatprep.mubr.bf16.mxu0 0
  %1572 = vmatmul.mubr.bf16.gmra.mrb[0].mxu0 %v1400
  %v1573 = vpop.f32.mrb[0].mxu0
  %v1574 = vadd.f32 0.0, %v1573
  %v1575 = vpop.f32.mrb[0].mxu0
  %v1576 = vpop.f32.mrb[0].mxu0
  %v1577 = vadd.f32 0.0, %v1576
  %v1578 = vpop.f32.mrb[0].mxu0
  %1579 = vmatprep.mubr.bf16.mxu0 0
  %1580 = vmatmul.mubr.bf16.gmra.mrb[0].mxu0 %v1401
  %v1581 = vpop.f32.mrb[0].mxu0
  %v1582 = vadd.f32 0.0, %v1581
  %v1583 = vpop.f32.mrb[0].mxu0
  %v1584 = vpop.f32.mrb[0].mxu0
  %v1585 = vadd.f32 0.0, %v1584
  %v1586 = vpop.f32.mrb[0].mxu0
  %1587 = vmatprep.mubr.bf16.mxu0 0
  %1588 = vmatmul.mubr.bf16.gmra.mrb[0].mxu0 %v1402
  %v1589 = vpop.f32.mrb[0].mxu0
  %v1590 = vadd.f32 0.0, %v1589
  %v1591 = vpop.f32.mrb[0].mxu0
  %v1592 = vpop.f32.mrb[0].mxu0
  %v1593 = vadd.f32 0.0, %v1592
  %v1594 = vpop.f32.mrb[0].mxu0
  %1595 = vdwg.mxu0
  %v1612 = vunpack.c.l.b16 %v1419
  %v1613 = vunpack.c.l.b16 %v1420
  %v1614 = vunpack.c.l.b16 %v1421
  %v1615 = vunpack.c.l.b16 %v1422
  %v1616 = vunpack.c.l.b16 %v1423
  %v1617 = vunpack.c.l.b16 %v1424
  %v1618 = vunpack.c.l.b16 %v1425
  %v1619 = vunpack.c.l.b16 %v1426
  %v1620 = vunpack.c.l.b16 %v1427
  %v1621 = vunpack.c.l.b16 %v1428
  %v1622 = vunpack.c.l.b16 %v1429
  %v1623 = vunpack.c.l.b16 %v1430
  %v1624 = vunpack.c.l.b16 %v1431
  %v1625 = vunpack.c.l.b16 %v1432
  %v1626 = vunpack.c.l.b16 %v1433
  %v1627 = vunpack.c.l.b16 %v1434
  %v1628 = vpack.c.b16 %v1613, %v1612
  %v1629 = vpack.c.b16 %v1615, %v1614
  %v1630 = vpack.c.b16 %v1617, %v1616
  %v1631 = vpack.c.b16 %v1619, %v1618
  %v1632 = vpack.c.b16 %v1621, %v1620
  %v1633 = vpack.c.b16 %v1623, %v1622
  %v1634 = vpack.c.b16 %v1625, %v1624
  %v1635 = vpack.c.b16 %v1627, %v1626
  %1644 = vmatprep.subr.bf16.mxu0 0
  %1645 = vmatpush1.bf16.msra.mxu0 %v1628
  %1646 = vmatprep.subr.bf16.mxu0 0
  %1647 = vmatpush1.bf16.msra.mxu0 %v1629
  %1648 = vmatprep.subr.bf16.mxu0 0
  %1649 = vmatpush1.bf16.msra.mxu0 %v1630
  %1650 = vmatprep.subr.bf16.mxu0 0
  %1651 = vmatpush1.bf16.msra.mxu0 %v1631
  %1652 = vmatprep.subr.bf16.mxu0 0
  %1653 = vmatpush1.bf16.msra.mxu0 %v1632
  %1654 = vmatprep.subr.bf16.mxu0 0
  %1655 = vmatpush1.bf16.msra.mxu0 %v1633
  %1656 = vmatprep.subr.bf16.mxu0 0
  %1657 = vmatpush1.bf16.msra.mxu0 %v1634
  %1658 = vmatprep.subr.bf16.mxu0 0
  %1659 = vmatpush1.bf16.msra.mxu0 %v1635
  %1660 = vmatprep.subr.bf16.mxu0 0
  %1661 = vmatpush1.bf16.msra.mxu0 0
  %1662 = vmatprep.subr.bf16.mxu0 0
  %1663 = vmatpush1.bf16.msra.mxu0 0
  %1664 = vmatprep.subr.bf16.mxu0 0
  %1665 = vmatpush1.bf16.msra.mxu0 0
  %1666 = vmatprep.subr.bf16.mxu0 0
  %1667 = vmatpush1.bf16.msra.mxu0 0
  %1668 = vmatprep.subr.bf16.mxu0 0
  %1669 = vmatpush1.bf16.msra.mxu0 0
  %1670 = vmatprep.subr.bf16.mxu0 0
  %1671 = vmatpush1.bf16.msra.mxu0 0
  %1672 = vmatprep.subr.bf16.mxu0 0
  %1673 = vmatpush1.bf16.msra.mxu0 0
  %1674 = vmatprep.subr.bf16.mxu0 0
  %1675 = vmatpush1.bf16.msra.mxu0 0
  %1676 = vmatprep.mubr.bf16.mxu0 0
  %1677 = vmatmul.mubr.bf16.gmra.mrb[0].mxu0 %v1395
  %v1678 = vpop.f32.mrb[0].mxu0
  %v1679 = vadd.f32 %v1534, %v1678
  %v1680 = vpop.f32.mrb[0].mxu0
  %v1681 = vpop.f32.mrb[0].mxu0
  %v1682 = vadd.f32 %v1537, %v1681
  %v1683 = vpop.f32.mrb[0].mxu0
  %1684 = vmatprep.mubr.bf16.mxu0 0
  %1685 = vmatmul.mubr.bf16.gmra.mrb[0].mxu0 %v1396
  %v1686 = vpop.f32.mrb[0].mxu0
  %v1687 = vadd.f32 %v1542, %v1686
  %v1688 = vpop.f32.mrb[0].mxu0
  %v1689 = vpop.f32.mrb[0].mxu0
  %v1690 = vadd.f32 %v1545, %v1689
  %v1691 = vpop.f32.mrb[0].mxu0
  %1692 = vmatprep.mubr.bf16.mxu0 0
  %1693 = vmatmul.mubr.bf16.gmra.mrb[0].mxu0 %v1397
  %v1694 = vpop.f32.mrb[0].mxu0
  %v1695 = vadd.f32 %v1550, %v1694
  %v1696 = vpop.f32.mrb[0].mxu0
  %v1697 = vpop.f32.mrb[0].mxu0
  %v1698 = vadd.f32 %v1553, %v1697
  %v1699 = vpop.f32.mrb[0].mxu0
  %1700 = vmatprep.mubr.bf16.mxu0 0
  %1701 = vmatmul.mubr.bf16.gmra.mrb[0].mxu0 %v1398
  %v1702 = vpop.f32.mrb[0].mxu0
  %v1703 = vadd.f32 %v1558, %v1702
  %v1704 = vpop.f32.mrb[0].mxu0
  %v1705 = vpop.f32.mrb[0].mxu0
  %v1706 = vadd.f32 %v1561, %v1705
  %v1707 = vpop.f32.mrb[0].mxu0
  %1708 = vmatprep.mubr.bf16.mxu0 0
  %1709 = vmatmul.mubr.bf16.gmra.mrb[0].mxu0 %v1399
  %v1710 = vpop.f32.mrb[0].mxu0
  %v1711 = vadd.f32 %v1566, %v1710
  %v1712 = vpop.f32.mrb[0].mxu0
  %v1713 = vpop.f32.mrb[0].mxu0
  %v1714 = vadd.f32 %v1569, %v1713
  %v1715 = vpop.f32.mrb[0].mxu0
  %1716 = vmatprep.mubr.bf16.mxu0 0
  %1717 = vmatmul.mubr.bf16.gmra.mrb[0].mxu0 %v1400
  %v1718 = vpop.f32.mrb[0].mxu0
  %v1719 = vadd.f32 %v1574, %v1718
  %v1720 = vpop.f32.mrb[0].mxu0
  %v1721 = vpop.f32.mrb[0].mxu0
  %v1722 = vadd.f32 %v1577, %v1721
  %v1723 = vpop.f32.mrb[0].mxu0
  %1724 = vmatprep.mubr.bf16.mxu0 0
  %1725 = vmatmul.mubr.bf16.gmra.mrb[0].mxu0 %v1401
  %v1726 = vpop.f32.mrb[0].mxu0
  %v1727 = vadd.f32 %v1582, %v1726
  %v1728 = vpop.f32.mrb[0].mxu0
  %v1729 = vpop.f32.mrb[0].mxu0
  %v1730 = vadd.f32 %v1585, %v1729
  %v1731 = vpop.f32.mrb[0].mxu0
  %1732 = vmatprep.mubr.bf16.mxu0 0
  %1733 = vmatmul.mubr.bf16.gmra.mrb[0].mxu0 %v1402
  %v1734 = vpop.f32.mrb[0].mxu0
  %v1735 = vadd.f32 %v1590, %v1734
  %v1736 = vpop.f32.mrb[0].mxu0
  %v1737 = vpop.f32.mrb[0].mxu0
  %v1738 = vadd.f32 %v1593, %v1737
  %v1739 = vpop.f32.mrb[0].mxu0
  %1740 = vdwg.mxu0
  %v1741 = vadd.f32 %v1403, %v1679
  %v1742 = vadd.f32 %v1404, %v1682
  %v1743 = vadd.f32 %v1405, %v1687
  %v1744 = vadd.f32 %v1406, %v1690
  %v1745 = vadd.f32 %v1407, %v1695
  %v1746 = vadd.f32 %v1408, %v1698
  %v1747 = vadd.f32 %v1409, %v1703
  %v1748 = vadd.f32 %v1410, %v1706
  %v1749 = vadd.f32 %v1411, %v1711
  %v1750 = vadd.f32 %v1412, %v1714
  %v1751 = vadd.f32 %v1413, %v1719
  %v1752 = vadd.f32 %v1414, %v1722
  %v1753 = vadd.f32 %v1415, %v1727
  %v1754 = vadd.f32 %v1416, %v1730
  %v1755 = vadd.f32 %v1417, %v1735
  %v1756 = vadd.f32 %v1418, %v1738
  %1757 = vst [vmem:[#allocation5] sm:$0xff] %v1741
  %1758 = vst [vmem:[#allocation5 + $0x8] sm:$0xff] %v1742
  %1759 = vst [vmem:[#allocation5 + $0x10] sm:$0xff] %v1743
  %1760 = vst [vmem:[#allocation5 + $0x18] sm:$0xff] %v1744
  %1761 = vst [vmem:[#allocation5 + $0x20] sm:$0xff] %v1745
  %1762 = vst [vmem:[#allocation5 + $0x28] sm:$0xff] %v1746
  %1763 = vst [vmem:[#allocation5 + $0x30] sm:$0xff] %v1747
  %1764 = vst [vmem:[#allocation5 + $0x38] sm:$0xff] %v1748
  %1765 = vst [vmem:[#allocation5 + $0x40] sm:$0xff] %v1749
  %1766 = vst [vmem:[#allocation5 + $0x48] sm:$0xff] %v1750
  %1767 = vst [vmem:[#allocation5 + $0x50] sm:$0xff] %v1751
  %1768 = vst [vmem:[#allocation5 + $0x58] sm:$0xff] %v1752
  %1769 = vst [vmem:[#allocation5 + $0x60] sm:$0xff] %v1753
  %1770 = vst [vmem:[#allocation5 + $0x68] sm:$0xff] %v1754
  %1771 = vst [vmem:[#allocation5 + $0x70] sm:$0xff] %v1755
  %1772 = vst [vmem:[#allocation5 + $0x78] sm:$0xff] %v1756
  // Predicated region
  $region58: #{_score.1} parent=0 // pred_check
    %p1773 = pneg %p45
  $region59: #{_score.1} parent=0 // pred_check_branch
    %1775 = sbr.rel (%p1773) target = $region61
  $region60: #{_score.1} parent=0 // pred_region
    %v1776 = vld [vmem:[%s2] sm:$0xff]
    %v1777 = vld [vmem:[%s2 + $0x8] sm:$0xff]
    %v1778 = vld [vmem:[%s2 + $0x10] sm:$0xff]
    %v1779 = vld [vmem:[%s2 + $0x18] sm:$0xff]
    %v1780 = vld [vmem:[%s2 + $0x20] sm:$0xff]
    %v1781 = vld [vmem:[%s2 + $0x28] sm:$0xff]
    %v1782 = vld [vmem:[%s2 + $0x30] sm:$0xff]
    %v1783 = vld [vmem:[%s2 + $0x38] sm:$0xff]
    %v1784 = vld [vmem:[%s2 + $0x40] sm:$0xff]
    %v1785 = vld [vmem:[%s2 + $0x48] sm:$0xff]
    %v1786 = vld [vmem:[%s2 + $0x50] sm:$0xff]
    %v1787 = vld [vmem:[%s2 + $0x58] sm:$0xff]
    %v1788 = vld [vmem:[%s2 + $0x60] sm:$0xff]
    %v1789 = vld [vmem:[%s2 + $0x68] sm:$0xff]
    %v1790 = vld [vmem:[%s2 + $0x70] sm:$0xff]
    %v1791 = vld [vmem:[%s2 + $0x78] sm:$0xff]
    %v1792 = vld [vmem:[%s1] sm:$0xff]
    %v1793 = vld [vmem:[%s1 + $0x8] sm:$0xff]
    %v1794 = vld [vmem:[%s1 + $0x10] sm:$0xff]
    %v1795 = vld [vmem:[%s1 + $0x18] sm:$0xff]
    %v1796 = vld [vmem:[%s1 + $0x20] sm:$0xff]
    %v1797 = vld [vmem:[%s1 + $0x28] sm:$0xff]
    %v1798 = vld [vmem:[%s1 + $0x30] sm:$0xff]
    %v1799 = vld [vmem:[%s1 + $0x38] sm:$0xff]
    %v1800 = vld [vmem:[%s1 + $0x40] sm:$0xff]
    %v1801 = vld [vmem:[%s1 + $0x48] sm:$0xff]
    %v1802 = vld [vmem:[%s1 + $0x50] sm:$0xff]
    %v1803 = vld [vmem:[%s1 + $0x58] sm:$0xff]
    %v1804 = vld [vmem:[%s1 + $0x60] sm:$0xff]
    %v1805 = vld [vmem:[%s1 + $0x68] sm:$0xff]
    %v1806 = vld [vmem:[%s1 + $0x70] sm:$0xff]
    %v1807 = vld [vmem:[%s1 + $0x78] sm:$0xff]
    %v1808 = vsub.s32 %v1776, %v1792
    %v1809 = vsub.s32 %v1777, %v1793
    %v1810 = vsub.s32 %v1778, %v1794
    %v1811 = vsub.s32 %v1779, %v1795
    %v1812 = vsub.s32 %v1780, %v1796
    %v1813 = vsub.s32 %v1781, %v1797
    %v1814 = vsub.s32 %v1782, %v1798
    %v1815 = vsub.s32 %v1783, %v1799
    %v1816 = vsub.s32 %v1784, %v1800
    %v1817 = vsub.s32 %v1785, %v1801
    %v1818 = vsub.s32 %v1786, %v1802
    %v1819 = vsub.s32 %v1787, %v1803
    %v1820 = vsub.s32 %v1788, %v1804
    %v1821 = vsub.s32 %v1789, %v1805
    %v1822 = vsub.s32 %v1790, %v1806
    %v1823 = vsub.s32 %v1791, %v1807
    %v1824 = vcvt.s32.f32 %v1808
    %v1825 = vcvt.s32.f32 %v1809
    %v1826 = vcvt.s32.f32 %v1810
    %v1827 = vcvt.s32.f32 %v1811
    %v1828 = vcvt.s32.f32 %v1812
    %v1829 = vcvt.s32.f32 %v1813
    %v1830 = vcvt.s32.f32 %v1814
    %v1831 = vcvt.s32.f32 %v1815
    %v1832 = vcvt.s32.f32 %v1816
    %v1833 = vcvt.s32.f32 %v1817
    %v1834 = vcvt.s32.f32 %v1818
    %v1835 = vcvt.s32.f32 %v1819
    %v1836 = vcvt.s32.f32 %v1820
    %v1837 = vcvt.s32.f32 %v1821
    %v1838 = vcvt.s32.f32 %v1822
    %v1839 = vcvt.s32.f32 %v1823
    %v1840 = vld [vmem:[#allocation4] sm:$0xff]
    %v1841 = vld [vmem:[#allocation4 + $0x8] sm:$0xff]
    %v1842 = vld [vmem:[#allocation4 + $0x10] sm:$0xff]
    %v1843 = vld [vmem:[#allocation4 + $0x18] sm:$0xff]
    %v1844 = vld [vmem:[#allocation4 + $0x20] sm:$0xff]
    %v1845 = vld [vmem:[#allocation4 + $0x28] sm:$0xff]
    %v1846 = vld [vmem:[#allocation4 + $0x30] sm:$0xff]
    %v1847 = vld [vmem:[#allocation4 + $0x38] sm:$0xff]
    %v1848 = vld [vmem:[#allocation4 + $0x40] sm:$0xff]
    %v1849 = vld [vmem:[#allocation4 + $0x48] sm:$0xff]
    %v1850 = vld [vmem:[#allocation4 + $0x50] sm:$0xff]
    %v1851 = vld [vmem:[#allocation4 + $0x58] sm:$0xff]
    %v1852 = vld [vmem:[#allocation4 + $0x60] sm:$0xff]
    %v1853 = vld [vmem:[#allocation4 + $0x68] sm:$0xff]
    %v1854 = vld [vmem:[#allocation4 + $0x70] sm:$0xff]
    %v1855 = vld [vmem:[#allocation4 + $0x78] sm:$0xff]
    %v1856 = vmax.f32 %v1824, 1.0
    %v1857 = vmax.f32 %v1825, 1.0
    %v1858 = vmax.f32 %v1826, 1.0
    %v1859 = vmax.f32 %v1827, 1.0
    %v1860 = vmax.f32 %v1828, 1.0
    %v1861 = vmax.f32 %v1829, 1.0
    %v1862 = vmax.f32 %v1830, 1.0
    %v1863 = vmax.f32 %v1831, 1.0
    %v1864 = vmax.f32 %v1832, 1.0
    %v1865 = vmax.f32 %v1833, 1.0
    %v1866 = vmax.f32 %v1834, 1.0
    %v1867 = vmax.f32 %v1835, 1.0
    %v1868 = vmax.f32 %v1836, 1.0
    %v1869 = vmax.f32 %v1837, 1.0
    %v1870 = vmax.f32 %v1838, 1.0
    %v1871 = vmax.f32 %v1839, 1.0
    %v1872 = vrcp.pop %v1856
    %v1873 = vmul.f32 1.0, %v1872
    %v1874 = vrcp.pop %v1857
    %v1875 = vmul.f32 1.0, %v1874
    %v1876 = vrcp.pop %v1858
    %v1877 = vmul.f32 1.0, %v1876
    %v1878 = vrcp.pop %v1859
    %v1879 = vmul.f32 1.0, %v1878
    %v1880 = vrcp.pop %v1860
    %v1881 = vmul.f32 1.0, %v1880
    %v1882 = vrcp.pop %v1861
    %v1883 = vmul.f32 1.0, %v1882
    %v1884 = vrcp.pop %v1862
    %v1885 = vmul.f32 1.0, %v1884
    %v1886 = vrcp.pop %v1863
    %v1887 = vmul.f32 1.0, %v1886
    %v1888 = vrcp.pop %v1864
    %v1889 = vmul.f32 1.0, %v1888
    %v1890 = vrcp.pop %v1865
    %v1891 = vmul.f32 1.0, %v1890
    %v1892 = vrcp.pop %v1866
    %v1893 = vmul.f32 1.0, %v1892
    %v1894 = vrcp.pop %v1867
    %v1895 = vmul.f32 1.0, %v1894
    %v1896 = vrcp.pop %v1868
    %v1897 = vmul.f32 1.0, %v1896
    %v1898 = vrcp.pop %v1869
    %v1899 = vmul.f32 1.0, %v1898
    %v1900 = vrcp.pop %v1870
    %v1901 = vmul.f32 1.0, %v1900
    %v1902 = vrcp.pop %v1871
    %v1903 = vmul.f32 1.0, %v1902
    %1905 = vset.pattern.permute.xlu0 0
    %1906 = vperm.xlu0 %1905, %v1873
    %v1907 = vpop.permute.xlu0 %1906
    %1910 = vset.pattern.permute.xlu0 0
    %1911 = vperm.xlu0 %1910, %v1875
    %v1912 = vpop.permute.xlu0 %1911
    %1915 = vset.pattern.permute.xlu0 0
    %1916 = vperm.xlu0 %1915, %v1877
    %v1917 = vpop.permute.xlu0 %1916
    %1920 = vset.pattern.permute.xlu0 0
    %1921 = vperm.xlu0 %1920, %v1879
    %v1922 = vpop.permute.xlu0 %1921
    %1925 = vset.pattern.permute.xlu0 0
    %1926 = vperm.xlu0 %1925, %v1881
    %v1927 = vpop.permute.xlu0 %1926
    %1930 = vset.pattern.permute.xlu0 0
    %1931 = vperm.xlu0 %1930, %v1883
    %v1932 = vpop.permute.xlu0 %1931
    %1935 = vset.pattern.permute.xlu0 0
    %1936 = vperm.xlu0 %1935, %v1885
    %v1937 = vpop.permute.xlu0 %1936
    %1940 = vset.pattern.permute.xlu0 0
    %1941 = vperm.xlu0 %1940, %v1887
    %v1942 = vpop.permute.xlu0 %1941
    %1945 = vset.pattern.permute.xlu0 0
    %1946 = vperm.xlu0 %1945, %v1889
    %v1947 = vpop.permute.xlu0 %1946
    %1950 = vset.pattern.permute.xlu0 0
    %1951 = vperm.xlu0 %1950, %v1891
    %v1952 = vpop.permute.xlu0 %1951
    %1955 = vset.pattern.permute.xlu0 0
    %1956 = vperm.xlu0 %1955, %v1893
    %v1957 = vpop.permute.xlu0 %1956
    %1960 = vset.pattern.permute.xlu0 0
    %1961 = vperm.xlu0 %1960, %v1895
    %v1962 = vpop.permute.xlu0 %1961
    %1965 = vset.pattern.permute.xlu0 0
    %1966 = vperm.xlu0 %1965, %v1897
    %v1967 = vpop.permute.xlu0 %1966
    %1970 = vset.pattern.permute.xlu0 0
    %1971 = vperm.xlu0 %1970, %v1899
    %v1972 = vpop.permute.xlu0 %1971
    %1975 = vset.pattern.permute.xlu0 0
    %1976 = vperm.xlu0 %1975, %v1901
    %v1977 = vpop.permute.xlu0 %1976
    %1980 = vset.pattern.permute.xlu0 0
    %1981 = vperm.xlu0 %1980, %v1903
    %v1982 = vpop.permute.xlu0 %1981
    %v1984 = vmul.f32 %v1840, %v1907
    %v1985 = vmul.f32 %v1841, %v1912
    %v1986 = vmul.f32 %v1842, %v1917
    %v1987 = vmul.f32 %v1843, %v1922
    %v1988 = vmul.f32 %v1844, %v1927
    %v1989 = vmul.f32 %v1845, %v1932
    %v1990 = vmul.f32 %v1846, %v1937
    %v1991 = vmul.f32 %v1847, %v1942
    %v1992 = vmul.f32 %v1848, %v1947
    %v1993 = vmul.f32 %v1849, %v1952
    %v1994 = vmul.f32 %v1850, %v1957
    %v1995 = vmul.f32 %v1851, %v1962
    %v1996 = vmul.f32 %v1852, %v1967
    %v1997 = vmul.f32 %v1853, %v1972
    %v1998 = vmul.f32 %v1854, %v1977
    %v1999 = vmul.f32 %v1855, %v1982
    %v2000 = vld [vmem:[%s5] sm:$0xff]
    %v2001 = vld [vmem:[%s5 + $0x8] sm:$0xff]
    %v2002 = vld [vmem:[%s5 + $0x10] sm:$0xff]
    %v2003 = vld [vmem:[%s5 + $0x18] sm:$0xff]
    %v2004 = vld [vmem:[%s5 + $0x20] sm:$0xff]
    %v2005 = vld [vmem:[%s5 + $0x28] sm:$0xff]
    %v2006 = vld [vmem:[%s5 + $0x30] sm:$0xff]
    %v2007 = vld [vmem:[%s5 + $0x38] sm:$0xff]
    %v2008 = vld [vmem:[%s5 + $0x40] sm:$0xff]
    %v2009 = vld [vmem:[%s5 + $0x48] sm:$0xff]
    %v2010 = vld [vmem:[%s5 + $0x50] sm:$0xff]
    %v2011 = vld [vmem:[%s5 + $0x58] sm:$0xff]
    %v2012 = vld [vmem:[%s5 + $0x60] sm:$0xff]
    %v2013 = vld [vmem:[%s5 + $0x68] sm:$0xff]
    %v2014 = vld [vmem:[%s5 + $0x70] sm:$0xff]
    %v2015 = vld [vmem:[%s5 + $0x78] sm:$0xff]
    %v2016 = vld [vmem:[%s4] sm:$0xff]
    %v2017 = vld [vmem:[%s4 + $0x8] sm:$0xff]
    %v2018 = vld [vmem:[%s4 + $0x10] sm:$0xff]
    %v2019 = vld [vmem:[%s4 + $0x18] sm:$0xff]
    %v2020 = vld [vmem:[%s4 + $0x20] sm:$0xff]
    %v2021 = vld [vmem:[%s4 + $0x28] sm:$0xff]
    %v2022 = vld [vmem:[%s4 + $0x30] sm:$0xff]
    %v2023 = vld [vmem:[%s4 + $0x38] sm:$0xff]
    %v2024 = vld [vmem:[%s4 + $0x40] sm:$0xff]
    %v2025 = vld [vmem:[%s4 + $0x48] sm:$0xff]
    %v2026 = vld [vmem:[%s4 + $0x50] sm:$0xff]
    %v2027 = vld [vmem:[%s4 + $0x58] sm:$0xff]
    %v2028 = vld [vmem:[%s4 + $0x60] sm:$0xff]
    %v2029 = vld [vmem:[%s4 + $0x68] sm:$0xff]
    %v2030 = vld [vmem:[%s4 + $0x70] sm:$0xff]
    %v2031 = vld [vmem:[%s4 + $0x78] sm:$0xff]
    %v2032 = vsub.s32 %v2000, %v2016
    %v2033 = vsub.s32 %v2001, %v2017
    %v2034 = vsub.s32 %v2002, %v2018
    %v2035 = vsub.s32 %v2003, %v2019
    %v2036 = vsub.s32 %v2004, %v2020
    %v2037 = vsub.s32 %v2005, %v2021
    %v2038 = vsub.s32 %v2006, %v2022
    %v2039 = vsub.s32 %v2007, %v2023
    %v2040 = vsub.s32 %v2008, %v2024
    %v2041 = vsub.s32 %v2009, %v2025
    %v2042 = vsub.s32 %v2010, %v2026
    %v2043 = vsub.s32 %v2011, %v2027
    %v2044 = vsub.s32 %v2012, %v2028
    %v2045 = vsub.s32 %v2013, %v2029
    %v2046 = vsub.s32 %v2014, %v2030
    %v2047 = vsub.s32 %v2015, %v2031
    %v2048 = vcvt.s32.f32 %v2032
    %v2049 = vcvt.s32.f32 %v2033
    %v2050 = vcvt.s32.f32 %v2034
    %v2051 = vcvt.s32.f32 %v2035
    %v2052 = vcvt.s32.f32 %v2036
    %v2053 = vcvt.s32.f32 %v2037
    %v2054 = vcvt.s32.f32 %v2038
    %v2055 = vcvt.s32.f32 %v2039
    %v2056 = vcvt.s32.f32 %v2040
    %v2057 = vcvt.s32.f32 %v2041
    %v2058 = vcvt.s32.f32 %v2042
    %v2059 = vcvt.s32.f32 %v2043
    %v2060 = vcvt.s32.f32 %v2044
    %v2061 = vcvt.s32.f32 %v2045
    %v2062 = vcvt.s32.f32 %v2046
    %v2063 = vcvt.s32.f32 %v2047
    %v2064 = vld [vmem:[#allocation5] sm:$0xff]
    %v2065 = vld [vmem:[#allocation5 + $0x8] sm:$0xff]
    %v2066 = vld [vmem:[#allocation5 + $0x10] sm:$0xff]
    %v2067 = vld [vmem:[#allocation5 + $0x18] sm:$0xff]
    %v2068 = vld [vmem:[#allocation5 + $0x20] sm:$0xff]
    %v2069 = vld [vmem:[#allocation5 + $0x28] sm:$0xff]
    %v2070 = vld [vmem:[#allocation5 + $0x30] sm:$0xff]
    %v2071 = vld [vmem:[#allocation5 + $0x38] sm:$0xff]
    %v2072 = vld [vmem:[#allocation5 + $0x40] sm:$0xff]
    %v2073 = vld [vmem:[#allocation5 + $0x48] sm:$0xff]
    %v2074 = vld [vmem:[#allocation5 + $0x50] sm:$0xff]
    %v2075 = vld [vmem:[#allocation5 + $0x58] sm:$0xff]
    %v2076 = vld [vmem:[#allocation5 + $0x60] sm:$0xff]
    %v2077 = vld [vmem:[#allocation5 + $0x68] sm:$0xff]
    %v2078 = vld [vmem:[#allocation5 + $0x70] sm:$0xff]
    %v2079 = vld [vmem:[#allocation5 + $0x78] sm:$0xff]
    %v2080 = vmax.f32 %v2048, 1.0
    %v2081 = vmax.f32 %v2049, 1.0
    %v2082 = vmax.f32 %v2050, 1.0
    %v2083 = vmax.f32 %v2051, 1.0
    %v2084 = vmax.f32 %v2052, 1.0
    %v2085 = vmax.f32 %v2053, 1.0
    %v2086 = vmax.f32 %v2054, 1.0
    %v2087 = vmax.f32 %v2055, 1.0
    %v2088 = vmax.f32 %v2056, 1.0
    %v2089 = vmax.f32 %v2057, 1.0
    %v2090 = vmax.f32 %v2058, 1.0
    %v2091 = vmax.f32 %v2059, 1.0
    %v2092 = vmax.f32 %v2060, 1.0
    %v2093 = vmax.f32 %v2061, 1.0
    %v2094 = vmax.f32 %v2062, 1.0
    %v2095 = vmax.f32 %v2063, 1.0
    %v2096 = vrcp.pop %v2080
    %v2097 = vmul.f32 1.0, %v2096
    %v2098 = vrcp.pop %v2081
    %v2099 = vmul.f32 1.0, %v2098
    %v2100 = vrcp.pop %v2082
    %v2101 = vmul.f32 1.0, %v2100
    %v2102 = vrcp.pop %v2083
    %v2103 = vmul.f32 1.0, %v2102
    %v2104 = vrcp.pop %v2084
    %v2105 = vmul.f32 1.0, %v2104
    %v2106 = vrcp.pop %v2085
    %v2107 = vmul.f32 1.0, %v2106
    %v2108 = vrcp.pop %v2086
    %v2109 = vmul.f32 1.0, %v2108
    %v2110 = vrcp.pop %v2087
    %v2111 = vmul.f32 1.0, %v2110
    %v2112 = vrcp.pop %v2088
    %v2113 = vmul.f32 1.0, %v2112
    %v2114 = vrcp.pop %v2089
    %v2115 = vmul.f32 1.0, %v2114
    %v2116 = vrcp.pop %v2090
    %v2117 = vmul.f32 1.0, %v2116
    %v2118 = vrcp.pop %v2091
    %v2119 = vmul.f32 1.0, %v2118
    %v2120 = vrcp.pop %v2092
    %v2121 = vmul.f32 1.0, %v2120
    %v2122 = vrcp.pop %v2093
    %v2123 = vmul.f32 1.0, %v2122
    %v2124 = vrcp.pop %v2094
    %v2125 = vmul.f32 1.0, %v2124
    %v2126 = vrcp.pop %v2095
    %v2127 = vmul.f32 1.0, %v2126
    %2129 = vset.pattern.permute.xlu0 0
    %2130 = vperm.xlu0 %2129, %v2097
    %v2131 = vpop.permute.xlu0 %2130
    %2134 = vset.pattern.permute.xlu0 0
    %2135 = vperm.xlu0 %2134, %v2099
    %v2136 = vpop.permute.xlu0 %2135
    %2139 = vset.pattern.permute.xlu0 0
    %2140 = vperm.xlu0 %2139, %v2101
    %v2141 = vpop.permute.xlu0 %2140
    %2144 = vset.pattern.permute.xlu0 0
    %2145 = vperm.xlu0 %2144, %v2103
    %v2146 = vpop.permute.xlu0 %2145
    %2149 = vset.pattern.permute.xlu0 0
    %2150 = vperm.xlu0 %2149, %v2105
    %v2151 = vpop.permute.xlu0 %2150
    %2154 = vset.pattern.permute.xlu0 0
    %2155 = vperm.xlu0 %2154, %v2107
    %v2156 = vpop.permute.xlu0 %2155
    %2159 = vset.pattern.permute.xlu0 0
    %2160 = vperm.xlu0 %2159, %v2109
    %v2161 = vpop.permute.xlu0 %2160
    %2164 = vset.pattern.permute.xlu0 0
    %2165 = vperm.xlu0 %2164, %v2111
    %v2166 = vpop.permute.xlu0 %2165
    %2169 = vset.pattern.permute.xlu0 0
    %2170 = vperm.xlu0 %2169, %v2113
    %v2171 = vpop.permute.xlu0 %2170
    %2174 = vset.pattern.permute.xlu0 0
    %2175 = vperm.xlu0 %2174, %v2115
    %v2176 = vpop.permute.xlu0 %2175
    %2179 = vset.pattern.permute.xlu0 0
    %2180 = vperm.xlu0 %2179, %v2117
    %v2181 = vpop.permute.xlu0 %2180
    %2184 = vset.pattern.permute.xlu0 0
    %2185 = vperm.xlu0 %2184, %v2119
    %v2186 = vpop.permute.xlu0 %2185
    %2189 = vset.pattern.permute.xlu0 0
    %2190 = vperm.xlu0 %2189, %v2121
    %v2191 = vpop.permute.xlu0 %2190
    %2194 = vset.pattern.permute.xlu0 0
    %2195 = vperm.xlu0 %2194, %v2123
    %v2196 = vpop.permute.xlu0 %2195
    %2199 = vset.pattern.permute.xlu0 0
    %2200 = vperm.xlu0 %2199, %v2125
    %v2201 = vpop.permute.xlu0 %2200
    %2204 = vset.pattern.permute.xlu0 0
    %2205 = vperm.xlu0 %2204, %v2127
    %v2206 = vpop.permute.xlu0 %2205
    %v2208 = vmul.f32 %v2064, %v2131
    %v2209 = vmul.f32 %v2065, %v2136
    %v2210 = vmul.f32 %v2066, %v2141
    %v2211 = vmul.f32 %v2067, %v2146
    %v2212 = vmul.f32 %v2068, %v2151
    %v2213 = vmul.f32 %v2069, %v2156
    %v2214 = vmul.f32 %v2070, %v2161
    %v2215 = vmul.f32 %v2071, %v2166
    %v2216 = vmul.f32 %v2072, %v2171
    %v2217 = vmul.f32 %v2073, %v2176
    %v2218 = vmul.f32 %v2074, %v2181
    %v2219 = vmul.f32 %v2075, %v2186
    %v2220 = vmul.f32 %v2076, %v2191
    %v2221 = vmul.f32 %v2077, %v2196
    %v2222 = vmul.f32 %v2078, %v2201
    %v2223 = vmul.f32 %v2079, %v2206
    %v2224 = vld [vmem:[%s10] sm:$0xff]
    %v2225 = vld [vmem:[%s10 + $0x8] sm:$0xff]
    %v2226 = vld [vmem:[%s10 + $0x10] sm:$0xff]
    %v2227 = vld [vmem:[%s10 + $0x18] sm:$0xff]
    %v2228 = vld [vmem:[%s10 + $0x20] sm:$0xff]
    %v2229 = vld [vmem:[%s10 + $0x28] sm:$0xff]
    %v2230 = vld [vmem:[%s10 + $0x30] sm:$0xff]
    %v2231 = vld [vmem:[%s10 + $0x38] sm:$0xff]
    %v2232 = vld [vmem:[%s10 + $0x40] sm:$0xff]
    %v2233 = vld [vmem:[%s10 + $0x48] sm:$0xff]
    %v2234 = vld [vmem:[%s10 + $0x50] sm:$0xff]
    %v2235 = vld [vmem:[%s10 + $0x58] sm:$0xff]
    %v2236 = vld [vmem:[%s10 + $0x60] sm:$0xff]
    %v2237 = vld [vmem:[%s10 + $0x68] sm:$0xff]
    %v2238 = vld [vmem:[%s10 + $0x70] sm:$0xff]
    %v2239 = vld [vmem:[%s10 + $0x78] sm:$0xff]
    %v2240 = vpack.c.bf16 %v2225, %v2224
    %v2241 = vpack.c.bf16 %v2227, %v2226
    %v2242 = vpack.c.bf16 %v2229, %v2228
    %v2243 = vpack.c.bf16 %v2231, %v2230
    %v2244 = vpack.c.bf16 %v2233, %v2232
    %v2245 = vpack.c.bf16 %v2235, %v2234
    %v2246 = vpack.c.bf16 %v2237, %v2236
    %v2247 = vpack.c.bf16 %v2239, %v2238
    %v2248 = vpack.c.bf16 %v1985, %v1984
    %v2249 = vpack.c.bf16 %v1987, %v1986
    %v2250 = vpack.c.bf16 %v1989, %v1988
    %v2251 = vpack.c.bf16 %v1991, %v1990
    %v2252 = vpack.c.bf16 %v1993, %v1992
    %v2253 = vpack.c.bf16 %v1995, %v1994
    %v2254 = vpack.c.bf16 %v1997, %v1996
    %v2255 = vpack.c.bf16 %v1999, %v1998
    %v2256 = vunpack.c.l.bf16 %v2248
    %v2257 = vunpack.c.h.bf16 %v2248
    %v2258 = vunpack.c.l.bf16 %v2249
    %v2259 = vunpack.c.h.bf16 %v2249
    %v2260 = vunpack.c.l.bf16 %v2250
    %v2261 = vunpack.c.h.bf16 %v2250
    %v2262 = vunpack.c.l.bf16 %v2251
    %v2263 = vunpack.c.h.bf16 %v2251
    %v2264 = vunpack.c.l.bf16 %v2252
    %v2265 = vunpack.c.h.bf16 %v2252
    %v2266 = vunpack.c.l.bf16 %v2253
    %v2267 = vunpack.c.h.bf16 %v2253
    %v2268 = vunpack.c.l.bf16 %v2254
    %v2269 = vunpack.c.h.bf16 %v2254
    %v2270 = vunpack.c.l.bf16 %v2255
    %v2271 = vunpack.c.h.bf16 %v2255
    %v2272 = vsub.f32 %v1984, %v2256
    %v2273 = vsub.f32 %v1985, %v2257
    %v2274 = vsub.f32 %v1986, %v2258
    %v2275 = vsub.f32 %v1987, %v2259
    %v2276 = vsub.f32 %v1988, %v2260
    %v2277 = vsub.f32 %v1989, %v2261
    %v2278 = vsub.f32 %v1990, %v2262
    %v2279 = vsub.f32 %v1991, %v2263
    %v2280 = vsub.f32 %v1992, %v2264
    %v2281 = vsub.f32 %v1993, %v2265
    %v2282 = vsub.f32 %v1994, %v2266
    %v2283 = vsub.f32 %v1995, %v2267
    %v2284 = vsub.f32 %v1996, %v2268
    %v2285 = vsub.f32 %v1997, %v2269
    %v2286 = vsub.f32 %v1998, %v2270
    %v2287 = vsub.f32 %v1999, %v2271
    %v2288 = vpack.c.bf16 %v2273, %v2272
    %v2289 = vpack.c.bf16 %v2275, %v2274
    %v2290 = vpack.c.bf16 %v2277, %v2276
    %v2291 = vpack.c.bf16 %v2279, %v2278
    %v2292 = vpack.c.bf16 %v2281, %v2280
    %v2293 = vpack.c.bf16 %v2283, %v2282
    %v2294 = vpack.c.bf16 %v2285, %v2284
    %v2295 = vpack.c.bf16 %v2287, %v2286
    %2296 = vmatprep.subr.bf16.mxu0 0
    %2297 = vmatpush1.bf16.msra.mxu0 %v2288
    %2298 = vmatprep.subr.bf16.mxu0 0
    %2299 = vmatpush1.bf16.msra.mxu0 %v2289
    %2300 = vmatprep.subr.bf16.mxu0 0
    %2301 = vmatpush1.bf16.msra.mxu0 %v2290
    %2302 = vmatprep.subr.bf16.mxu0 0
    %2303 = vmatpush1.bf16.msra.mxu0 %v2291
    %2304 = vmatprep.subr.bf16.mxu0 0
    %2305 = vmatpush1.bf16.msra.mxu0 %v2292
    %2306 = vmatprep.subr.bf16.mxu0 0
    %2307 = vmatpush1.bf16.msra.mxu0 %v2293
    %2308 = vmatprep.subr.bf16.mxu0 0
    %2309 = vmatpush1.bf16.msra.mxu0 %v2294
    %2310 = vmatprep.subr.bf16.mxu0 0
    %2311 = vmatpush1.bf16.msra.mxu0 %v2295
    %2312 = vmatprep.subr.bf16.mxu0 0
    %2313 = vmatpush1.bf16.msra.mxu0 0
    %2314 = vmatprep.subr.bf16.mxu0 0
    %2315 = vmatpush1.bf16.msra.mxu0 0
    %2316 = vmatprep.subr.bf16.mxu0 0
    %2317 = vmatpush1.bf16.msra.mxu0 0
    %2318 = vmatprep.subr.bf16.mxu0 0
    %2319 = vmatpush1.bf16.msra.mxu0 0
    %2320 = vmatprep.subr.bf16.mxu0 0
    %2321 = vmatpush1.bf16.msra.mxu0 0
    %2322 = vmatprep.subr.bf16.mxu0 0
    %2323 = vmatpush1.bf16.msra.mxu0 0
    %2324 = vmatprep.subr.bf16.mxu0 0
    %2325 = vmatpush1.bf16.msra.mxu0 0
    %2326 = vmatprep.subr.bf16.mxu0 0
    %2327 = vmatpush1.bf16.msra.mxu0 0
    %2328 = vmatprep.mubr.bf16.mxu0 0
    %2329 = vmatmul.mubr.bf16.gmra.mrb[0].mxu0 %v2240
    %v2330 = vpop.f32.mrb[0].mxu0
    %v2331 = vadd.f32 0.0, %v2330
    %v2332 = vpop.f32.mrb[0].mxu0
    %v2333 = vpop.f32.mrb[0].mxu0
    %v2334 = vadd.f32 0.0, %v2333
    %v2335 = vpop.f32.mrb[0].mxu0
    %2336 = vmatprep.mubr.bf16.mxu0 0
    %2337 = vmatmul.mubr.bf16.gmra.mrb[0].mxu0 %v2241
    %v2338 = vpop.f32.mrb[0].mxu0
    %v2339 = vadd.f32 0.0, %v2338
    %v2340 = vpop.f32.mrb[0].mxu0
    %v2341 = vpop.f32.mrb[0].mxu0
    %v2342 = vadd.f32 0.0, %v2341
    %v2343 = vpop.f32.mrb[0].mxu0
    %2344 = vmatprep.mubr.bf16.mxu0 0
    %2345 = vmatmul.mubr.bf16.gmra.mrb[0].mxu0 %v2242
    %v2346 = vpop.f32.mrb[0].mxu0
    %v2347 = vadd.f32 0.0, %v2346
    %v2348 = vpop.f32.mrb[0].mxu0
    %v2349 = vpop.f32.mrb[0].mxu0
    %v2350 = vadd.f32 0.0, %v2349
    %v2351 = vpop.f32.mrb[0].mxu0
    %2352 = vmatprep.mubr.bf16.mxu0 0
    %2353 = vmatmul.mubr.bf16.gmra.mrb[0].mxu0 %v2243
    %v2354 = vpop.f32.mrb[0].mxu0
    %v2355 = vadd.f32 0.0, %v2354
    %v2356 = vpop.f32.mrb[0].mxu0
    %v2357 = vpop.f32.mrb[0].mxu0
    %v2358 = vadd.f32 0.0, %v2357
    %v2359 = vpop.f32.mrb[0].mxu0
    %2360 = vmatprep.mubr.bf16.mxu0 0
    %2361 = vmatmul.mubr.bf16.gmra.mrb[0].mxu0 %v2244
    %v2362 = vpop.f32.mrb[0].mxu0
    %v2363 = vadd.f32 0.0, %v2362
    %v2364 = vpop.f32.mrb[0].mxu0
    %v2365 = vpop.f32.mrb[0].mxu0
    %v2366 = vadd.f32 0.0, %v2365
    %v2367 = vpop.f32.mrb[0].mxu0
    %2368 = vmatprep.mubr.bf16.mxu0 0
    %2369 = vmatmul.mubr.bf16.gmra.mrb[0].mxu0 %v2245
    %v2370 = vpop.f32.mrb[0].mxu0
    %v2371 = vadd.f32 0.0, %v2370
    %v2372 = vpop.f32.mrb[0].mxu0
    %v2373 = vpop.f32.mrb[0].mxu0
    %v2374 = vadd.f32 0.0, %v2373
    %v2375 = vpop.f32.mrb[0].mxu0
    %2376 = vmatprep.mubr.bf16.mxu0 0
    %2377 = vmatmul.mubr.bf16.gmra.mrb[0].mxu0 %v2246
    %v2378 = vpop.f32.mrb[0].mxu0
    %v2379 = vadd.f32 0.0, %v2378
    %v2380 = vpop.f32.mrb[0].mxu0
    %v2381 = vpop.f32.mrb[0].mxu0
    %v2382 = vadd.f32 0.0, %v2381
    %v2383 = vpop.f32.mrb[0].mxu0
    %2384 = vmatprep.mubr.bf16.mxu0 0
    %2385 = vmatmul.mubr.bf16.gmra.mrb[0].mxu0 %v2247
    %v2386 = vpop.f32.mrb[0].mxu0
    %v2387 = vadd.f32 0.0, %v2386
    %v2388 = vpop.f32.mrb[0].mxu0
    %v2389 = vpop.f32.mrb[0].mxu0
    %v2390 = vadd.f32 0.0, %v2389
    %v2391 = vpop.f32.mrb[0].mxu0
    %2392 = vdwg.mxu0
    %2393 = vmatprep.subr.bf16.mxu0 0
    %2394 = vmatpush1.bf16.msra.mxu0 %v2248
    %2395 = vmatprep.subr.bf16.mxu0 0
    %2396 = vmatpush1.bf16.msra.mxu0 %v2249
    %2397 = vmatprep.subr.bf16.mxu0 0
    %2398 = vmatpush1.bf16.msra.mxu0 %v2250
    %2399 = vmatprep.subr.bf16.mxu0 0
    %2400 = vmatpush1.bf16.msra.mxu0 %v2251
    %2401 = vmatprep.subr.bf16.mxu0 0
    %2402 = vmatpush1.bf16.msra.mxu0 %v2252
    %2403 = vmatprep.subr.bf16.mxu0 0
    %2404 = vmatpush1.bf16.msra.mxu0 %v2253
    %2405 = vmatprep.subr.bf16.mxu0 0
    %2406 = vmatpush1.bf16.msra.mxu0 %v2254
    %2407 = vmatprep.subr.bf16.mxu0 0
    %2408 = vmatpush1.bf16.msra.mxu0 %v2255
    %2409 = vmatprep.subr.bf16.mxu0 0
    %2410 = vmatpush1.bf16.msra.mxu0 0
    %2411 = vmatprep.subr.bf16.mxu0 0
    %2412 = vmatpush1.bf16.msra.mxu0 0
    %2413 = vmatprep.subr.bf16.mxu0 0
    %2414 = vmatpush1.bf16.msra.mxu0 0
    %2415 = vmatprep.subr.bf16.mxu0 0
    %2416 = vmatpush1.bf16.msra.mxu0 0
    %2417 = vmatprep.subr.bf16.mxu0 0
    %2418 = vmatpush1.bf16.msra.mxu0 0
    %2419 = vmatprep.subr.bf16.mxu0 0
    %2420 = vmatpush1.bf16.msra.mxu0 0
    %2421 = vmatprep.subr.bf16.mxu0 0
    %2422 = vmatpush1.bf16.msra.mxu0 0
    %2423 = vmatprep.subr.bf16.mxu0 0
    %2424 = vmatpush1.bf16.msra.mxu0 0
    %2425 = vmatprep.mubr.bf16.mxu0 0
    %2426 = vmatmul.mubr.bf16.gmra.mrb[0].mxu0 %v2240
    %v2427 = vpop.f32.mrb[0].mxu0
    %v2428 = vadd.f32 %v2331, %v2427
    %v2429 = vpop.f32.mrb[0].mxu0
    %v2430 = vpop.f32.mrb[0].mxu0
    %v2431 = vadd.f32 %v2334, %v2430
    %v2432 = vpop.f32.mrb[0].mxu0
    %2433 = vmatprep.mubr.bf16.mxu0 0
    %2434 = vmatmul.mubr.bf16.gmra.mrb[0].mxu0 %v2241
    %v2435 = vpop.f32.mrb[0].mxu0
    %v2436 = vadd.f32 %v2339, %v2435
    %v2437 = vpop.f32.mrb[0].mxu0
    %v2438 = vpop.f32.mrb[0].mxu0
    %v2439 = vadd.f32 %v2342, %v2438
    %v2440 = vpop.f32.mrb[0].mxu0
    %2441 = vmatprep.mubr.bf16.mxu0 0
    %2442 = vmatmul.mubr.bf16.gmra.mrb[0].mxu0 %v2242
    %v2443 = vpop.f32.mrb[0].mxu0
    %v2444 = vadd.f32 %v2347, %v2443
    %v2445 = vpop.f32.mrb[0].mxu0
    %v2446 = vpop.f32.mrb[0].mxu0
    %v2447 = vadd.f32 %v2350, %v2446
    %v2448 = vpop.f32.mrb[0].mxu0
    %2449 = vmatprep.mubr.bf16.mxu0 0
    %2450 = vmatmul.mubr.bf16.gmra.mrb[0].mxu0 %v2243
    %v2451 = vpop.f32.mrb[0].mxu0
    %v2452 = vadd.f32 %v2355, %v2451
    %v2453 = vpop.f32.mrb[0].mxu0
    %v2454 = vpop.f32.mrb[0].mxu0
    %v2455 = vadd.f32 %v2358, %v2454
    %v2456 = vpop.f32.mrb[0].mxu0
    %2457 = vmatprep.mubr.bf16.mxu0 0
    %2458 = vmatmul.mubr.bf16.gmra.mrb[0].mxu0 %v2244
    %v2459 = vpop.f32.mrb[0].mxu0
    %v2460 = vadd.f32 %v2363, %v2459
    %v2461 = vpop.f32.mrb[0].mxu0
    %v2462 = vpop.f32.mrb[0].mxu0
    %v2463 = vadd.f32 %v2366, %v2462
    %v2464 = vpop.f32.mrb[0].mxu0
    %2465 = vmatprep.mubr.bf16.mxu0 0
    %2466 = vmatmul.mubr.bf16.gmra.mrb[0].mxu0 %v2245
    %v2467 = vpop.f32.mrb[0].mxu0
    %v2468 = vadd.f32 %v2371, %v2467
    %v2469 = vpop.f32.mrb[0].mxu0
    %v2470 = vpop.f32.mrb[0].mxu0
    %v2471 = vadd.f32 %v2374, %v2470
    %v2472 = vpop.f32.mrb[0].mxu0
    %2473 = vmatprep.mubr.bf16.mxu0 0
    %2474 = vmatmul.mubr.bf16.gmra.mrb[0].mxu0 %v2246
    %v2475 = vpop.f32.mrb[0].mxu0
    %v2476 = vadd.f32 %v2379, %v2475
    %v2477 = vpop.f32.mrb[0].mxu0
    %v2478 = vpop.f32.mrb[0].mxu0
    %v2479 = vadd.f32 %v2382, %v2478
    %v2480 = vpop.f32.mrb[0].mxu0
    %2481 = vmatprep.mubr.bf16.mxu0 0
    %2482 = vmatmul.mubr.bf16.gmra.mrb[0].mxu0 %v2247
    %v2483 = vpop.f32.mrb[0].mxu0
    %v2484 = vadd.f32 %v2387, %v2483
    %v2485 = vpop.f32.mrb[0].mxu0
    %v2486 = vpop.f32.mrb[0].mxu0
    %v2487 = vadd.f32 %v2390, %v2486
    %v2488 = vpop.f32.mrb[0].mxu0
    %2489 = vdwg.mxu0
    %v2490 = vmul.f32 %v2208, %v2428
    %v2491 = vmul.f32 %v2209, %v2431
    %v2492 = vmul.f32 %v2210, %v2436
    %v2493 = vmul.f32 %v2211, %v2439
    %v2494 = vmul.f32 %v2212, %v2444
    %v2495 = vmul.f32 %v2213, %v2447
    %v2496 = vmul.f32 %v2214, %v2452
    %v2497 = vmul.f32 %v2215, %v2455
    %v2498 = vmul.f32 %v2216, %v2460
    %v2499 = vmul.f32 %v2217, %v2463
    %v2500 = vmul.f32 %v2218, %v2468
    %v2501 = vmul.f32 %v2219, %v2471
    %v2502 = vmul.f32 %v2220, %v2476
    %v2503 = vmul.f32 %v2221, %v2479
    %v2504 = vmul.f32 %v2222, %v2484
    %v2505 = vmul.f32 %v2223, %v2487
    %2506 = vadd.xlane.f32.xlu0 %v2490
    %v2507 = vpop.xlane.xlu0 %2506
    %2508 = vadd.xlane.f32.xlu0 %v2491
    %v2509 = vpop.xlane.xlu0 %2508
    %2510 = vadd.xlane.f32.xlu0 %v2492
    %v2511 = vpop.xlane.xlu0 %2510
    %2512 = vadd.xlane.f32.xlu0 %v2493
    %v2513 = vpop.xlane.xlu0 %2512
    %2514 = vadd.xlane.f32.xlu0 %v2494
    %v2515 = vpop.xlane.xlu0 %2514
    %2516 = vadd.xlane.f32.xlu0 %v2495
    %v2517 = vpop.xlane.xlu0 %2516
    %2518 = vadd.xlane.f32.xlu0 %v2496
    %v2519 = vpop.xlane.xlu0 %2518
    %2520 = vadd.xlane.f32.xlu0 %v2497
    %v2521 = vpop.xlane.xlu0 %2520
    %2522 = vadd.xlane.f32.xlu0 %v2498
    %v2523 = vpop.xlane.xlu0 %2522
    %2524 = vadd.xlane.f32.xlu0 %v2499
    %v2525 = vpop.xlane.xlu0 %2524
    %2526 = vadd.xlane.f32.xlu0 %v2500
    %v2527 = vpop.xlane.xlu0 %2526
    %2528 = vadd.xlane.f32.xlu0 %v2501
    %v2529 = vpop.xlane.xlu0 %2528
    %2530 = vadd.xlane.f32.xlu0 %v2502
    %v2531 = vpop.xlane.xlu0 %2530
    %2532 = vadd.xlane.f32.xlu0 %v2503
    %v2533 = vpop.xlane.xlu0 %2532
    %2534 = vadd.xlane.f32.xlu0 %v2504
    %v2535 = vpop.xlane.xlu0 %2534
    %2536 = vadd.xlane.f32.xlu0 %v2505
    %v2537 = vpop.xlane.xlu0 %2536
    %v2538 = vld [vmem:[%s12] sm:$0xff]
    %v2539 = vld [vmem:[%s12 + $0x8] sm:$0xff]
    %v2540 = vld [vmem:[%s12 + $0x10] sm:$0xff]
    %v2541 = vld [vmem:[%s12 + $0x18] sm:$0xff]
    %v2542 = vld [vmem:[%s12 + $0x20] sm:$0xff]
    %v2543 = vld [vmem:[%s12 + $0x28] sm:$0xff]
    %v2544 = vld [vmem:[%s12 + $0x30] sm:$0xff]
    %v2545 = vld [vmem:[%s12 + $0x38] sm:$0xff]
    %v2546 = vld [vmem:[%s12 + $0x40] sm:$0xff]
    %v2547 = vld [vmem:[%s12 + $0x48] sm:$0xff]
    %v2548 = vld [vmem:[%s12 + $0x50] sm:$0xff]
    %v2549 = vld [vmem:[%s12 + $0x58] sm:$0xff]
    %v2550 = vld [vmem:[%s12 + $0x60] sm:$0xff]
    %v2551 = vld [vmem:[%s12 + $0x68] sm:$0xff]
    %v2552 = vld [vmem:[%s12 + $0x70] sm:$0xff]
    %v2553 = vld [vmem:[%s12 + $0x78] sm:$0xff]
    %v2554 = vmul.f32 %v2538, %v2507
    %v2555 = vmul.f32 %v2539, %v2509
    %v2556 = vmul.f32 %v2540, %v2511
    %v2557 = vmul.f32 %v2541, %v2513
    %v2558 = vmul.f32 %v2542, %v2515
    %v2559 = vmul.f32 %v2543, %v2517
    %v2560 = vmul.f32 %v2544, %v2519
    %v2561 = vmul.f32 %v2545, %v2521
    %v2562 = vmul.f32 %v2546, %v2523
    %v2563 = vmul.f32 %v2547, %v2525
    %v2564 = vmul.f32 %v2548, %v2527
    %v2565 = vmul.f32 %v2549, %v2529
    %v2566 = vmul.f32 %v2550, %v2531
    %v2567 = vmul.f32 %v2551, %v2533
    %v2568 = vmul.f32 %v2552, %v2535
    %v2569 = vmul.f32 %v2553, %v2537
    %v2570 = vld [vmem:[%s11] sm:$0xff]
    %v2571 = vld [vmem:[%s11 + $0x8] sm:$0xff]
    %v2572 = vld [vmem:[%s11 + $0x10] sm:$0xff]
    %v2573 = vld [vmem:[%s11 + $0x18] sm:$0xff]
    %v2574 = vld [vmem:[%s11 + $0x20] sm:$0xff]
    %v2575 = vld [vmem:[%s11 + $0x28] sm:$0xff]
    %v2576 = vld [vmem:[%s11 + $0x30] sm:$0xff]
    %v2577 = vld [vmem:[%s11 + $0x38] sm:$0xff]
    %v2578 = vld [vmem:[%s11 + $0x40] sm:$0xff]
    %v2579 = vld [vmem:[%s11 + $0x48] sm:$0xff]
    %v2580 = vld [vmem:[%s11 + $0x50] sm:$0xff]
    %v2581 = vld [vmem:[%s11 + $0x58] sm:$0xff]
    %v2582 = vld [vmem:[%s11 + $0x60] sm:$0xff]
    %v2583 = vld [vmem:[%s11 + $0x68] sm:$0xff]
    %v2584 = vld [vmem:[%s11 + $0x70] sm:$0xff]
    %v2585 = vld [vmem:[%s11 + $0x78] sm:$0xff]
    %v2586 = vpack.c.bf16 %v2571, %v2570
    %v2587 = vpack.c.bf16 %v2573, %v2572
    %v2588 = vpack.c.bf16 %v2575, %v2574
    %v2589 = vpack.c.bf16 %v2577, %v2576
    %v2590 = vpack.c.bf16 %v2579, %v2578
    %v2591 = vpack.c.bf16 %v2581, %v2580
    %v2592 = vpack.c.bf16 %v2583, %v2582
    %v2593 = vpack.c.bf16 %v2585, %v2584
    %v2594 = vpack.c.bf16 %v2555, %v2554
    %v2595 = vpack.c.bf16 %v2557, %v2556
    %v2596 = vpack.c.bf16 %v2559, %v2558
    %v2597 = vpack.c.bf16 %v2561, %v2560
    %v2598 = vpack.c.bf16 %v2563, %v2562
    %v2599 = vpack.c.bf16 %v2565, %v2564
    %v2600 = vpack.c.bf16 %v2567, %v2566
    %v2601 = vpack.c.bf16 %v2569, %v2568
    %v2602 = vunpack.c.l.bf16 %v2594
    %v2603 = vunpack.c.h.bf16 %v2594
    %v2604 = vunpack.c.l.bf16 %v2595
    %v2605 = vunpack.c.h.bf16 %v2595
    %v2606 = vunpack.c.l.bf16 %v2596
    %v2607 = vunpack.c.h.bf16 %v2596
    %v2608 = vunpack.c.l.bf16 %v2597
    %v2609 = vunpack.c.h.bf16 %v2597
    %v2610 = vunpack.c.l.bf16 %v2598
    %v2611 = vunpack.c.h.bf16 %v2598
    %v2612 = vunpack.c.l.bf16 %v2599
    %v2613 = vunpack.c.h.bf16 %v2599
    %v2614 = vunpack.c.l.bf16 %v2600
    %v2615 = vunpack.c.h.bf16 %v2600
    %v2616 = vunpack.c.l.bf16 %v2601
    %v2617 = vunpack.c.h.bf16 %v2601
    %v2618 = vsub.f32 %v2554, %v2602
    %v2619 = vsub.f32 %v2555, %v2603
    %v2620 = vsub.f32 %v2556, %v2604
    %v2621 = vsub.f32 %v2557, %v2605
    %v2622 = vsub.f32 %v2558, %v2606
    %v2623 = vsub.f32 %v2559, %v2607
    %v2624 = vsub.f32 %v2560, %v2608
    %v2625 = vsub.f32 %v2561, %v2609
    %v2626 = vsub.f32 %v2562, %v2610
    %v2627 = vsub.f32 %v2563, %v2611
    %v2628 = vsub.f32 %v2564, %v2612
    %v2629 = vsub.f32 %v2565, %v2613
    %v2630 = vsub.f32 %v2566, %v2614
    %v2631 = vsub.f32 %v2567, %v2615
    %v2632 = vsub.f32 %v2568, %v2616
    %v2633 = vsub.f32 %v2569, %v2617
    %v2634 = vpack.c.bf16 %v2619, %v2618
    %v2635 = vpack.c.bf16 %v2621, %v2620
    %v2636 = vpack.c.bf16 %v2623, %v2622
    %v2637 = vpack.c.bf16 %v2625, %v2624
    %v2638 = vpack.c.bf16 %v2627, %v2626
    %v2639 = vpack.c.bf16 %v2629, %v2628
    %v2640 = vpack.c.bf16 %v2631, %v2630
    %v2641 = vpack.c.bf16 %v2633, %v2632
    %2642 = vmatprep.subr.bf16.mxu0 0
    %2643 = vmatpush1.bf16.msra.mxu0 %v2634
    %2644 = vmatprep.subr.bf16.mxu0 0
    %2645 = vmatpush1.bf16.msra.mxu0 %v2635
    %2646 = vmatprep.subr.bf16.mxu0 0
    %2647 = vmatpush1.bf16.msra.mxu0 %v2636
    %2648 = vmatprep.subr.bf16.mxu0 0
    %2649 = vmatpush1.bf16.msra.mxu0 %v2637
    %2650 = vmatprep.subr.bf16.mxu0 0
    %2651 = vmatpush1.bf16.msra.mxu0 %v2638
    %2652 = vmatprep.subr.bf16.mxu0 0
    %2653 = vmatpush1.bf16.msra.mxu0 %v2639
    %2654 = vmatprep.subr.bf16.mxu0 0
    %2655 = vmatpush1.bf16.msra.mxu0 %v2640
    %2656 = vmatprep.subr.bf16.mxu0 0
    %2657 = vmatpush1.bf16.msra.mxu0 %v2641
    %2658 = vmatprep.subr.bf16.mxu0 0
    %2659 = vmatpush1.bf16.msra.mxu0 0
    %2660 = vmatprep.subr.bf16.mxu0 0
    %2661 = vmatpush1.bf16.msra.mxu0 0
    %2662 = vmatprep.subr.bf16.mxu0 0
    %2663 = vmatpush1.bf16.msra.mxu0 0
    %2664 = vmatprep.subr.bf16.mxu0 0
    %2665 = vmatpush1.bf16.msra.mxu0 0
    %2666 = vmatprep.subr.bf16.mxu0 0
    %2667 = vmatpush1.bf16.msra.mxu0 0
    %2668 = vmatprep.subr.bf16.mxu0 0
    %2669 = vmatpush1.bf16.msra.mxu0 0
    %2670 = vmatprep.subr.bf16.mxu0 0
    %2671 = vmatpush1.bf16.msra.mxu0 0
    %2672 = vmatprep.subr.bf16.mxu0 0
    %2673 = vmatpush1.bf16.msra.mxu0 0
    %2674 = vmatprep.mubr.bf16.mxu0 0
    %2675 = vmatmul.mubr.bf16.gmra.mrb[0].mxu0 %v2586
    %v2676 = vpop.f32.mrb[0].mxu0
    %v2677 = vadd.f32 0.0, %v2676
    %v2678 = vpop.f32.mrb[0].mxu0
    %v2679 = vpop.f32.mrb[0].mxu0
    %v2680 = vadd.f32 0.0, %v2679
    %v2681 = vpop.f32.mrb[0].mxu0
    %2682 = vmatprep.mubr.bf16.mxu0 0
    %2683 = vmatmul.mubr.bf16.gmra.mrb[0].mxu0 %v2587
    %v2684 = vpop.f32.mrb[0].mxu0
    %v2685 = vadd.f32 0.0, %v2684
    %v2686 = vpop.f32.mrb[0].mxu0
    %v2687 = vpop.f32.mrb[0].mxu0
    %v2688 = vadd.f32 0.0, %v2687
    %v2689 = vpop.f32.mrb[0].mxu0
    %2690 = vmatprep.mubr.bf16.mxu0 0
    %2691 = vmatmul.mubr.bf16.gmra.mrb[0].mxu0 %v2588
    %v2692 = vpop.f32.mrb[0].mxu0
    %v2693 = vadd.f32 0.0, %v2692
    %v2694 = vpop.f32.mrb[0].mxu0
    %v2695 = vpop.f32.mrb[0].mxu0
    %v2696 = vadd.f32 0.0, %v2695
    %v2697 = vpop.f32.mrb[0].mxu0
    %2698 = vmatprep.mubr.bf16.mxu0 0
    %2699 = vmatmul.mubr.bf16.gmra.mrb[0].mxu0 %v2589
    %v2700 = vpop.f32.mrb[0].mxu0
    %v2701 = vadd.f32 0.0, %v2700
    %v2702 = vpop.f32.mrb[0].mxu0
    %v2703 = vpop.f32.mrb[0].mxu0
    %v2704 = vadd.f32 0.0, %v2703
    %v2705 = vpop.f32.mrb[0].mxu0
    %2706 = vmatprep.mubr.bf16.mxu0 0
    %2707 = vmatmul.mubr.bf16.gmra.mrb[0].mxu0 %v2590
    %v2708 = vpop.f32.mrb[0].mxu0
    %v2709 = vadd.f32 0.0, %v2708
    %v2710 = vpop.f32.mrb[0].mxu0
    %v2711 = vpop.f32.mrb[0].mxu0
    %v2712 = vadd.f32 0.0, %v2711
    %v2713 = vpop.f32.mrb[0].mxu0
    %2714 = vmatprep.mubr.bf16.mxu0 0
    %2715 = vmatmul.mubr.bf16.gmra.mrb[0].mxu0 %v2591
    %v2716 = vpop.f32.mrb[0].mxu0
    %v2717 = vadd.f32 0.0, %v2716
    %v2718 = vpop.f32.mrb[0].mxu0
    %v2719 = vpop.f32.mrb[0].mxu0
    %v2720 = vadd.f32 0.0, %v2719
    %v2721 = vpop.f32.mrb[0].mxu0
    %2722 = vmatprep.mubr.bf16.mxu0 0
    %2723 = vmatmul.mubr.bf16.gmra.mrb[0].mxu0 %v2592
    %v2724 = vpop.f32.mrb[0].mxu0
    %v2725 = vadd.f32 0.0, %v2724
    %v2726 = vpop.f32.mrb[0].mxu0
    %v2727 = vpop.f32.mrb[0].mxu0
    %v2728 = vadd.f32 0.0, %v2727
    %v2729 = vpop.f32.mrb[0].mxu0
    %2730 = vmatprep.mubr.bf16.mxu0 0
    %2731 = vmatmul.mubr.bf16.gmra.mrb[0].mxu0 %v2593
    %v2732 = vpop.f32.mrb[0].mxu0
    %v2733 = vadd.f32 0.0, %v2732
    %v2734 = vpop.f32.mrb[0].mxu0
    %v2735 = vpop.f32.mrb[0].mxu0
    %v2736 = vadd.f32 0.0, %v2735
    %v2737 = vpop.f32.mrb[0].mxu0
    %2738 = vdwg.mxu0
    %2739 = vmatprep.subr.bf16.mxu0 0
    %2740 = vmatpush1.bf16.msra.mxu0 %v2594
    %2741 = vmatprep.subr.bf16.mxu0 0
    %2742 = vmatpush1.bf16.msra.mxu0 %v2595
    %2743 = vmatprep.subr.bf16.mxu0 0
    %2744 = vmatpush1.bf16.msra.mxu0 %v2596
    %2745 = vmatprep.subr.bf16.mxu0 0
    %2746 = vmatpush1.bf16.msra.mxu0 %v2597
    %2747 = vmatprep.subr.bf16.mxu0 0
    %2748 = vmatpush1.bf16.msra.mxu0 %v2598
    %2749 = vmatprep.subr.bf16.mxu0 0
    %2750 = vmatpush1.bf16.msra.mxu0 %v2599
    %2751 = vmatprep.subr.bf16.mxu0 0
    %2752 = vmatpush1.bf16.msra.mxu0 %v2600
    %2753 = vmatprep.subr.bf16.mxu0 0
    %2754 = vmatpush1.bf16.msra.mxu0 %v2601
    %2755 = vmatprep.subr.bf16.mxu0 0
    %2756 = vmatpush1.bf16.msra.mxu0 0
    %2757 = vmatprep.subr.bf16.mxu0 0
    %2758 = vmatpush1.bf16.msra.mxu0 0
    %2759 = vmatprep.subr.bf16.mxu0 0
    %2760 = vmatpush1.bf16.msra.mxu0 0
    %2761 = vmatprep.subr.bf16.mxu0 0
    %2762 = vmatpush1.bf16.msra.mxu0 0
    %2763 = vmatprep.subr.bf16.mxu0 0
    %2764 = vmatpush1.bf16.msra.mxu0 0
    %2765 = vmatprep.subr.bf16.mxu0 0
    %2766 = vmatpush1.bf16.msra.mxu0 0
    %2767 = vmatprep.subr.bf16.mxu0 0
    %2768 = vmatpush1.bf16.msra.mxu0 0
    %2769 = vmatprep.subr.bf16.mxu0 0
    %2770 = vmatpush1.bf16.msra.mxu0 0
    %2771 = vmatprep.mubr.bf16.mxu0 0
    %2772 = vmatmul.mubr.bf16.gmra.mrb[0].mxu0 %v2586
    %v2773 = vpop.f32.mrb[0].mxu0
    %v2774 = vadd.f32 %v2677, %v2773
    %v2775 = vpop.f32.mrb[0].mxu0
    %v2776 = vpop.f32.mrb[0].mxu0
    %v2777 = vadd.f32 %v2680, %v2776
    %v2778 = vpop.f32.mrb[0].mxu0
    %2779 = vmatprep.mubr.bf16.mxu0 0
    %2780 = vmatmul.mubr.bf16.gmra.mrb[0].mxu0 %v2587
    %v2781 = vpop.f32.mrb[0].mxu0
    %v2782 = vadd.f32 %v2685, %v2781
    %v2783 = vpop.f32.mrb[0].mxu0
    %v2784 = vpop.f32.mrb[0].mxu0
    %v2785 = vadd.f32 %v2688, %v2784
    %v2786 = vpop.f32.mrb[0].mxu0
    %2787 = vmatprep.mubr.bf16.mxu0 0
    %2788 = vmatmul.mubr.bf16.gmra.mrb[0].mxu0 %v2588
    %v2789 = vpop.f32.mrb[0].mxu0
    %v2790 = vadd.f32 %v2693, %v2789
    %v2791 = vpop.f32.mrb[0].mxu0
    %v2792 = vpop.f32.mrb[0].mxu0
    %v2793 = vadd.f32 %v2696, %v2792
    %v2794 = vpop.f32.mrb[0].mxu0
    %2795 = vmatprep.mubr.bf16.mxu0 0
    %2796 = vmatmul.mubr.bf16.gmra.mrb[0].mxu0 %v2589
    %v2797 = vpop.f32.mrb[0].mxu0
    %v2798 = vadd.f32 %v2701, %v2797
    %v2799 = vpop.f32.mrb[0].mxu0
    %v2800 = vpop.f32.mrb[0].mxu0
    %v2801 = vadd.f32 %v2704, %v2800
    %v2802 = vpop.f32.mrb[0].mxu0
    %2803 = vmatprep.mubr.bf16.mxu0 0
    %2804 = vmatmul.mubr.bf16.gmra.mrb[0].mxu0 %v2590
    %v2805 = vpop.f32.mrb[0].mxu0
    %v2806 = vadd.f32 %v2709, %v2805
    %v2807 = vpop.f32.mrb[0].mxu0
    %v2808 = vpop.f32.mrb[0].mxu0
    %v2809 = vadd.f32 %v2712, %v2808
    %v2810 = vpop.f32.mrb[0].mxu0
    %2811 = vmatprep.mubr.bf16.mxu0 0
    %2812 = vmatmul.mubr.bf16.gmra.mrb[0].mxu0 %v2591
    %v2813 = vpop.f32.mrb[0].mxu0
    %v2814 = vadd.f32 %v2717, %v2813
    %v2815 = vpop.f32.mrb[0].mxu0
    %v2816 = vpop.f32.mrb[0].mxu0
    %v2817 = vadd.f32 %v2720, %v2816
    %v2818 = vpop.f32.mrb[0].mxu0
    %2819 = vmatprep.mubr.bf16.mxu0 0
    %2820 = vmatmul.mubr.bf16.gmra.mrb[0].mxu0 %v2592
    %v2821 = vpop.f32.mrb[0].mxu0
    %v2822 = vadd.f32 %v2725, %v2821
    %v2823 = vpop.f32.mrb[0].mxu0
    %v2824 = vpop.f32.mrb[0].mxu0
    %v2825 = vadd.f32 %v2728, %v2824
    %v2826 = vpop.f32.mrb[0].mxu0
    %2827 = vmatprep.mubr.bf16.mxu0 0
    %2828 = vmatmul.mubr.bf16.gmra.mrb[0].mxu0 %v2593
    %v2829 = vpop.f32.mrb[0].mxu0
    %v2830 = vadd.f32 %v2733, %v2829
    %v2831 = vpop.f32.mrb[0].mxu0
    %v2832 = vpop.f32.mrb[0].mxu0
    %v2833 = vadd.f32 %v2736, %v2832
    %v2834 = vpop.f32.mrb[0].mxu0
    %2835 = vdwg.mxu0
    %2836 = vst [vmem:[%s13] sm:$0xff] %v2774
    %2837 = vst [vmem:[%s13 + $0x8] sm:$0xff] %v2777
    %2838 = vst [vmem:[%s13 + $0x10] sm:$0xff] %v2782
    %2839 = vst [vmem:[%s13 + $0x18] sm:$0xff] %v2785
    %2840 = vst [vmem:[%s13 + $0x20] sm:$0xff] %v2790
    %2841 = vst [vmem:[%s13 + $0x28] sm:$0xff] %v2793
    %2842 = vst [vmem:[%s13 + $0x30] sm:$0xff] %v2798
    %2843 = vst [vmem:[%s13 + $0x38] sm:$0xff] %v2801
    %2844 = vst [vmem:[%s13 + $0x40] sm:$0xff] %v2806
    %2845 = vst [vmem:[%s13 + $0x48] sm:$0xff] %v2809
    %2846 = vst [vmem:[%s13 + $0x50] sm:$0xff] %v2814
    %2847 = vst [vmem:[%s13 + $0x58] sm:$0xff] %v2817
    %2848 = vst [vmem:[%s13 + $0x60] sm:$0xff] %v2822
    %2849 = vst [vmem:[%s13 + $0x68] sm:$0xff] %v2825
    %2850 = vst [vmem:[%s13 + $0x70] sm:$0xff] %v2830
    %2851 = vst [vmem:[%s13 + $0x78] sm:$0xff] %v2833
  $region61: #{_score.1} parent=0 // pred_fallthru
    _
  // Predicated region
  $region62: #{_score.1} parent=0 // pred_check
    _
  $region63: #{_score.1} parent=0 // pred_check_branch
    %2853 = sbr.rel (0) target = $region65
  $region64: #{_score.1} parent=0 // pred_region
    _
  $region65: #{_score.1} parent=0 // pred_fallthru
    _
  // Predicated region
  $region66: #{_score.1} parent=0 // pred_check
    _
  $region67: #{_score.1} parent=0 // pred_check_branch
    %2855 = sbr.rel (0) target = $region69
  $region68: #{_score.1} parent=0 // pred_region
    _
  $region69: #{_score.1} parent=0 // pred_fallthru
    _

</llo_original>
